<compile_context>
chip_gen: v7x
topology: tpu7x:2x2x1
jax: 0.10.0
libtpu: 0.0.40
codegen_flags: <defaults>
</compile_context>

<pallas_src>
import functools
import numpy as np
import jax
import jax.numpy as jnp
from jax.experimental import pallas as pl
from jax.experimental.pallas import tpu as pltpu

UNITS = 512

# Exact block-application order of the torch forward (stacks 4-6 reuse 7/8/9).
_BLOCK_ORDER = [1, 2, 3, 4, 5, 6, 7, 8, 9, 7, 8, 9, 7, 8, 9, 7, 8, 9]
_ORDER0 = np.array([b - 1 for b in _BLOCK_ORDER], dtype=np.int32)  # 0-based
NSTEPS = len(_BLOCK_ORDER)


# --------------------------------------------------------------------------
# Fused kernel: one grid step == one GenericBlock applied to the running
# residual; forecast accumulates into the (resident) output block.
# --------------------------------------------------------------------------
def robtf_fused_kernel(order_ref,                       # scalar prefetch (SMEM)
                       x_ref,
                       w1_ref, w2_ref, w3_ref, w4_ref, w5_ref,
                       b15_ref, wt_ref, wbc_ref, wfc_ref, bbc_ref, bfc_ref,
                       fore_ref,                        # output (forecast acc)
                       resid_sc):                       # VMEM scratch (resid)
    del order_ref  # only used by the index_maps
    i = pl.program_id(0)

    @pl.when(i == 0)
    def _init():
        resid_sc[...] = x_ref[...]
        fore_ref[...] = jnp.zeros_like(fore_ref)

    h = resid_sc[...].astype(jnp.bfloat16)
    b_all = b15_ref[0]                      # (5, UNITS) fp32, loaded once/step

    def dense_relu(h, w, b):
        y = jnp.dot(h, w, preferred_element_type=jnp.float32)
        return jnp.maximum(y + b, 0.0).astype(jnp.bfloat16)

    h = dense_relu(h, w1_ref[0], b_all[0:1, :])
    h = dense_relu(h, w2_ref[0], b_all[1:2, :])
    h = dense_relu(h, w3_ref[0], b_all[2:3, :])
    h = dense_relu(h, w4_ref[0], b_all[3:4, :])
    h = dense_relu(h, w5_ref[0], b_all[4:5, :])

    # Merged (zero-padded) theta head: one lane-dense MXU pass for theta_b|theta_f.
    theta = jnp.dot(h, wt_ref[0],
                    preferred_element_type=jnp.float32).astype(jnp.bfloat16)

    back = (jnp.dot(theta, wbc_ref[0], preferred_element_type=jnp.float32)
            + bbc_ref[0])
    fore = (jnp.dot(theta, wfc_ref[0], preferred_element_type=jnp.float32)
            + bfc_ref[0])

    resid_sc[...] = resid_sc[...] - back
    fore_ref[...] = fore_ref[...] + fore


# --------------------------------------------------------------------------
# Parameter construction (deterministic, PyTorch-Linear-style uniform init).
# Master params are fp32, weights pre-transposed as (in_dim, out_dim).
# --------------------------------------------------------------------------
def init_linear(key, in_dim, out_dim, bias=True):
    kw, kb = jax.random.split(key)
    bound = 1.0 / np.sqrt(in_dim)
    w = jax.random.uniform(kw, (in_dim, out_dim), jnp.float32, -bound, bound)
    if not bias:
        return w, None
    b = jax.random.uniform(kb, (1, out_dim), jnp.float32, -bound, bound)
    return w, b


def init_generic_block(key, thetas_dim, seq_len, pred_len):
    ks = jax.random.split(key, 9)
    p = {}
    p["w1"], p["b1"] = init_linear(ks[0], seq_len, UNITS)
    p["w2"], p["b2"] = init_linear(ks[1], UNITS, UNITS)
    p["w3"], p["b3"] = init_linear(ks[2], UNITS, UNITS)
    p["w4"], p["b4"] = init_linear(ks[3], UNITS, UNITS)
    p["w5"], p["b5"] = init_linear(ks[4], UNITS, UNITS)
    p["wtb"], _ = init_linear(ks[5], UNITS, thetas_dim, bias=False)
    p["wtf"], _ = init_linear(ks[6], UNITS, thetas_dim, bias=False)
    p["wbc"], p["bbc"] = init_linear(ks[7], thetas_dim, seq_len)
    p["wfc"], p["bfc"] = init_linear(ks[8], thetas_dim, pred_len)
    return p


def init_robtf_params(key, thetas_dim1, thetas_dim2, seq_len, pred_len):
    keys = jax.random.split(key, 9)
    dims = {1: thetas_dim1, 2: thetas_dim1, 3: thetas_dim1,
            4: thetas_dim2, 5: thetas_dim2, 6: thetas_dim2,
            7: thetas_dim2, 8: thetas_dim2, 9: thetas_dim2}
    # Only blocks 1..9 are reachable from RobTF.forward.
    return {i: init_generic_block(keys[i - 1], dims[i], seq_len, pred_len)
            for i in range(1, 10)}


def pack_params(params, seq_len, pred_len):
    """Stack per-block params along a leading axis of 9; pad theta dims so the
    merged theta weight is lane-dense (2*t_pad == multiple of 128); cast the
    big matrices to bf16 (biases stay fp32)."""
    tdims = [params[i]["wtb"].shape[1] for i in range(1, 10)]
    t_pad = ((max(tdims) + 63) // 64) * 64          # 2*t_pad multiple of 128

    def per_block(i):
        p = params[i]
        t = p["wtb"].shape[1]
        wt = jnp.zeros((UNITS, 2 * t_pad), jnp.float32)
        wt = wt.at[:, :t].set(p["wtb"]).at[:, t_pad:t_pad + t].set(p["wtf"])
        wbc = jnp.zeros((2 * t_pad, seq_len), jnp.float32).at[:t, :].set(p["wbc"])
        wfc = jnp.zeros((2 * t_pad, pred_len),
                        jnp.float32).at[t_pad:t_pad + t, :].set(p["wfc"])
        b15 = jnp.concatenate([p["b1"], p["b2"], p["b3"], p["b4"], p["b5"]],
                              axis=0)               # (5, UNITS)
        return (p["w1"], p["w2"], p["w3"], p["w4"], p["w5"], b15,
                wt, wbc, wfc, p["bbc"], p["bfc"])

    blocks = [per_block(i) for i in range(1, 10)]
    stack = lambda idx: jnp.stack([b[idx] for b in blocks], axis=0)
    packed = {
        "w1": stack(0).astype(jnp.bfloat16),    # (9, L, UNITS)
        "w2": stack(1).astype(jnp.bfloat16),    # (9, UNITS, UNITS)
        "w3": stack(2).astype(jnp.bfloat16),
        "w4": stack(3).astype(jnp.bfloat16),
        "w5": stack(4).astype(jnp.bfloat16),
        "b15": stack(5),                        # (9, 5, UNITS) fp32
        "wt": stack(6).astype(jnp.bfloat16),    # (9, UNITS, 2*t_pad)
        "wbc": stack(7).astype(jnp.bfloat16),   # (9, 2*t_pad, L)
        "wfc": stack(8).astype(jnp.bfloat16),   # (9, 2*t_pad, P)
        "bbc": stack(9),                        # (9, 1, L) fp32
        "bfc": stack(10),                       # (9, 1, P) fp32
    }
    return packed, t_pad


# --------------------------------------------------------------------------
# RobTF forward: single fused pallas_call over the 18-step residual chain.
# --------------------------------------------------------------------------
def robtf_forward_impl(x, packed):
    B, C, L = x.shape
    M = B * C
    P = packed["wfc"].shape[2]
    t2 = packed["wt"].shape[2]                  # 2 * t_pad (lane-dense)

    # TODO(synk): if B*C grows large in production, tile M with an extra
    # "parallel" grid axis (multiples of 128 rows) instead of one (M, L) slab.
    x2d = x.reshape(M, L).astype(jnp.float32)
    order = jnp.asarray(_ORDER0)                # scalar-prefetch block table

    widx = lambda i, order: (order[i], 0, 0)    # pick stacked-weight block
    const2 = lambda i, order: (0, 0)            # resident across the grid

    grid_spec = pltpu.PrefetchScalarGridSpec(
        num_scalar_prefetch=1,
        grid=(NSTEPS,),
        in_specs=[
            pl.BlockSpec((M, L), const2),               # x (read at step 0)
            pl.BlockSpec((1, L, UNITS), widx),          # w1
            pl.BlockSpec((1, UNITS, UNITS), widx),      # w2
            pl.BlockSpec((1, UNITS, UNITS), widx),      # w3
            pl.BlockSpec((1, UNITS, UNITS), widx),      # w4
            pl.BlockSpec((1, UNITS, UNITS), widx),      # w5
            pl.BlockSpec((1, 5, UNITS), widx),          # b1..b5 (fp32)
            pl.BlockSpec((1, UNITS, t2), widx),         # merged theta weight
            pl.BlockSpec((1, t2, L), widx),             # backcast proj
            pl.BlockSpec((1, t2, P), widx),             # forecast proj
            pl.BlockSpec((1, 1, L), widx),              # backcast bias
            pl.BlockSpec((1, 1, P), widx),              # forecast bias
        ],
        out_specs=pl.BlockSpec((M, P), const2),         # forecast accumulator
        scratch_shapes=[pltpu.VMEM((M, L), jnp.float32)],  # residual accum.
    )

    # Advisory cost estimate (weight streaming dominates bytes).
    flops = int(2 * M * (L * UNITS + 4 * UNITS * UNITS + UNITS * t2
                         + t2 * (L + P)) * NSTEPS)
    wbytes_per_step = int(2 * (L * UNITS + 4 * UNITS * UNITS + UNITS * t2
                               + t2 * (L + P))
                          + 4 * (5 * UNITS + L + P))
    ce = pl.CostEstimate(flops=flops, transcendentals=0,
                         bytes_accessed=NSTEPS * wbytes_per_step
                                        + 4 * M * (L + P))

    fore = pl.pallas_call(
        robtf_fused_kernel,
        out_shape=jax.ShapeDtypeStruct((M, P), jnp.float32),
        grid_spec=grid_spec,
        compiler_params=pltpu.CompilerParams(
            dimension_semantics=("arbitrary",),        # sequential resid chain
            vmem_limit_bytes=16 * 1024 * 1024),        # ~4.5 MiB needed; safe on v7x
        cost_estimate=ce,
    )(order, x2d,
      packed["w1"], packed["w2"], packed["w3"], packed["w4"], packed["w5"],
      packed["b15"], packed["wt"], packed["wbc"], packed["wfc"],
      packed["bbc"], packed["bfc"])

    forecast = fore.reshape(B, C, P)
    return jnp.transpose(forecast, (0, 2, 1))           # (B, pred_len, C)


robtf_forward = jax.jit(robtf_forward_impl)


if __name__ == "__main__":
    B, C = 2, 4
    seq_len, pred_len = 16, 8
    thetas_dim1, thetas_dim2 = 8, 16

    key = jax.random.PRNGKey(0)
    k_x, k_p = jax.random.split(key)
    x = jax.random.normal(k_x, (B, C, seq_len), jnp.float32)
    params = init_robtf_params(k_p, thetas_dim1, thetas_dim2, seq_len, pred_len)
    packed, _ = pack_params(params, seq_len, pred_len)

    out = robtf_forward(x, packed)
    out = jax.block_until_ready(out)

    assert out.shape == (B, pred_len, C), out.shape
    assert bool(jnp.all(jnp.isfinite(out)))
    print("KERNEL_OK")
</pallas_src>

<mosaic_0001>
module attributes {stable_mosaic.version = 11 : i64} {
  func.func @robtf_fused_kernel(%arg0: i32, %arg1: memref<18xi32, #tpu.memory_space<smem>>, %arg2: memref<8x16xf32, #tpu.memory_space<vmem>>, %arg3: memref<1x16x512xbf16, #tpu.memory_space<vmem>>, %arg4: memref<1x512x512xbf16, #tpu.memory_space<vmem>>, %arg5: memref<1x512x512xbf16, #tpu.memory_space<vmem>>, %arg6: memref<1x512x512xbf16, #tpu.memory_space<vmem>>, %arg7: memref<1x512x512xbf16, #tpu.memory_space<vmem>>, %arg8: memref<1x5x512xf32, #tpu.memory_space<vmem>>, %arg9: memref<1x512x128xbf16, #tpu.memory_space<vmem>>, %arg10: memref<1x128x16xbf16, #tpu.memory_space<vmem>>, %arg11: memref<1x128x8xbf16, #tpu.memory_space<vmem>>, %arg12: memref<1x1x16xf32, #tpu.memory_space<vmem>>, %arg13: memref<1x1x8xf32, #tpu.memory_space<vmem>>, %arg14: memref<8x8xf32, #tpu.memory_space<vmem>>, %arg15: memref<8x16xf32, #tpu.memory_space<vmem>>) attributes {dimension_semantics = [#tpu.dimension_semantics<arbitrary>], iteration_bounds = array<i64: 18>, scalar_prefetch = 1 : i64, scratch_operands = 1 : i64, tpu.core_type = #tpu.core_type<tc>, window_params = [{pipeline_mode = #tpu.pipeline_mode<synchronous>, transform_indices = @transform_0, window_bounds = array<i64: 8, 16>}, {transform_indices = @transform_1, window_bounds = array<i64: 1, 16, 512>}, {transform_indices = @transform_2, window_bounds = array<i64: 1, 512, 512>}, {transform_indices = @transform_3, window_bounds = array<i64: 1, 512, 512>}, {transform_indices = @transform_4, window_bounds = array<i64: 1, 512, 512>}, {transform_indices = @transform_5, window_bounds = array<i64: 1, 512, 512>}, {transform_indices = @transform_6, window_bounds = array<i64: 1, 5, 512>}, {transform_indices = @transform_7, window_bounds = array<i64: 1, 512, 128>}, {transform_indices = @transform_8, window_bounds = array<i64: 1, 128, 16>}, {transform_indices = @transform_9, window_bounds = array<i64: 1, 128, 8>}, {transform_indices = @transform_10, window_bounds = array<i64: 1, 1, 16>}, {transform_indices = @transform_11, window_bounds = array<i64: 1, 1, 8>}, {pipeline_mode = #tpu.pipeline_mode<synchronous>, transform_indices = @transform_12, window_bounds = array<i64: 8, 8>}]} {
    %c0_i32 = arith.constant 0 : i32
    %0 = arith.cmpi eq, %arg0, %c0_i32 : i32
    %1 = arith.extui %0 : i1 to i32
    %c0_i32_0 = arith.constant 0 : i32
    %2 = arith.cmpi ne, %1, %c0_i32_0 : i32
    scf.if %2 {
      %c0_55 = arith.constant 0 : index
      %c0_56 = arith.constant 0 : index
      %76 = vector.load %arg2[%c0_55, %c0_56] : memref<8x16xf32, #tpu.memory_space<vmem>>, vector<8x16xf32>
      %c0_57 = arith.constant 0 : index
      %c0_58 = arith.constant 0 : index
      %77 = vector.load %arg15[%c0_57, %c0_58] : memref<8x16xf32, #tpu.memory_space<vmem>>, vector<8x16xf32>
      tpu.vector_store %arg15[%c0_57, %c0_58], %76 {strides = array<i32>} : memref<8x16xf32, #tpu.memory_space<vmem>>, vector<8x16xf32>,
      %cst_59 = arith.constant 0.000000e+00 : f32
      %78 = vector.broadcast %cst_59 : f32 to vector<8x8xf32>
      %c0_60 = arith.constant 0 : index
      %c0_61 = arith.constant 0 : index
      %79 = vector.load %arg14[%c0_60, %c0_61] : memref<8x8xf32, #tpu.memory_space<vmem>>, vector<8x8xf32>
      tpu.vector_store %arg14[%c0_60, %c0_61], %78 {strides = array<i32>} : memref<8x8xf32, #tpu.memory_space<vmem>>, vector<8x8xf32>,
    } else {
    }
    %c0 = arith.constant 0 : index
    %c0_1 = arith.constant 0 : index
    %3 = vector.load %arg15[%c0, %c0_1] : memref<8x16xf32, #tpu.memory_space<vmem>>, vector<8x16xf32>
    %4 = arith.truncf %3 : vector<8x16xf32> to vector<8x16xbf16>
    %c0_2 = arith.constant 0 : index
    %c0_3 = arith.constant 0 : index
    %c0_4 = arith.constant 0 : index
    %5 = vector.load %arg8[%c0_2, %c0_3, %c0_4] : memref<1x5x512xf32, #tpu.memory_space<vmem>>, vector<1x5x512xf32>
    %6 = vector.shape_cast %5 : vector<1x5x512xf32> to vector<5x512xf32>
    %c0_5 = arith.constant 0 : index
    %c0_6 = arith.constant 0 : index
    %c0_7 = arith.constant 0 : index
    %7 = vector.load %arg3[%c0_5, %c0_6, %c0_7] : memref<1x16x512xbf16, #tpu.memory_space<vmem>>, vector<1x16x512xbf16>
    %8 = vector.shape_cast %7 : vector<1x16x512xbf16> to vector<16x512xbf16>
    %9 = vector.extract_strided_slice %6 {offsets = [0, 0], sizes = [1, 512], strides = [1, 1]} : vector<5x512xf32> to vector<1x512xf32>
    %cst = arith.constant dense<0.000000e+00> : vector<8x512xf32>
    %10 = tpu.matmul %4, %8, %cst {dimension_numbers = #tpu.dot_dimension_numbers<[1], [0], [0], [1], [0, 0, 1, 1], [], []>} : vector<8x16xbf16>, vector<16x512xbf16>, vector<8x512xf32> -> vector<8x512xf32>
    %11 = vector.broadcast %9 : vector<1x512xf32> to vector<8x512xf32>
    %12 = arith.addf %10, %11 : vector<8x512xf32>
    %cst_8 = arith.constant 0.000000e+00 : f32
    %13 = vector.broadcast %cst_8 : f32 to vector<8x512xf32>
    %14 = arith.maximumf %12, %13 : vector<8x512xf32>
    %15 = arith.truncf %14 : vector<8x512xf32> to vector<8x512xbf16>
    %c0_9 = arith.constant 0 : index
    %c0_10 = arith.constant 0 : index
    %c0_11 = arith.constant 0 : index
    %16 = vector.load %arg4[%c0_9, %c0_10, %c0_11] : memref<1x512x512xbf16, #tpu.memory_space<vmem>>, vector<1x512x512xbf16>
    %17 = vector.shape_cast %16 : vector<1x512x512xbf16> to vector<512x512xbf16>
    %18 = vector.extract_strided_slice %6 {offsets = [1, 0], sizes = [1, 512], strides = [1, 1]} : vector<5x512xf32> to vector<1x512xf32>
    %cst_12 = arith.constant dense<0.000000e+00> : vector<8x512xf32>
    %19 = tpu.matmul %15, %17, %cst_12 {dimension_numbers = #tpu.dot_dimension_numbers<[1], [0], [0], [1], [0, 0, 1, 1], [], []>} : vector<8x512xbf16>, vector<512x512xbf16>, vector<8x512xf32> -> vector<8x512xf32>
    %20 = vector.broadcast %18 : vector<1x512xf32> to vector<8x512xf32>
    %21 = arith.addf %19, %20 : vector<8x512xf32>
    %cst_13 = arith.constant 0.000000e+00 : f32
    %22 = vector.broadcast %cst_13 : f32 to vector<8x512xf32>
    %23 = arith.maximumf %21, %22 : vector<8x512xf32>
    %24 = arith.truncf %23 : vector<8x512xf32> to vector<8x512xbf16>
    %c0_14 = arith.constant 0 : index
    %c0_15 = arith.constant 0 : index
    %c0_16 = arith.constant 0 : index
    %25 = vector.load %arg5[%c0_14, %c0_15, %c0_16] : memref<1x512x512xbf16, #tpu.memory_space<vmem>>, vector<1x512x512xbf16>
    %26 = vector.shape_cast %25 : vector<1x512x512xbf16> to vector<512x512xbf16>
    %27 = vector.extract_strided_slice %6 {offsets = [2, 0], sizes = [1, 512], strides = [1, 1]} : vector<5x512xf32> to vector<1x512xf32>
    %cst_17 = arith.constant dense<0.000000e+00> : vector<8x512xf32>
    %28 = tpu.matmul %24, %26, %cst_17 {dimension_numbers = #tpu.dot_dimension_numbers<[1], [0], [0], [1], [0, 0, 1, 1], [], []>} : vector<8x512xbf16>, vector<512x512xbf16>, vector<8x512xf32> -> vector<8x512xf32>
    %29 = vector.broadcast %27 : vector<1x512xf32> to vector<8x512xf32>
    %30 = arith.addf %28, %29 : vector<8x512xf32>
    %cst_18 = arith.constant 0.000000e+00 : f32
    %31 = vector.broadcast %cst_18 : f32 to vector<8x512xf32>
    %32 = arith.maximumf %30, %31 : vector<8x512xf32>
    %33 = arith.truncf %32 : vector<8x512xf32> to vector<8x512xbf16>
    %c0_19 = arith.constant 0 : index
    %c0_20 = arith.constant 0 : index
    %c0_21 = arith.constant 0 : index
    %34 = vector.load %arg6[%c0_19, %c0_20, %c0_21] : memref<1x512x512xbf16, #tpu.memory_space<vmem>>, vector<1x512x512xbf16>
    %35 = vector.shape_cast %34 : vector<1x512x512xbf16> to vector<512x512xbf16>
    %36 = vector.extract_strided_slice %6 {offsets = [3, 0], sizes = [1, 512], strides = [1, 1]} : vector<5x512xf32> to vector<1x512xf32>
    %cst_22 = arith.constant dense<0.000000e+00> : vector<8x512xf32>
    %37 = tpu.matmul %33, %35, %cst_22 {dimension_numbers = #tpu.dot_dimension_numbers<[1], [0], [0], [1], [0, 0, 1, 1], [], []>} : vector<8x512xbf16>, vector<512x512xbf16>, vector<8x512xf32> -> vector<8x512xf32>
    %38 = vector.broadcast %36 : vector<1x512xf32> to vector<8x512xf32>
    %39 = arith.addf %37, %38 : vector<8x512xf32>
    %cst_23 = arith.constant 0.000000e+00 : f32
    %40 = vector.broadcast %cst_23 : f32 to vector<8x512xf32>
    %41 = arith.maximumf %39, %40 : vector<8x512xf32>
    %42 = arith.truncf %41 : vector<8x512xf32> to vector<8x512xbf16>
    %c0_24 = arith.constant 0 : index
    %c0_25 = arith.constant 0 : index
    %c0_26 = arith.constant 0 : index
    %43 = vector.load %arg7[%c0_24, %c0_25, %c0_26] : memref<1x512x512xbf16, #tpu.memory_space<vmem>>, vector<1x512x512xbf16>
    %44 = vector.shape_cast %43 : vector<1x512x512xbf16> to vector<512x512xbf16>
    %45 = vector.extract_strided_slice %6 {offsets = [4, 0], sizes = [1, 512], strides = [1, 1]} : vector<5x512xf32> to vector<1x512xf32>
    %cst_27 = arith.constant dense<0.000000e+00> : vector<8x512xf32>
    %46 = tpu.matmul %42, %44, %cst_27 {dimension_numbers = #tpu.dot_dimension_numbers<[1], [0], [0], [1], [0, 0, 1, 1], [], []>} : vector<8x512xbf16>, vector<512x512xbf16>, vector<8x512xf32> -> vector<8x512xf32>
    %47 = vector.broadcast %45 : vector<1x512xf32> to vector<8x512xf32>
    %48 = arith.addf %46, %47 : vector<8x512xf32>
    %cst_28 = arith.constant 0.000000e+00 : f32
    %49 = vector.broadcast %cst_28 : f32 to vector<8x512xf32>
    %50 = arith.maximumf %48, %49 : vector<8x512xf32>
    %51 = arith.truncf %50 : vector<8x512xf32> to vector<8x512xbf16>
    %c0_29 = arith.constant 0 : index
    %c0_30 = arith.constant 0 : index
    %c0_31 = arith.constant 0 : index
    %52 = vector.load %arg9[%c0_29, %c0_30, %c0_31] : memref<1x512x128xbf16, #tpu.memory_space<vmem>>, vector<1x512x128xbf16>
    %53 = vector.shape_cast %52 : vector<1x512x128xbf16> to vector<512x128xbf16>
    %cst_32 = arith.constant dense<0.000000e+00> : vector<8x128xf32>
    %54 = tpu.matmul %51, %53, %cst_32 {dimension_numbers = #tpu.dot_dimension_numbers<[1], [0], [0], [1], [0, 0, 1, 1], [], []>} : vector<8x512xbf16>, vector<512x128xbf16>, vector<8x128xf32> -> vector<8x128xf32>
    %55 = arith.truncf %54 : vector<8x128xf32> to vector<8x128xbf16>
    %c0_33 = arith.constant 0 : index
    %c0_34 = arith.constant 0 : index
    %c0_35 = arith.constant 0 : index
    %56 = vector.load %arg10[%c0_33, %c0_34, %c0_35] : memref<1x128x16xbf16, #tpu.memory_space<vmem>>, vector<1x128x16xbf16>
    %57 = vector.shape_cast %56 : vector<1x128x16xbf16> to vector<128x16xbf16>
    %cst_36 = arith.constant dense<0.000000e+00> : vector<8x16xf32>
    %58 = tpu.matmul %55, %57, %cst_36 {dimension_numbers = #tpu.dot_dimension_numbers<[1], [0], [0], [1], [0, 0, 1, 1], [], []>} : vector<8x128xbf16>, vector<128x16xbf16>, vector<8x16xf32> -> vector<8x16xf32>
    %c0_37 = arith.constant 0 : index
    %c0_38 = arith.constant 0 : index
    %c0_39 = arith.constant 0 : index
    %59 = vector.load %arg12[%c0_37, %c0_38, %c0_39] : memref<1x1x16xf32, #tpu.memory_space<vmem>>, vector<1x1x16xf32>
    %60 = vector.shape_cast %59 : vector<1x1x16xf32> to vector<1x16xf32>
    %61 = vector.broadcast %60 : vector<1x16xf32> to vector<8x16xf32>
    %62 = arith.addf %58, %61 : vector<8x16xf32>
    %c0_40 = arith.constant 0 : index
    %c0_41 = arith.constant 0 : index
    %c0_42 = arith.constant 0 : index
    %63 = vector.load %arg11[%c0_40, %c0_41, %c0_42] : memref<1x128x8xbf16, #tpu.memory_space<vmem>>, vector<1x128x8xbf16>
    %64 = vector.shape_cast %63 : vector<1x128x8xbf16> to vector<128x8xbf16>
    %cst_43 = arith.constant dense<0.000000e+00> : vector<8x8xf32>
    %65 = tpu.matmul %55, %64, %cst_43 {dimension_numbers = #tpu.dot_dimension_numbers<[1], [0], [0], [1], [0, 0, 1, 1], [], []>} : vector<8x128xbf16>, vector<128x8xbf16>, vector<8x8xf32> -> vector<8x8xf32>
    %c0_44 = arith.constant 0 : index
    %c0_45 = arith.constant 0 : index
    %c0_46 = arith.constant 0 : index
    %66 = vector.load %arg13[%c0_44, %c0_45, %c0_46] : memref<1x1x8xf32, #tpu.memory_space<vmem>>, vector<1x1x8xf32>
    %67 = vector.shape_cast %66 : vector<1x1x8xf32> to vector<1x8xf32>
    %68 = vector.broadcast %67 : vector<1x8xf32> to vector<8x8xf32>
    %69 = arith.addf %65, %68 : vector<8x8xf32>
    %c0_47 = arith.constant 0 : index
    %c0_48 = arith.constant 0 : index
    %70 = vector.load %arg15[%c0_47, %c0_48] : memref<8x16xf32, #tpu.memory_space<vmem>>, vector<8x16xf32>
    %71 = arith.subf %70, %62 : vector<8x16xf32>
    %c0_49 = arith.constant 0 : index
    %c0_50 = arith.constant 0 : index
    %72 = vector.load %arg15[%c0_49, %c0_50] : memref<8x16xf32, #tpu.memory_space<vmem>>, vector<8x16xf32>
    tpu.vector_store %arg15[%c0_49, %c0_50], %71 {strides = array<i32>} : memref<8x16xf32, #tpu.memory_space<vmem>>, vector<8x16xf32>,
    %c0_51 = arith.constant 0 : index
    %c0_52 = arith.constant 0 : index
    %73 = vector.load %arg14[%c0_51, %c0_52] : memref<8x8xf32, #tpu.memory_space<vmem>>, vector<8x8xf32>
    %74 = arith.addf %73, %69 : vector<8x8xf32>
    %c0_53 = arith.constant 0 : index
    %c0_54 = arith.constant 0 : index
    %75 = vector.load %arg14[%c0_53, %c0_54] : memref<8x8xf32, #tpu.memory_space<vmem>>, vector<8x8xf32>
    tpu.vector_store %arg14[%c0_53, %c0_54], %74 {strides = array<i32>} : memref<8x8xf32, #tpu.memory_space<vmem>>, vector<8x8xf32>,
    return
  }
  func.func @transform_0(%arg0: i32, %arg1: memref<18xi32, #tpu.memory_space<smem>>) -> (i32, i32) {
    %c0_i32 = arith.constant 0 : i32
    %c0_i32_0 = arith.constant 0 : i32
    %c0_i32_1 = arith.constant 0 : i32
    return %c0_i32, %c0_i32_0 : i32, i32
  }
  func.func @transform_1(%arg0: i32, %arg1: memref<18xi32, #tpu.memory_space<smem>>) -> (i32, i32, i32) {
    %0 = arith.index_cast %arg0 : i32 to index
    %1 = memref.load %arg1[%0] : memref<18xi32, #tpu.memory_space<smem>>
    %c0_i32 = arith.constant 0 : i32
    %c0_i32_0 = arith.constant 0 : i32
    %c0_i32_1 = arith.constant 0 : i32
    return %1, %c0_i32, %c0_i32_0 : i32, i32, i32
  }
  func.func @transform_2(%arg0: i32, %arg1: memref<18xi32, #tpu.memory_space<smem>>) -> (i32, i32, i32) {
    %0 = arith.index_cast %arg0 : i32 to index
    %1 = memref.load %arg1[%0] : memref<18xi32, #tpu.memory_space<smem>>
    %c0_i32 = arith.constant 0 : i32
    %c0_i32_0 = arith.constant 0 : i32
    %c0_i32_1 = arith.constant 0 : i32
    return %1, %c0_i32, %c0_i32_0 : i32, i32, i32
  }
  func.func @transform_3(%arg0: i32, %arg1: memref<18xi32, #tpu.memory_space<smem>>) -> (i32, i32, i32) {
    %0 = arith.index_cast %arg0 : i32 to index
    %1 = memref.load %arg1[%0] : memref<18xi32, #tpu.memory_space<smem>>
    %c0_i32 = arith.constant 0 : i32
    %c0_i32_0 = arith.constant 0 : i32
    %c0_i32_1 = arith.constant 0 : i32
    return %1, %c0_i32, %c0_i32_0 : i32, i32, i32
  }
  func.func @transform_4(%arg0: i32, %arg1: memref<18xi32, #tpu.memory_space<smem>>) -> (i32, i32, i32) {
    %0 = arith.index_cast %arg0 : i32 to index
    %1 = memref.load %arg1[%0] : memref<18xi32, #tpu.memory_space<smem>>
    %c0_i32 = arith.constant 0 : i32
    %c0_i32_0 = arith.constant 0 : i32
    %c0_i32_1 = arith.constant 0 : i32
    return %1, %c0_i32, %c0_i32_0 : i32, i32, i32
  }
  func.func @transform_5(%arg0: i32, %arg1: memref<18xi32, #tpu.memory_space<smem>>) -> (i32, i32, i32) {
    %0 = arith.index_cast %arg0 : i32 to index
    %1 = memref.load %arg1[%0] : memref<18xi32, #tpu.memory_space<smem>>
    %c0_i32 = arith.constant 0 : i32
    %c0_i32_0 = arith.constant 0 : i32
    %c0_i32_1 = arith.constant 0 : i32
    return %1, %c0_i32, %c0_i32_0 : i32, i32, i32
  }
  func.func @transform_6(%arg0: i32, %arg1: memref<18xi32, #tpu.memory_space<smem>>) -> (i32, i32, i32) {
    %0 = arith.index_cast %arg0 : i32 to index
    %1 = memref.load %arg1[%0] : memref<18xi32, #tpu.memory_space<smem>>
    %c0_i32 = arith.constant 0 : i32
    %c0_i32_0 = arith.constant 0 : i32
    %c0_i32_1 = arith.constant 0 : i32
    return %1, %c0_i32, %c0_i32_0 : i32, i32, i32
  }
  func.func @transform_7(%arg0: i32, %arg1: memref<18xi32, #tpu.memory_space<smem>>) -> (i32, i32, i32) {
    %0 = arith.index_cast %arg0 : i32 to index
    %1 = memref.load %arg1[%0] : memref<18xi32, #tpu.memory_space<smem>>
    %c0_i32 = arith.constant 0 : i32
    %c0_i32_0 = arith.constant 0 : i32
    %c0_i32_1 = arith.constant 0 : i32
    return %1, %c0_i32, %c0_i32_0 : i32, i32, i32
  }
  func.func @transform_8(%arg0: i32, %arg1: memref<18xi32, #tpu.memory_space<smem>>) -> (i32, i32, i32) {
    %0 = arith.index_cast %arg0 : i32 to index
    %1 = memref.load %arg1[%0] : memref<18xi32, #tpu.memory_space<smem>>
    %c0_i32 = arith.constant 0 : i32
    %c0_i32_0 = arith.constant 0 : i32
    %c0_i32_1 = arith.constant 0 : i32
    return %1, %c0_i32, %c0_i32_0 : i32, i32, i32
  }
  func.func @transform_9(%arg0: i32, %arg1: memref<18xi32, #tpu.memory_space<smem>>) -> (i32, i32, i32) {
    %0 = arith.index_cast %arg0 : i32 to index
    %1 = memref.load %arg1[%0] : memref<18xi32, #tpu.memory_space<smem>>
    %c0_i32 = arith.constant 0 : i32
    %c0_i32_0 = arith.constant 0 : i32
    %c0_i32_1 = arith.constant 0 : i32
    return %1, %c0_i32, %c0_i32_0 : i32, i32, i32
  }
  func.func @transform_10(%arg0: i32, %arg1: memref<18xi32, #tpu.memory_space<smem>>) -> (i32, i32, i32) {
    %0 = arith.index_cast %arg0 : i32 to index
    %1 = memref.load %arg1[%0] : memref<18xi32, #tpu.memory_space<smem>>
    %c0_i32 = arith.constant 0 : i32
    %c0_i32_0 = arith.constant 0 : i32
    %c0_i32_1 = arith.constant 0 : i32
    return %1, %c0_i32, %c0_i32_0 : i32, i32, i32
  }
  func.func @transform_11(%arg0: i32, %arg1: memref<18xi32, #tpu.memory_space<smem>>) -> (i32, i32, i32) {
    %0 = arith.index_cast %arg0 : i32 to index
    %1 = memref.load %arg1[%0] : memref<18xi32, #tpu.memory_space<smem>>
    %c0_i32 = arith.constant 0 : i32
    %c0_i32_0 = arith.constant 0 : i32
    %c0_i32_1 = arith.constant 0 : i32
    return %1, %c0_i32, %c0_i32_0 : i32, i32, i32
  }
  func.func @transform_12(%arg0: i32, %arg1: memref<18xi32, #tpu.memory_space<smem>>) -> (i32, i32) {
    %c0_i32 = arith.constant 0 : i32
    %c0_i32_0 = arith.constant 0 : i32
    %c0_i32_1 = arith.constant 0 : i32
    return %c0_i32, %c0_i32_0 : i32, i32
  }
}

</mosaic_0001>

<llo_original>
// kernel: robtf_forward_impl.1
$region0: #{robtf_forward_impl.1}
  #allocation0 [shape = 'u32[]', space=smem, size = 0x4, offset = 0x4, fixed_abs, tag = 'smem constant byte address 0x4 - core index']
  #allocation1 [shape = 'u32[144,128]{1,0:T(1,128)}', space=vmem, size = 0x12000, scoped, tag = 'internal scratch']
  #allocation2 [shape = 'f32[8,16]{1,0:T(8,128)}', space=vmem, size = 0x1000, scoped, tag = 'scratch operand']
  #allocation3 [shape = 's32[1]{0}', space=sflag, size = 0x4, scoped, tag = 'scoped memory for robtf_forward_impl.1']
  #allocation4 [shape = 'u8[512]{0}', space=smem, size = 0x200, scoped, tag = 'prefetched SMEM operand 0']
  %s0 = inlined_call_operand.hbm [shape: s32[18], index: 0, kind: input, shape index: {}]
  %s1 = inlined_call_operand.hbm [shape: f32[8,16], index: 1, kind: input, shape index: {}]
  %s2 = inlined_call_operand.hbm [shape: bf16[9,16,512], index: 2, kind: input, shape index: {}]
  %s3 = inlined_call_operand.hbm [shape: bf16[9,512,512], index: 3, kind: input, shape index: {}]
  %s4 = inlined_call_operand.hbm [shape: bf16[9,512,512], index: 4, kind: input, shape index: {}]
  %s5 = inlined_call_operand.hbm [shape: bf16[9,512,512], index: 5, kind: input, shape index: {}]
  %s6 = inlined_call_operand.hbm [shape: bf16[9,512,512], index: 6, kind: input, shape index: {}]
  %s7 = inlined_call_operand.hbm [shape: f32[9,5,512], index: 7, kind: input, shape index: {}]
  %s8 = inlined_call_operand.hbm [shape: bf16[9,512,128], index: 8, kind: input, shape index: {}]
  %s9 = inlined_call_operand.vmem [shape: bf16[9,128,16], index: 9, kind: input, shape index: {}]
  %s10 = inlined_call_operand.vmem [shape: bf16[9,128,8], index: 10, kind: input, shape index: {}]
  %s11 = inlined_call_operand.hbm [shape: f32[9,1,16], index: 11, kind: input, shape index: {}]
  %s12 = inlined_call_operand.vmem [shape: f32[9,1,8], index: 12, kind: input, shape index: {}]
  %s13 = inlined_call_operand.hbm [shape: f32[8,8], index: 13, kind: output, shape index: {}]
  %s14 = sld [smem:[#allocation0]]
  $region121: #{robtf_forward_impl.1} parent=0
    _
  %s16 = ssub.s32 1, %s14
  %s17 = scalar_select 0, %s16, %s14
  %19 = dma.hbm_to_smem %s0, 16, [#allocation4], [#allocation3]
  %20 = dma.done [#allocation3], 16
  %21 = sfence
  $region1: #{robtf_forward_impl.1} parent=0
    #allocation5 [shape = 'u8[4096]{0}', space=vmem, size = 0x1000, scoped, tag = 'input window, operand 1, single buffered']
    #allocation6 [shape = 's32[2]{0}', space=sflag, size = 0x8, scoped, tag = 'scoped memory for robtf_forward_impl.1']
    #allocation7 [shape = 's32[2]{0}', space=sflag, size = 0x8, scoped, tag = 'scoped memory for robtf_forward_impl.1']
    #allocation8 [shape = 'u8[32768]{0}', space=vmem, size = 0x8000, scoped, tag = 'input window, operand 2']
    #allocation9 [shape = 's32[2]{0}', space=sflag, size = 0x8, scoped, tag = 'scoped memory for robtf_forward_impl.1']
    #allocation10 [shape = 'u8[1048576]{0}', space=vmem, size = 0x100000, scoped, tag = 'input window, operand 3']
    #allocation11 [shape = 'u8[1048576]{0}', space=vmem, size = 0x100000, scoped, tag = 'input window, operand 4']
    #allocation12 [shape = 's32[2]{0}', space=sflag, size = 0x8, scoped, tag = 'scoped memory for robtf_forward_impl.1']
    #allocation13 [shape = 'u8[1048576]{0}', space=vmem, size = 0x100000, scoped, tag = 'input window, operand 5']
    #allocation14 [shape = 'u8[1048576]{0}', space=vmem, size = 0x100000, scoped, tag = 'input window, operand 6']
    #allocation15 [shape = 's32[2]{0}', space=sflag, size = 0x8, scoped, tag = 'scoped memory for robtf_forward_impl.1']
    #allocation16 [shape = 'u8[32768]{0}', space=vmem, size = 0x8000, scoped, tag = 'input window, operand 7']
    #allocation17 [shape = 'u8[262144]{0}', space=vmem, size = 0x40000, scoped, tag = 'input window, operand 8']
    #allocation18 [shape = 's32[2]{0}', space=sflag, size = 0x8, scoped, tag = 'scoped memory for robtf_forward_impl.1']
    #allocation19 [shape = 'u8[1024]{0}', space=vmem, size = 0x400, scoped, tag = 'input window, operand 11']
    #allocation20 [shape = 'u8[4096]{0}', space=vmem, size = 0x1000, scoped, tag = 'output window, operand 0, single buffered']
    %22 = vsyncpa [#allocation6], 0
    %23 = vsyncpa [#allocation9], 0
    %s24 = scalar_lea.sflag [#allocation9], 1
    %25 = vsyncpa %s24, 0
    %26 = vsyncpa [#allocation12], 0
    %s27 = scalar_lea.sflag [#allocation12], 1
    %28 = vsyncpa %s27, 0
    %29 = vsyncpa [#allocation15], 0
    %s30 = scalar_lea.sflag [#allocation15], 1
    %31 = vsyncpa %s30, 0
    %32 = vsyncpa [#allocation18], 0
    %s33 = scalar_lea.sflag [#allocation18], 1
    %34 = vsyncpa %s33, 0
    %35 = vsyncpa [#allocation7], 0
    loop: start=0, step=1, limit=20
    $region2: #{robtf_forward_impl.1} parent=1 // loop_pre_header
      _
    $region3: #{robtf_forward_impl.1} parent=1 // loop_header
      %s37 = sphi 0, %s41
      %p38 = scmp.ge.s32.totalorder %s37, 20
      %s45 = sphi 0, %s45
      %s47 = sphi 0, %s45
      %s48 = sphi 0, %s47
      %s62 = sphi 0, %s48
      %s70 = sphi 0, %s72
      %s73 = sphi 0, %s70
      %s74 = sphi 0, %s73
      %s90 = sphi 0, %s74
      %s98 = sphi 0, %s100
      %s101 = sphi 0, %s98
      %s102 = sphi 0, %s101
      %s118 = sphi 0, %s102
      %s126 = sphi 0, %s128
      %s129 = sphi 0, %s126
      %s130 = sphi 0, %s129
      %s146 = sphi 0, %s130
      %s154 = sphi 0, %s156
      %s157 = sphi 0, %s154
      %s158 = sphi 0, %s157
      %s174 = sphi 0, %s158
      %s182 = sphi 0, %s184
      %s185 = sphi 0, %s182
      %s186 = sphi 0, %s185
      %s202 = sphi 0, %s186
      %s210 = sphi 0, %s212
      %s213 = sphi 0, %s210
      %s214 = sphi 0, %s213
      %s230 = sphi 0, %s214
      %s238 = sphi 0, %s240
      %s241 = sphi 0, %s238
      %s242 = sphi 0, %s241
      %s258 = sphi 0, %s242
      %s266 = sphi 0, %s268
      %s269 = sphi 0, %s266
      %s270 = sphi 0, %s269
      %s286 = sphi 0, %s270
      %s294 = sphi 0, %s296
      %s297 = sphi 0, %s294
      %s298 = sphi 0, %s297
      %s314 = sphi 0, %s298
      %s322 = sphi 0, %s324
      %s325 = sphi 0, %s322
      %s326 = sphi 0, %s325
      %s342 = sphi 0, %s326
      %s350 = sphi 0, %s352
      %s353 = sphi 0, %s350
      %s354 = sphi 0, %s353
      %s370 = sphi 0, %s354
      %s374 = sphi 0, %s374
      %s376 = sphi 0, %s374
      %s377 = sphi 0, %s376
      %s391 = sphi 0, %s377
    $region4: #{robtf_forward_impl.1} parent=1 // loop_header_branch
      %40 = sbr.rel (%p38) target = $region8
    $region5: #{robtf_forward_impl.1} parent=1 // loop_body
      %s42 = ssub.s32 %s37, 1
      %s43 = ssub.s32 %s37, 2
      %s44 = sadd.s32 %s37, 1
      %s46 = sadd.s32 %s45, 1
      %p49 = scmp.eq.s32.totalorder %s37, 17
      %p50 = scmp.ne.s32.totalorder %s45, %s47
      %p51 = scmp.eq.s32.totalorder %s37, 0
      %p52 = por %p50, %p51
      %p53 = scmp.ne.s32.totalorder %s45, %s47
      %p54 = scmp.eq.s32.totalorder %s42, 17
      %p55 = por %p53, %p54
      %p56 = scmp.ne.s32.totalorder %s47, %s48
      %p57 = scmp.eq.s32.totalorder %s42, 0
      %p58 = por %p56, %p57
      %p59 = scmp.ne.s32.totalorder %s47, %s48
      %p60 = scmp.eq.s32.totalorder %s43, 17
      %p61 = por %p59, %p60
      %p63 = scmp.ne.s32.totalorder %s48, %s62
      %p64 = scmp.eq.s32.totalorder %s43, 0
      %p65 = por %p63, %p64
      %s66 = sld [smem:[#allocation4 + %s37]]
      %s67 = sld [smem:[#allocation4 + %s44]]
      %s68 = ssub.s32 %s66, %s67
      %p69 = scmp.eq.s32.totalorder %s68, 0
      %s71 = sadd.s32 %s70, 1
      %s72 = scalar_select %p69, %s70, %s71
      %p75 = pneg %p69
      %p76 = scmp.eq.s32.totalorder %s37, 17
      %p77 = por %p75, %p76
      %p78 = scmp.ne.s32.totalorder %s70, %s73
      %p79 = scmp.eq.s32.totalorder %s37, 0
      %p80 = por %p78, %p79
      %p81 = scmp.ne.s32.totalorder %s70, %s73
      %p82 = scmp.eq.s32.totalorder %s42, 17
      %p83 = por %p81, %p82
      %p84 = scmp.ne.s32.totalorder %s73, %s74
      %p85 = scmp.eq.s32.totalorder %s42, 0
      %p86 = por %p84, %p85
      %p87 = scmp.ne.s32.totalorder %s73, %s74
      %p88 = scmp.eq.s32.totalorder %s43, 17
      %p89 = por %p87, %p88
      %p91 = scmp.ne.s32.totalorder %s74, %s90
      %p92 = scmp.eq.s32.totalorder %s43, 0
      %p93 = por %p91, %p92
      %s94 = sld [smem:[#allocation4 + %s37]]
      %s95 = sld [smem:[#allocation4 + %s44]]
      %s96 = ssub.s32 %s94, %s95
      %p97 = scmp.eq.s32.totalorder %s96, 0
      %s99 = sadd.s32 %s98, 1
      %s100 = scalar_select %p97, %s98, %s99
      %p103 = pneg %p97
      %p104 = scmp.eq.s32.totalorder %s37, 17
      %p105 = por %p103, %p104
      %p106 = scmp.ne.s32.totalorder %s98, %s101
      %p107 = scmp.eq.s32.totalorder %s37, 0
      %p108 = por %p106, %p107
      %p109 = scmp.ne.s32.totalorder %s98, %s101
      %p110 = scmp.eq.s32.totalorder %s42, 17
      %p111 = por %p109, %p110
      %p112 = scmp.ne.s32.totalorder %s101, %s102
      %p113 = scmp.eq.s32.totalorder %s42, 0
      %p114 = por %p112, %p113
      %p115 = scmp.ne.s32.totalorder %s101, %s102
      %p116 = scmp.eq.s32.totalorder %s43, 17
      %p117 = por %p115, %p116
      %p119 = scmp.ne.s32.totalorder %s102, %s118
      %p120 = scmp.eq.s32.totalorder %s43, 0
      %p121 = por %p119, %p120
      %s122 = sld [smem:[#allocation4 + %s37]]
      %s123 = sld [smem:[#allocation4 + %s44]]
      %s124 = ssub.s32 %s122, %s123
      %p125 = scmp.eq.s32.totalorder %s124, 0
      %s127 = sadd.s32 %s126, 1
      %s128 = scalar_select %p125, %s126, %s127
      %p131 = pneg %p125
      %p132 = scmp.eq.s32.totalorder %s37, 17
      %p133 = por %p131, %p132
      %p134 = scmp.ne.s32.totalorder %s126, %s129
      %p135 = scmp.eq.s32.totalorder %s37, 0
      %p136 = por %p134, %p135
      %p137 = scmp.ne.s32.totalorder %s126, %s129
      %p138 = scmp.eq.s32.totalorder %s42, 17
      %p139 = por %p137, %p138
      %p140 = scmp.ne.s32.totalorder %s129, %s130
      %p141 = scmp.eq.s32.totalorder %s42, 0
      %p142 = por %p140, %p141
      %p143 = scmp.ne.s32.totalorder %s129, %s130
      %p144 = scmp.eq.s32.totalorder %s43, 17
      %p145 = por %p143, %p144
      %p147 = scmp.ne.s32.totalorder %s130, %s146
      %p148 = scmp.eq.s32.totalorder %s43, 0
      %p149 = por %p147, %p148
      %s150 = sld [smem:[#allocation4 + %s37]]
      %s151 = sld [smem:[#allocation4 + %s44]]
      %s152 = ssub.s32 %s150, %s151
      %p153 = scmp.eq.s32.totalorder %s152, 0
      %s155 = sadd.s32 %s154, 1
      %s156 = scalar_select %p153, %s154, %s155
      %p159 = pneg %p153
      %p160 = scmp.eq.s32.totalorder %s37, 17
      %p161 = por %p159, %p160
      %p162 = scmp.ne.s32.totalorder %s154, %s157
      %p163 = scmp.eq.s32.totalorder %s37, 0
      %p164 = por %p162, %p163
      %p165 = scmp.ne.s32.totalorder %s154, %s157
      %p166 = scmp.eq.s32.totalorder %s42, 17
      %p167 = por %p165, %p166
      %p168 = scmp.ne.s32.totalorder %s157, %s158
      %p169 = scmp.eq.s32.totalorder %s42, 0
      %p170 = por %p168, %p169
      %p171 = scmp.ne.s32.totalorder %s157, %s158
      %p172 = scmp.eq.s32.totalorder %s43, 17
      %p173 = por %p171, %p172
      %p175 = scmp.ne.s32.totalorder %s158, %s174
      %p176 = scmp.eq.s32.totalorder %s43, 0
      %p177 = por %p175, %p176
      %s178 = sld [smem:[#allocation4 + %s37]]
      %s179 = sld [smem:[#allocation4 + %s44]]
      %s180 = ssub.s32 %s178, %s179
      %p181 = scmp.eq.s32.totalorder %s180, 0
      %s183 = sadd.s32 %s182, 1
      %s184 = scalar_select %p181, %s182, %s183
      %p187 = pneg %p181
      %p188 = scmp.eq.s32.totalorder %s37, 17
      %p189 = por %p187, %p188
      %p190 = scmp.ne.s32.totalorder %s182, %s185
      %p191 = scmp.eq.s32.totalorder %s37, 0
      %p192 = por %p190, %p191
      %p193 = scmp.ne.s32.totalorder %s182, %s185
      %p194 = scmp.eq.s32.totalorder %s42, 17
      %p195 = por %p193, %p194
      %p196 = scmp.ne.s32.totalorder %s185, %s186
      %p197 = scmp.eq.s32.totalorder %s42, 0
      %p198 = por %p196, %p197
      %p199 = scmp.ne.s32.totalorder %s185, %s186
      %p200 = scmp.eq.s32.totalorder %s43, 17
      %p201 = por %p199, %p200
      %p203 = scmp.ne.s32.totalorder %s186, %s202
      %p204 = scmp.eq.s32.totalorder %s43, 0
      %p205 = por %p203, %p204
      %s206 = sld [smem:[#allocation4 + %s37]]
      %s207 = sld [smem:[#allocation4 + %s44]]
      %s208 = ssub.s32 %s206, %s207
      %p209 = scmp.eq.s32.totalorder %s208, 0
      %s211 = sadd.s32 %s210, 1
      %s212 = scalar_select %p209, %s210, %s211
      %p215 = pneg %p209
      %p216 = scmp.eq.s32.totalorder %s37, 17
      %p217 = por %p215, %p216
      %p218 = scmp.ne.s32.totalorder %s210, %s213
      %p219 = scmp.eq.s32.totalorder %s37, 0
      %p220 = por %p218, %p219
      %p221 = scmp.ne.s32.totalorder %s210, %s213
      %p222 = scmp.eq.s32.totalorder %s42, 17
      %p223 = por %p221, %p222
      %p224 = scmp.ne.s32.totalorder %s213, %s214
      %p225 = scmp.eq.s32.totalorder %s42, 0
      %p226 = por %p224, %p225
      %p227 = scmp.ne.s32.totalorder %s213, %s214
      %p228 = scmp.eq.s32.totalorder %s43, 17
      %p229 = por %p227, %p228
      %p231 = scmp.ne.s32.totalorder %s214, %s230
      %p232 = scmp.eq.s32.totalorder %s43, 0
      %p233 = por %p231, %p232
      %s234 = sld [smem:[#allocation4 + %s37]]
      %s235 = sld [smem:[#allocation4 + %s44]]
      %s236 = ssub.s32 %s234, %s235
      %p237 = scmp.eq.s32.totalorder %s236, 0
      %s239 = sadd.s32 %s238, 1
      %s240 = scalar_select %p237, %s238, %s239
      %p243 = pneg %p237
      %p244 = scmp.eq.s32.totalorder %s37, 17
      %p245 = por %p243, %p244
      %p246 = scmp.ne.s32.totalorder %s238, %s241
      %p247 = scmp.eq.s32.totalorder %s37, 0
      %p248 = por %p246, %p247
      %p249 = scmp.ne.s32.totalorder %s238, %s241
      %p250 = scmp.eq.s32.totalorder %s42, 17
      %p251 = por %p249, %p250
      %p252 = scmp.ne.s32.totalorder %s241, %s242
      %p253 = scmp.eq.s32.totalorder %s42, 0
      %p254 = por %p252, %p253
      %p255 = scmp.ne.s32.totalorder %s241, %s242
      %p256 = scmp.eq.s32.totalorder %s43, 17
      %p257 = por %p255, %p256
      %p259 = scmp.ne.s32.totalorder %s242, %s258
      %p260 = scmp.eq.s32.totalorder %s43, 0
      %p261 = por %p259, %p260
      %s262 = sld [smem:[#allocation4 + %s37]]
      %s263 = sld [smem:[#allocation4 + %s44]]
      %s264 = ssub.s32 %s262, %s263
      %p265 = scmp.eq.s32.totalorder %s264, 0
      %s267 = sadd.s32 %s266, 1
      %s268 = scalar_select %p265, %s266, %s267
      %p271 = pneg %p265
      %p272 = scmp.eq.s32.totalorder %s37, 17
      %p273 = por %p271, %p272
      %p274 = scmp.ne.s32.totalorder %s266, %s269
      %p275 = scmp.eq.s32.totalorder %s37, 0
      %p276 = por %p274, %p275
      %p277 = scmp.ne.s32.totalorder %s266, %s269
      %p278 = scmp.eq.s32.totalorder %s42, 17
      %p279 = por %p277, %p278
      %p280 = scmp.ne.s32.totalorder %s269, %s270
      %p281 = scmp.eq.s32.totalorder %s42, 0
      %p282 = por %p280, %p281
      %p283 = scmp.ne.s32.totalorder %s269, %s270
      %p284 = scmp.eq.s32.totalorder %s43, 17
      %p285 = por %p283, %p284
      %p287 = scmp.ne.s32.totalorder %s270, %s286
      %p288 = scmp.eq.s32.totalorder %s43, 0
      %p289 = por %p287, %p288
      %s290 = sld [smem:[#allocation4 + %s37]]
      %s291 = sld [smem:[#allocation4 + %s44]]
      %s292 = ssub.s32 %s290, %s291
      %p293 = scmp.eq.s32.totalorder %s292, 0
      %s295 = sadd.s32 %s294, 1
      %s296 = scalar_select %p293, %s294, %s295
      %p299 = pneg %p293
      %p300 = scmp.eq.s32.totalorder %s37, 17
      %p301 = por %p299, %p300
      %p302 = scmp.ne.s32.totalorder %s294, %s297
      %p303 = scmp.eq.s32.totalorder %s37, 0
      %p304 = por %p302, %p303
      %p305 = scmp.ne.s32.totalorder %s294, %s297
      %p306 = scmp.eq.s32.totalorder %s42, 17
      %p307 = por %p305, %p306
      %p308 = scmp.ne.s32.totalorder %s297, %s298
      %p309 = scmp.eq.s32.totalorder %s42, 0
      %p310 = por %p308, %p309
      %p311 = scmp.ne.s32.totalorder %s297, %s298
      %p312 = scmp.eq.s32.totalorder %s43, 17
      %p313 = por %p311, %p312
      %p315 = scmp.ne.s32.totalorder %s298, %s314
      %p316 = scmp.eq.s32.totalorder %s43, 0
      %p317 = por %p315, %p316
      %s318 = sld [smem:[#allocation4 + %s37]]
      %s319 = sld [smem:[#allocation4 + %s44]]
      %s320 = ssub.s32 %s318, %s319
      %p321 = scmp.eq.s32.totalorder %s320, 0
      %s323 = sadd.s32 %s322, 1
      %s324 = scalar_select %p321, %s322, %s323
      %p327 = pneg %p321
      %p328 = scmp.eq.s32.totalorder %s37, 17
      %p329 = por %p327, %p328
      %p330 = scmp.ne.s32.totalorder %s322, %s325
      %p331 = scmp.eq.s32.totalorder %s37, 0
      %p332 = por %p330, %p331
      %p333 = scmp.ne.s32.totalorder %s322, %s325
      %p334 = scmp.eq.s32.totalorder %s42, 17
      %p335 = por %p333, %p334
      %p336 = scmp.ne.s32.totalorder %s325, %s326
      %p337 = scmp.eq.s32.totalorder %s42, 0
      %p338 = por %p336, %p337
      %p339 = scmp.ne.s32.totalorder %s325, %s326
      %p340 = scmp.eq.s32.totalorder %s43, 17
      %p341 = por %p339, %p340
      %p343 = scmp.ne.s32.totalorder %s326, %s342
      %p344 = scmp.eq.s32.totalorder %s43, 0
      %p345 = por %p343, %p344
      %s346 = sld [smem:[#allocation4 + %s37]]
      %s347 = sld [smem:[#allocation4 + %s44]]
      %s348 = ssub.s32 %s346, %s347
      %p349 = scmp.eq.s32.totalorder %s348, 0
      %s351 = sadd.s32 %s350, 1
      %s352 = scalar_select %p349, %s350, %s351
      %p355 = pneg %p349
      %p356 = scmp.eq.s32.totalorder %s37, 17
      %p357 = por %p355, %p356
      %p358 = scmp.ne.s32.totalorder %s350, %s353
      %p359 = scmp.eq.s32.totalorder %s37, 0
      %p360 = por %p358, %p359
      %p361 = scmp.ne.s32.totalorder %s350, %s353
      %p362 = scmp.eq.s32.totalorder %s42, 17
      %p363 = por %p361, %p362
      %p364 = scmp.ne.s32.totalorder %s353, %s354
      %p365 = scmp.eq.s32.totalorder %s42, 0
      %p366 = por %p364, %p365
      %p367 = scmp.ne.s32.totalorder %s353, %s354
      %p368 = scmp.eq.s32.totalorder %s43, 17
      %p369 = por %p367, %p368
      %p371 = scmp.ne.s32.totalorder %s354, %s370
      %p372 = scmp.eq.s32.totalorder %s43, 0
      %p373 = por %p371, %p372
      %s375 = sadd.s32 %s374, 1
      %p378 = scmp.eq.s32.totalorder %s37, 17
      %p379 = scmp.ne.s32.totalorder %s374, %s376
      %p380 = scmp.eq.s32.totalorder %s37, 0
      %p381 = por %p379, %p380
      %p382 = scmp.ne.s32.totalorder %s374, %s376
      %p383 = scmp.eq.s32.totalorder %s42, 17
      %p384 = por %p382, %p383
      %p385 = scmp.ne.s32.totalorder %s376, %s377
      %p386 = scmp.eq.s32.totalorder %s42, 0
      %p387 = por %p385, %p386
      %p388 = scmp.ne.s32.totalorder %s376, %s377
      %p389 = scmp.eq.s32.totalorder %s43, 17
      %p390 = por %p388, %p389
      %p392 = scmp.ne.s32.totalorder %s377, %s391
      %p393 = scmp.eq.s32.totalorder %s43, 0
      %p394 = por %p392, %p393
      %p395 = scmp.le.s32.totalorder 1, %s37
      %p396 = scmp.lt.s32.totalorder %s37, 19
      %p397 = pnand %p395, %p396
      %p398 = pneg %p397
      // Predicated region
      $region9: #{robtf_forward_impl.1} parent=5 // pred_check
        _
      $region10: #{robtf_forward_impl.1} parent=5 // pred_check_branch
        %400 = sbr.rel (%p397) target = $region12
      $region11: #{robtf_forward_impl.1} parent=5 // pred_region
        %s401 = ssub.s32 %s37, 1
        // Predicated region
        $region13: #{robtf_forward_impl.1} parent=11 // pred_check
          %p402 = pneg %p58
        $region14: #{robtf_forward_impl.1} parent=11 // pred_check_branch
          %404 = sbr.rel (%p402) target = $region16
        $region15: #{robtf_forward_impl.1} parent=11 // pred_region
          %s406 = ssub.s32 128, 128
          %407 = vsyncadd [#allocation6], %s406
          %s409 = sshll.u32 [#allocation5], 4
          %s410 = int_to_ptr.vmem [resolvable:$true] %s409
          %412 = dma.hbm_to_vmem [thread:$0]  %s1, 128, %s410, [#allocation6]
        $region16: #{robtf_forward_impl.1} parent=11 // pred_fallthru
          _
      $region12: #{robtf_forward_impl.1} parent=5 // pred_fallthru
        _
      %p413 = scmp.lt.s32.totalorder %s37, 18
      // Predicated region
      $region17: #{robtf_forward_impl.1} parent=5 // pred_check
        %p414 = pneg %p413
      $region18: #{robtf_forward_impl.1} parent=5 // pred_check_branch
        %416 = sbr.rel (%p414) target = $region20
      $region19: #{robtf_forward_impl.1} parent=5 // pred_region
        // Predicated region
        $region21: #{robtf_forward_impl.1} parent=19 // pred_check
          %p417 = pneg %p80
        $region22: #{robtf_forward_impl.1} parent=19 // pred_check_branch
          %419 = sbr.rel (%p417) target = $region24
        $region23: #{robtf_forward_impl.1} parent=19 // pred_region
          %s420 = sand.u32 %s37, 1
          %s421 = scalar_lea.sflag [#allocation9], %s420
          %s422 = sand.u32 %s70, 1
          %s423 = smul.addr %s422, 32
          %s424 = scalar_lea.vmem [#allocation8], %s423
          %s425 = sld [smem:[#allocation4 + %s37]]
          %s427 = ssub.s32 512, 512
          %428 = vsyncadd %s421, %s427
          %s429 = smul.addr %s425, 8
          %s430 = smul.addr %s429, 64
          %s431 = scalar_lea.hbm %s2, %s430
          %s432 = sshll.u32 %s424, 4
          %s433 = int_to_ptr.vmem [resolvable:$true] %s432
          %438 = dma.hbm_to_vmem [thread:$0]  %s431, 512, %s433, %s421, 256, 256, 16
        $region24: #{robtf_forward_impl.1} parent=19 // pred_fallthru
          _
        // Predicated region
        $region25: #{robtf_forward_impl.1} parent=19 // pred_check
          %p439 = pneg %p108
        $region26: #{robtf_forward_impl.1} parent=19 // pred_check_branch
          %441 = sbr.rel (%p439) target = $region28
        $region27: #{robtf_forward_impl.1} parent=19 // pred_region
          %s442 = sand.u32 %s37, 1
          %s443 = scalar_lea.sflag [#allocation9], %s442
          %s444 = sand.u32 %s98, 1
          %s445 = smul.addr %s444, 1024
          %s446 = scalar_lea.vmem [#allocation10], %s445
          %s447 = sld [smem:[#allocation4 + %s37]]
          %s449 = ssub.s32 16384, 16384
          %450 = vsyncadd %s443, %s449
          %s451 = smul.addr %s447, 256
          %s452 = smul.addr %s451, 64
          %s453 = scalar_lea.hbm %s3, %s452
          %s454 = sshll.u32 %s446, 4
          %s455 = int_to_ptr.vmem [resolvable:$true] %s454
          %460 = dma.hbm_to_vmem [thread:$0]  %s453, 16384, %s455, %s443, 256, 256, 16
        $region28: #{robtf_forward_impl.1} parent=19 // pred_fallthru
          _
        // Predicated region
        $region29: #{robtf_forward_impl.1} parent=19 // pred_check
          %p461 = pneg %p136
        $region30: #{robtf_forward_impl.1} parent=19 // pred_check_branch
          %463 = sbr.rel (%p461) target = $region32
        $region31: #{robtf_forward_impl.1} parent=19 // pred_region
          %s464 = sand.u32 %s37, 1
          %s465 = scalar_lea.sflag [#allocation12], %s464
          %s466 = sand.u32 %s126, 1
          %s467 = smul.addr %s466, 1024
          %s468 = scalar_lea.vmem [#allocation11], %s467
          %s469 = sld [smem:[#allocation4 + %s37]]
          %s471 = ssub.s32 16384, 16384
          %472 = vsyncadd %s465, %s471
          %s473 = smul.addr %s469, 256
          %s474 = smul.addr %s473, 64
          %s475 = scalar_lea.hbm %s4, %s474
          %s476 = sshll.u32 %s468, 4
          %s477 = int_to_ptr.vmem [resolvable:$true] %s476
          %482 = dma.hbm_to_vmem [thread:$0]  %s475, 16384, %s477, %s465, 256, 256, 16
        $region32: #{robtf_forward_impl.1} parent=19 // pred_fallthru
          _
        // Predicated region
        $region33: #{robtf_forward_impl.1} parent=19 // pred_check
          %p483 = pneg %p164
        $region34: #{robtf_forward_impl.1} parent=19 // pred_check_branch
          %485 = sbr.rel (%p483) target = $region36
        $region35: #{robtf_forward_impl.1} parent=19 // pred_region
          %s486 = sand.u32 %s37, 1
          %s487 = scalar_lea.sflag [#allocation12], %s486
          %s488 = sand.u32 %s154, 1
          %s489 = smul.addr %s488, 1024
          %s490 = scalar_lea.vmem [#allocation13], %s489
          %s491 = sld [smem:[#allocation4 + %s37]]
          %s493 = ssub.s32 16384, 16384
          %494 = vsyncadd %s487, %s493
          %s495 = smul.addr %s491, 256
          %s496 = smul.addr %s495, 64
          %s497 = scalar_lea.hbm %s5, %s496
          %s498 = sshll.u32 %s490, 4
          %s499 = int_to_ptr.vmem [resolvable:$true] %s498
          %504 = dma.hbm_to_vmem [thread:$0]  %s497, 16384, %s499, %s487, 256, 256, 16
        $region36: #{robtf_forward_impl.1} parent=19 // pred_fallthru
          _
        // Predicated region
        $region37: #{robtf_forward_impl.1} parent=19 // pred_check
          %p505 = pneg %p192
        $region38: #{robtf_forward_impl.1} parent=19 // pred_check_branch
          %507 = sbr.rel (%p505) target = $region40
        $region39: #{robtf_forward_impl.1} parent=19 // pred_region
          %s508 = sand.u32 %s37, 1
          %s509 = scalar_lea.sflag [#allocation15], %s508
          %s510 = sand.u32 %s182, 1
          %s511 = smul.addr %s510, 1024
          %s512 = scalar_lea.vmem [#allocation14], %s511
          %s513 = sld [smem:[#allocation4 + %s37]]
          %s515 = ssub.s32 16384, 16384
          %516 = vsyncadd %s509, %s515
          %s517 = smul.addr %s513, 256
          %s518 = smul.addr %s517, 64
          %s519 = scalar_lea.hbm %s6, %s518
          %s520 = sshll.u32 %s512, 4
          %s521 = int_to_ptr.vmem [resolvable:$true] %s520
          %526 = dma.hbm_to_vmem [thread:$0]  %s519, 16384, %s521, %s509, 256, 256, 16
        $region40: #{robtf_forward_impl.1} parent=19 // pred_fallthru
          _
        // Predicated region
        $region41: #{robtf_forward_impl.1} parent=19 // pred_check
          %p527 = pneg %p220
        $region42: #{robtf_forward_impl.1} parent=19 // pred_check_branch
          %529 = sbr.rel (%p527) target = $region44
        $region43: #{robtf_forward_impl.1} parent=19 // pred_region
          %s530 = sand.u32 %s37, 1
          %s531 = scalar_lea.sflag [#allocation15], %s530
          %s532 = sand.u32 %s210, 1
          %s533 = smul.addr %s532, 32
          %s534 = scalar_lea.vmem [#allocation16], %s533
          %s535 = sld [smem:[#allocation4 + %s37]]
          %s537 = ssub.s32 512, 512
          %538 = vsyncadd %s531, %s537
          %s539 = smul.addr %s535, 4
          %s540 = smul.addr %s539, 128
          %s541 = scalar_lea.hbm %s7, %s540
          %s543 = sshll.u32 %s534, 4
          %s544 = int_to_ptr.vmem [resolvable:$true] %s543
          %546 = dma.hbm_to_vmem [thread:$0]  %s541, 512, %s544, %s531
        $region44: #{robtf_forward_impl.1} parent=19 // pred_fallthru
          _
        // Predicated region
        $region45: #{robtf_forward_impl.1} parent=19 // pred_check
          %p547 = pneg %p248
        $region46: #{robtf_forward_impl.1} parent=19 // pred_check_branch
          %549 = sbr.rel (%p547) target = $region48
        $region47: #{robtf_forward_impl.1} parent=19 // pred_region
          %s550 = sand.u32 %s37, 1
          %s551 = scalar_lea.sflag [#allocation18], %s550
          %s552 = sand.u32 %s238, 1
          %s553 = smul.addr %s552, 256
          %s554 = scalar_lea.vmem [#allocation17], %s553
          %s555 = sld [smem:[#allocation4 + %s37]]
          %s557 = ssub.s32 4096, 4096
          %558 = vsyncadd %s551, %s557
          %s559 = smul.addr %s555, 64
          %s560 = smul.addr %s559, 64
          %s561 = scalar_lea.hbm %s8, %s560
          %s562 = sshll.u32 %s554, 4
          %s563 = int_to_ptr.vmem [resolvable:$true] %s562
          %568 = dma.hbm_to_vmem [thread:$0]  %s561, 4096, %s563, %s551, 64, 64, 4
        $region48: #{robtf_forward_impl.1} parent=19 // pred_fallthru
          _
        // Predicated region
        $region49: #{robtf_forward_impl.1} parent=19 // pred_check
          %p569 = pneg %p276
        $region50: #{robtf_forward_impl.1} parent=19 // pred_check_branch
          %571 = sbr.rel (%p569) target = $region52
        $region51: #{robtf_forward_impl.1} parent=19 // pred_region
          %s572 = sld [smem:[#allocation4 + %s37]]
          %p573 = scmp.lt.s32.totalorder %s572, 8
          %s574 = scalar_select %p573, %s572, 8
          %s575 = smul.addr %s574, 16
          %s576 = smul.addr %s575, 4
          %s577 = scalar_lea.vmem %s9, %s576
          %s578 = sld [smem:[#allocation4 + %s37]]
        $region52: #{robtf_forward_impl.1} parent=19 // pred_fallthru
          _
        // Predicated region
        $region53: #{robtf_forward_impl.1} parent=19 // pred_check
          %p579 = pneg %p304
        $region54: #{robtf_forward_impl.1} parent=19 // pred_check_branch
          %581 = sbr.rel (%p579) target = $region56
        $region55: #{robtf_forward_impl.1} parent=19 // pred_region
          %s582 = sld [smem:[#allocation4 + %s37]]
          %p583 = scmp.lt.s32.totalorder %s582, 8
          %s584 = scalar_select %p583, %s582, 8
          %s585 = smul.addr %s584, 16
          %s586 = smul.addr %s585, 4
          %s587 = scalar_lea.vmem %s10, %s586
          %s588 = sld [smem:[#allocation4 + %s37]]
        $region56: #{robtf_forward_impl.1} parent=19 // pred_fallthru
          _
        // Predicated region
        $region57: #{robtf_forward_impl.1} parent=19 // pred_check
          %p589 = pneg %p332
        $region58: #{robtf_forward_impl.1} parent=19 // pred_check_branch
          %591 = sbr.rel (%p589) target = $region60
        $region59: #{robtf_forward_impl.1} parent=19 // pred_region
          %s592 = sand.u32 %s37, 1
          %s593 = scalar_lea.sflag [#allocation18], %s592
          %s594 = sand.u32 %s322, 1
          %s595 = scalar_lea.vmem [#allocation19], %s594
          %s596 = sld [smem:[#allocation4 + %s37]]
          %s598 = ssub.s32 16, 16
          %599 = vsyncadd %s593, %s598
          %s600 = smul.addr %s596, 16
          %s601 = scalar_lea.hbm %s11, %s600
          %s603 = sshll.u32 %s595, 4
          %s604 = int_to_ptr.vmem [resolvable:$true] %s603
          %606 = dma.hbm_to_vmem [thread:$0]  %s601, 16, %s604, %s593
        $region60: #{robtf_forward_impl.1} parent=19 // pred_fallthru
          _
        // Predicated region
        $region61: #{robtf_forward_impl.1} parent=19 // pred_check
          %p607 = pneg %p360
        $region62: #{robtf_forward_impl.1} parent=19 // pred_check_branch
          %609 = sbr.rel (%p607) target = $region64
        $region63: #{robtf_forward_impl.1} parent=19 // pred_region
          %s610 = sld [smem:[#allocation4 + %s37]]
          %p611 = scmp.lt.s32.totalorder %s610, 8
          %s612 = scalar_select %p611, %s610, 8
          %s613 = scalar_lea.vmem %s12, %s612
          %s614 = sld [smem:[#allocation4 + %s37]]
        $region64: #{robtf_forward_impl.1} parent=19 // pred_fallthru
          _
      $region20: #{robtf_forward_impl.1} parent=5 // pred_fallthru
        _
      %p615 = scmp.le.s32.totalorder 1, %s37
      %p616 = scmp.lt.s32.totalorder %s37, 19
      %p617 = pnand %p615, %p616
      %p618 = pneg %p617
      // Predicated region
      $region65: #{robtf_forward_impl.1} parent=5 // pred_check
        _
      $region66: #{robtf_forward_impl.1} parent=5 // pred_check_branch
        %620 = sbr.rel (%p617) target = $region68
      $region67: #{robtf_forward_impl.1} parent=5 // pred_region
        %s621 = ssub.s32 %s37, 1
        // Predicated region
        $region69: #{robtf_forward_impl.1} parent=67 // pred_check
          %p622 = pneg %p58
        $region70: #{robtf_forward_impl.1} parent=67 // pred_check_branch
          %624 = sbr.rel (%p622) target = $region72
        $region71: #{robtf_forward_impl.1} parent=67 // pred_region
          %625 = dma.done [#allocation6], 128
        $region72: #{robtf_forward_impl.1} parent=67 // pred_fallthru
          _
        %s626 = sand.u32 %s42, 1
        %s627 = scalar_lea.sflag [#allocation9], %s626
        %s628 = sand.u32 %s73, 1
        %s629 = smul.addr %s628, 32
        %s630 = scalar_lea.vmem [#allocation8], %s629
        // Predicated region
        $region73: #{robtf_forward_impl.1} parent=67 // pred_check
          %p631 = pneg %p86
        $region74: #{robtf_forward_impl.1} parent=67 // pred_check_branch
          %633 = sbr.rel (%p631) target = $region76
        $region75: #{robtf_forward_impl.1} parent=67 // pred_region
          %634 = dma.done %s627, 512
        $region76: #{robtf_forward_impl.1} parent=67 // pred_fallthru
          _
        %s635 = sand.u32 %s42, 1
        %s636 = scalar_lea.sflag [#allocation9], %s635
        %s637 = sand.u32 %s101, 1
        %s638 = smul.addr %s637, 1024
        %s639 = scalar_lea.vmem [#allocation10], %s638
        // Predicated region
        $region77: #{robtf_forward_impl.1} parent=67 // pred_check
          %p640 = pneg %p114
        $region78: #{robtf_forward_impl.1} parent=67 // pred_check_branch
          %642 = sbr.rel (%p640) target = $region80
        $region79: #{robtf_forward_impl.1} parent=67 // pred_region
          %643 = dma.done %s636, 16384
        $region80: #{robtf_forward_impl.1} parent=67 // pred_fallthru
          _
        %s644 = sand.u32 %s42, 1
        %s645 = scalar_lea.sflag [#allocation12], %s644
        %s646 = sand.u32 %s129, 1
        %s647 = smul.addr %s646, 1024
        %s648 = scalar_lea.vmem [#allocation11], %s647
        // Predicated region
        $region81: #{robtf_forward_impl.1} parent=67 // pred_check
          %p649 = pneg %p142
        $region82: #{robtf_forward_impl.1} parent=67 // pred_check_branch
          %651 = sbr.rel (%p649) target = $region84
        $region83: #{robtf_forward_impl.1} parent=67 // pred_region
          %652 = dma.done %s645, 16384
        $region84: #{robtf_forward_impl.1} parent=67 // pred_fallthru
          _
        %s653 = sand.u32 %s42, 1
        %s654 = scalar_lea.sflag [#allocation12], %s653
        %s655 = sand.u32 %s157, 1
        %s656 = smul.addr %s655, 1024
        %s657 = scalar_lea.vmem [#allocation13], %s656
        // Predicated region
        $region85: #{robtf_forward_impl.1} parent=67 // pred_check
          %p658 = pneg %p170
        $region86: #{robtf_forward_impl.1} parent=67 // pred_check_branch
          %660 = sbr.rel (%p658) target = $region88
        $region87: #{robtf_forward_impl.1} parent=67 // pred_region
          %661 = dma.done %s654, 16384
        $region88: #{robtf_forward_impl.1} parent=67 // pred_fallthru
          _
        %s662 = sand.u32 %s42, 1
        %s663 = scalar_lea.sflag [#allocation15], %s662
        %s664 = sand.u32 %s185, 1
        %s665 = smul.addr %s664, 1024
        %s666 = scalar_lea.vmem [#allocation14], %s665
        // Predicated region
        $region89: #{robtf_forward_impl.1} parent=67 // pred_check
          %p667 = pneg %p198
        $region90: #{robtf_forward_impl.1} parent=67 // pred_check_branch
          %669 = sbr.rel (%p667) target = $region92
        $region91: #{robtf_forward_impl.1} parent=67 // pred_region
          %670 = dma.done %s663, 16384
        $region92: #{robtf_forward_impl.1} parent=67 // pred_fallthru
          _
        %s671 = sand.u32 %s42, 1
        %s672 = scalar_lea.sflag [#allocation15], %s671
        %s673 = sand.u32 %s213, 1
        %s674 = smul.addr %s673, 32
        %s675 = scalar_lea.vmem [#allocation16], %s674
        // Predicated region
        $region93: #{robtf_forward_impl.1} parent=67 // pred_check
          %p676 = pneg %p226
        $region94: #{robtf_forward_impl.1} parent=67 // pred_check_branch
          %678 = sbr.rel (%p676) target = $region96
        $region95: #{robtf_forward_impl.1} parent=67 // pred_region
          %679 = dma.done %s672, 512
        $region96: #{robtf_forward_impl.1} parent=67 // pred_fallthru
          _
        %s680 = sand.u32 %s42, 1
        %s681 = scalar_lea.sflag [#allocation18], %s680
        %s682 = sand.u32 %s241, 1
        %s683 = smul.addr %s682, 256
        %s684 = scalar_lea.vmem [#allocation17], %s683
        // Predicated region
        $region97: #{robtf_forward_impl.1} parent=67 // pred_check
          %p685 = pneg %p254
        $region98: #{robtf_forward_impl.1} parent=67 // pred_check_branch
          %687 = sbr.rel (%p685) target = $region100
        $region99: #{robtf_forward_impl.1} parent=67 // pred_region
          %688 = dma.done %s681, 4096
        $region100: #{robtf_forward_impl.1} parent=67 // pred_fallthru
          _
        %s689 = sand.u32 %s42, 1
        %s690 = scalar_lea.sflag [#allocation18], %s689
        %s691 = sand.u32 %s325, 1
        %s692 = scalar_lea.vmem [#allocation19], %s691
        // Predicated region
        $region101: #{robtf_forward_impl.1} parent=67 // pred_check
          %p693 = pneg %p338
        $region102: #{robtf_forward_impl.1} parent=67 // pred_check_branch
          %695 = sbr.rel (%p693) target = $region104
        $region103: #{robtf_forward_impl.1} parent=67 // pred_region
          %696 = dma.done %s690, 16
        $region104: #{robtf_forward_impl.1} parent=67 // pred_fallthru
          _
        %p697 = pneg %p58
        %p698 = pneg %p55
        %s699 = sand.u32 %s42, 1
        %s700 = scalar_lea.sflag [#allocation9], %s699
        %s701 = sand.u32 %s73, 1
        %s702 = smul.addr %s701, 32
        %s703 = scalar_lea.vmem [#allocation8], %s702
        %p704 = pneg %p86
        %p705 = pneg %p83
        %s706 = sand.u32 %s42, 1
        %s707 = scalar_lea.sflag [#allocation9], %s706
        %s708 = sand.u32 %s101, 1
        %s709 = smul.addr %s708, 1024
        %s710 = scalar_lea.vmem [#allocation10], %s709
        %p711 = pneg %p114
        %p712 = pneg %p111
        %s713 = sand.u32 %s42, 1
        %s714 = scalar_lea.sflag [#allocation12], %s713
        %s715 = sand.u32 %s129, 1
        %s716 = smul.addr %s715, 1024
        %s717 = scalar_lea.vmem [#allocation11], %s716
        %p718 = pneg %p142
        %p719 = pneg %p139
        %s720 = sand.u32 %s42, 1
        %s721 = scalar_lea.sflag [#allocation12], %s720
        %s722 = sand.u32 %s157, 1
        %s723 = smul.addr %s722, 1024
        %s724 = scalar_lea.vmem [#allocation13], %s723
        %p725 = pneg %p170
        %p726 = pneg %p167
        %s727 = sand.u32 %s42, 1
        %s728 = scalar_lea.sflag [#allocation15], %s727
        %s729 = sand.u32 %s185, 1
        %s730 = smul.addr %s729, 1024
        %s731 = scalar_lea.vmem [#allocation14], %s730
        %p732 = pneg %p198
        %p733 = pneg %p195
        %s734 = sand.u32 %s42, 1
        %s735 = scalar_lea.sflag [#allocation15], %s734
        %s736 = sand.u32 %s213, 1
        %s737 = smul.addr %s736, 32
        %s738 = scalar_lea.vmem [#allocation16], %s737
        %p739 = pneg %p226
        %p740 = pneg %p223
        %s741 = sand.u32 %s42, 1
        %s742 = scalar_lea.sflag [#allocation18], %s741
        %s743 = sand.u32 %s241, 1
        %s744 = smul.addr %s743, 256
        %s745 = scalar_lea.vmem [#allocation17], %s744
        %p746 = pneg %p254
        %p747 = pneg %p251
        %s748 = sld [smem:[#allocation4 + %s42]]
        %p749 = scmp.lt.s32.totalorder %s748, 8
        %s750 = scalar_select %p749, %s748, 8
        %s751 = smul.addr %s750, 16
        %s752 = smul.addr %s751, 4
        %s753 = scalar_lea.vmem %s9, %s752
        %p754 = pneg %p282
        %p755 = pneg %p279
        %s756 = sld [smem:[#allocation4 + %s42]]
        %p757 = scmp.lt.s32.totalorder %s756, 8
        %s758 = scalar_select %p757, %s756, 8
        %s759 = smul.addr %s758, 16
        %s760 = smul.addr %s759, 4
        %s761 = scalar_lea.vmem %s10, %s760
        %p762 = pneg %p310
        %p763 = pneg %p307
        %s764 = sand.u32 %s42, 1
        %s765 = scalar_lea.sflag [#allocation18], %s764
        %s766 = sand.u32 %s325, 1
        %s767 = scalar_lea.vmem [#allocation19], %s766
        %p768 = pneg %p338
        %p769 = pneg %p335
        %s770 = sld [smem:[#allocation4 + %s42]]
        %p771 = scmp.lt.s32.totalorder %s770, 8
        %s772 = scalar_select %p771, %s770, 8
        %s773 = scalar_lea.vmem %s12, %s772
        %p774 = pneg %p366
        %p775 = pneg %p363
        %p776 = pneg %p387
        %p777 = pneg %p384
        %s778 = sld [smem:[#allocation4 + %s42]]
        %s779 = sld [smem:[#allocation4 + %s42]]
        %s780 = sld [smem:[#allocation4 + %s42]]
        %s781 = sld [smem:[#allocation4 + %s42]]
        %s782 = sld [smem:[#allocation4 + %s42]]
        %s783 = sld [smem:[#allocation4 + %s42]]
        %s784 = sld [smem:[#allocation4 + %s42]]
        %s785 = sld [smem:[#allocation4 + %s42]]
        %p786 = scmp.lt.s32.totalorder %s785, 8
        %s787 = scalar_select %p786, %s785, 8
        %s788 = smul.addr %s787, 16
        %s789 = smul.addr %s788, 4
        %s790 = scalar_lea.vmem %s9, %s789
        %s791 = sld [smem:[#allocation4 + %s42]]
        %s792 = sld [smem:[#allocation4 + %s42]]
        %p793 = scmp.lt.s32.totalorder %s792, 8
        %s794 = scalar_select %p793, %s792, 8
        %s795 = smul.addr %s794, 16
        %s796 = smul.addr %s795, 4
        %s797 = scalar_lea.vmem %s10, %s796
        %s798 = sld [smem:[#allocation4 + %s42]]
        %s799 = sld [smem:[#allocation4 + %s42]]
        %s800 = sld [smem:[#allocation4 + %s42]]
        %p801 = scmp.lt.s32.totalorder %s800, 8
        %s802 = scalar_select %p801, %s800, 8
        %s803 = scalar_lea.vmem %s12, %s802
        %s804 = sld [smem:[#allocation4 + %s42]]
        %p806 = scmp.eq.s32.totalorder %s42, 0
        // Predicated region
        $region105: #{robtf_forward_impl.1} parent=67 // pred_check
          %p807 = pneg %p806
        $region106: #{robtf_forward_impl.1} parent=67 // pred_check_branch
          %809 = sbr.rel (%p807) target = $region108
        $region107: #{robtf_forward_impl.1} parent=67 // pred_region
          %v810 = vld [vmem:[#allocation5] sm:$0xff]
          %vm811 = vcmask 130048
          %812 = vst.msk [vmem:[#allocation2] sm:$0xff] %vm811, %v810
          %vm813 = vcmask 64512
          %814 = vst.msk [vmem:[#allocation20] sm:$0xff] %vm813, 0.0
        $region108: #{robtf_forward_impl.1} parent=67 // pred_fallthru
          _
        %v815 = vld [vmem:[#allocation2] sm:$0xff]
        %v816 = vpack.c.bf16 %v815, %v815
        %v817 = vld [vmem:[%s675] sm:$0x1f]
        %v818 = vld [vmem:[%s675 + $0x8] sm:$0x1f]
        %v819 = vld [vmem:[%s675 + $0x10] sm:$0x1f]
        %v820 = vld [vmem:[%s675 + $0x18] sm:$0x1f]
        %v821 = vld [vmem:[%s630] sm:$0xff]
        %v822 = vld [vmem:[%s630 + $0x8] sm:$0xff]
        %v823 = vld [vmem:[%s630 + $0x10] sm:$0xff]
        %v824 = vld [vmem:[%s630 + $0x18] sm:$0xff]
        %v825 = vlaneseq
        %v826 = vshrl.u32 %v825, 7
        %v827 = vsub.s32 0, %v826
        %v828 = vrot.slane %v817, %v827
        %v829 = vlaneseq
        %v830 = vshrl.u32 %v829, 7
        %v831 = vsub.s32 0, %v830
        %v832 = vrot.slane %v818, %v831
        %v833 = vlaneseq
        %v834 = vshrl.u32 %v833, 7
        %v835 = vsub.s32 0, %v834
        %v836 = vrot.slane %v819, %v835
        %v837 = vlaneseq
        %v838 = vshrl.u32 %v837, 7
        %v839 = vsub.s32 0, %v838
        %v840 = vrot.slane %v820, %v839
        %v845 = vunpack.c.l.b16 %v821
        %v846 = vunpack.c.h.b16 %v821
        %v847 = vunpack.c.l.b16 %v822
        %v848 = vunpack.c.h.b16 %v822
        %v849 = vunpack.c.l.b16 %v823
        %v850 = vunpack.c.h.b16 %v823
        %v851 = vunpack.c.l.b16 %v824
        %v852 = vunpack.c.h.b16 %v824
        %v853 = vpack.c.b16 %v849, %v845
        %v854 = vpack.c.b16 %v850, %v846
        %v855 = vpack.c.b16 %v851, %v847
        %v856 = vpack.c.b16 %v852, %v848
        %vm861 = vcmask 130048
        %v863 = vsel %vm861, %v816, 0
        %865 = vmatprep.subr.bf16.mxu0 %v854
        %866 = vmatpush1.bf16.msra.mxu0 %v853
        %867 = vmatprep.subr.bf16.mxu0 0
        %868 = vmatpush1.bf16.msra.mxu0 0
        %869 = vmatprep.subr.bf16.mxu0 0
        %870 = vmatpush1.bf16.msra.mxu0 0
        %871 = vmatprep.subr.bf16.mxu0 0
        %872 = vmatpush1.bf16.msra.mxu0 0
        %873 = vmatprep.subr.bf16.mxu0 0
        %874 = vmatpush1.bf16.msra.mxu0 0
        %875 = vmatprep.subr.bf16.mxu0 0
        %876 = vmatpush1.bf16.msra.mxu0 0
        %877 = vmatprep.subr.bf16.mxu0 0
        %878 = vmatpush1.bf16.msra.mxu0 0
        %879 = vmatprep.subr.bf16.mxu0 0
        %880 = vmatpush1.bf16.msra.mxu0 0
        %881 = vmatprep.subr.bf16.mxu0 0
        %882 = vmatpush1.bf16.msra.mxu0 0
        %883 = vmatprep.subr.bf16.mxu0 0
        %884 = vmatpush1.bf16.msra.mxu0 0
        %885 = vmatprep.subr.bf16.mxu0 0
        %886 = vmatpush1.bf16.msra.mxu0 0
        %887 = vmatprep.subr.bf16.mxu0 0
        %888 = vmatpush1.bf16.msra.mxu0 0
        %889 = vmatprep.subr.bf16.mxu0 0
        %890 = vmatpush1.bf16.msra.mxu0 0
        %891 = vmatprep.subr.bf16.mxu0 0
        %892 = vmatpush1.bf16.msra.mxu0 0
        %893 = vmatprep.subr.bf16.mxu0 0
        %894 = vmatpush1.bf16.msra.mxu0 0
        %895 = vmatprep.subr.bf16.mxu0 0
        %896 = vmatpush1.bf16.msra.mxu0 0
        %897 = vmatprep.mubr.bf16.mxu0 0
        %898 = vmatmul.mubr.bf16.gmra.mrb[0].mxu0 %v863
        %v899 = vpop.f32.mrb[0].mxu0
        %v900 = vadd.f32 %v828, %v899
        %v901 = vpop.f32.mrb[0].mxu0
        %v902 = vadd.f32 %v832, %v901
        %v903 = vpop.f32.mrb[0].mxu0
        %v904 = vpop.f32.mrb[0].mxu0
        %905 = vdwg.mxu0
        %906 = vmatprep.subr.bf16.mxu0 %v856
        %907 = vmatpush1.bf16.msra.mxu0 %v855
        %908 = vmatprep.subr.bf16.mxu0 0
        %909 = vmatpush1.bf16.msra.mxu0 0
        %910 = vmatprep.subr.bf16.mxu0 0
        %911 = vmatpush1.bf16.msra.mxu0 0
        %912 = vmatprep.subr.bf16.mxu0 0
        %913 = vmatpush1.bf16.msra.mxu0 0
        %914 = vmatprep.subr.bf16.mxu0 0
        %915 = vmatpush1.bf16.msra.mxu0 0
        %916 = vmatprep.subr.bf16.mxu0 0
        %917 = vmatpush1.bf16.msra.mxu0 0
        %918 = vmatprep.subr.bf16.mxu0 0
        %919 = vmatpush1.bf16.msra.mxu0 0
        %920 = vmatprep.subr.bf16.mxu0 0
        %921 = vmatpush1.bf16.msra.mxu0 0
        %922 = vmatprep.subr.bf16.mxu0 0
        %923 = vmatpush1.bf16.msra.mxu0 0
        %924 = vmatprep.subr.bf16.mxu0 0
        %925 = vmatpush1.bf16.msra.mxu0 0
        %926 = vmatprep.subr.bf16.mxu0 0
        %927 = vmatpush1.bf16.msra.mxu0 0
        %928 = vmatprep.subr.bf16.mxu0 0
        %929 = vmatpush1.bf16.msra.mxu0 0
        %930 = vmatprep.subr.bf16.mxu0 0
        %931 = vmatpush1.bf16.msra.mxu0 0
        %932 = vmatprep.subr.bf16.mxu0 0
        %933 = vmatpush1.bf16.msra.mxu0 0
        %934 = vmatprep.subr.bf16.mxu0 0
        %935 = vmatpush1.bf16.msra.mxu0 0
        %936 = vmatprep.subr.bf16.mxu0 0
        %937 = vmatpush1.bf16.msra.mxu0 0
        %938 = vmatprep.mubr.bf16.mxu0 0
        %939 = vmatmul.mubr.bf16.gmra.mrb[0].mxu0 %v863
        %v940 = vpop.f32.mrb[0].mxu0
        %v941 = vadd.f32 %v836, %v940
        %v942 = vpop.f32.mrb[0].mxu0
        %v943 = vadd.f32 %v840, %v942
        %v944 = vpop.f32.mrb[0].mxu0
        %v945 = vpop.f32.mrb[0].mxu0
        %946 = vdwg.mxu0
        %v947 = vmax.f32 %v900, 0.0
        %v948 = vmax.f32 %v902, 0.0
        %v949 = vmax.f32 %v941, 0.0
        %v950 = vmax.f32 %v943, 0.0
        %v951 = vpack.c.bf16 %v947, %v947
        %v952 = vpack.c.bf16 %v948, %v948
        %v953 = vpack.c.bf16 %v949, %v949
        %v954 = vpack.c.bf16 %v950, %v950
        %v955 = vld [vmem:[%s639] sm:$0xff]
        %v956 = vld [vmem:[%s639 + $0x8] sm:$0xff]
        %v957 = vld [vmem:[%s639 + $0x10] sm:$0xff]
        %v958 = vld [vmem:[%s639 + $0x18] sm:$0xff]
        %v959 = vld [vmem:[%s639 + $0x20] sm:$0xff]
        %v960 = vld [vmem:[%s639 + $0x28] sm:$0xff]
        %v961 = vld [vmem:[%s639 + $0x30] sm:$0xff]
        %v962 = vld [vmem:[%s639 + $0x38] sm:$0xff]
        %v963 = vld [vmem:[%s639 + $0x40] sm:$0xff]
        %v964 = vld [vmem:[%s639 + $0x48] sm:$0xff]
        %v965 = vld [vmem:[%s639 + $0x50] sm:$0xff]
        %v966 = vld [vmem:[%s639 + $0x58] sm:$0xff]
        %v967 = vld [vmem:[%s639 + $0x60] sm:$0xff]
        %v968 = vld [vmem:[%s639 + $0x68] sm:$0xff]
        %v969 = vld [vmem:[%s639 + $0x70] sm:$0xff]
        %v970 = vld [vmem:[%s639 + $0x78] sm:$0xff]
        %v971 = vld [vmem:[%s639 + $0x80] sm:$0xff]
        %v972 = vld [vmem:[%s639 + $0x88] sm:$0xff]
        %v973 = vld [vmem:[%s639 + $0x90] sm:$0xff]
        %v974 = vld [vmem:[%s639 + $0x98] sm:$0xff]
        %v975 = vld [vmem:[%s639 + $0xa0] sm:$0xff]
        %v976 = vld [vmem:[%s639 + $0xa8] sm:$0xff]
        %v977 = vld [vmem:[%s639 + $0xb0] sm:$0xff]
        %v978 = vld [vmem:[%s639 + $0xb8] sm:$0xff]
        %v979 = vld [vmem:[%s639 + $0xc0] sm:$0xff]
        %v980 = vld [vmem:[%s639 + $0xc8] sm:$0xff]
        %v981 = vld [vmem:[%s639 + $0xd0] sm:$0xff]
        %v982 = vld [vmem:[%s639 + $0xd8] sm:$0xff]
        %v983 = vld [vmem:[%s639 + $0xe0] sm:$0xff]
        %v984 = vld [vmem:[%s639 + $0xe8] sm:$0xff]
        %v985 = vld [vmem:[%s639 + $0xf0] sm:$0xff]
        %v986 = vld [vmem:[%s639 + $0xf8] sm:$0xff]
        %v987 = vld [vmem:[%s639 + $0x100] sm:$0xff]
        %v988 = vld [vmem:[%s639 + $0x108] sm:$0xff]
        %v989 = vld [vmem:[%s639 + $0x110] sm:$0xff]
        %v990 = vld [vmem:[%s639 + $0x118] sm:$0xff]
        %v991 = vld [vmem:[%s639 + $0x120] sm:$0xff]
        %v992 = vld [vmem:[%s639 + $0x128] sm:$0xff]
        %v993 = vld [vmem:[%s639 + $0x130] sm:$0xff]
        %v994 = vld [vmem:[%s639 + $0x138] sm:$0xff]
        %v995 = vld [vmem:[%s639 + $0x140] sm:$0xff]
        %v996 = vld [vmem:[%s639 + $0x148] sm:$0xff]
        %v997 = vld [vmem:[%s639 + $0x150] sm:$0xff]
        %v998 = vld [vmem:[%s639 + $0x158] sm:$0xff]
        %v999 = vld [vmem:[%s639 + $0x160] sm:$0xff]
        %v1000 = vld [vmem:[%s639 + $0x168] sm:$0xff]
        %v1001 = vld [vmem:[%s639 + $0x170] sm:$0xff]
        %v1002 = vld [vmem:[%s639 + $0x178] sm:$0xff]
        %v1003 = vld [vmem:[%s639 + $0x180] sm:$0xff]
        %v1004 = vld [vmem:[%s639 + $0x188] sm:$0xff]
        %v1005 = vld [vmem:[%s639 + $0x190] sm:$0xff]
        %v1006 = vld [vmem:[%s639 + $0x198] sm:$0xff]
        %v1007 = vld [vmem:[%s639 + $0x1a0] sm:$0xff]
        %v1008 = vld [vmem:[%s639 + $0x1a8] sm:$0xff]
        %v1009 = vld [vmem:[%s639 + $0x1b0] sm:$0xff]
        %v1010 = vld [vmem:[%s639 + $0x1b8] sm:$0xff]
        %v1011 = vld [vmem:[%s639 + $0x1c0] sm:$0xff]
        %v1012 = vld [vmem:[%s639 + $0x1c8] sm:$0xff]
        %v1013 = vld [vmem:[%s639 + $0x1d0] sm:$0xff]
        %v1014 = vld [vmem:[%s639 + $0x1d8] sm:$0xff]
        %v1015 = vld [vmem:[%s639 + $0x1e0] sm:$0xff]
        %v1016 = vld [vmem:[%s639 + $0x1e8] sm:$0xff]
        %v1017 = vld [vmem:[%s639 + $0x1f0] sm:$0xff]
        %v1018 = vld [vmem:[%s639 + $0x1f8] sm:$0xff]
        %v1019 = vld [vmem:[%s639 + $0x200] sm:$0xff]
        %v1020 = vld [vmem:[%s639 + $0x208] sm:$0xff]
        %v1021 = vld [vmem:[%s639 + $0x210] sm:$0xff]
        %v1022 = vld [vmem:[%s639 + $0x218] sm:$0xff]
        %v1023 = vld [vmem:[%s639 + $0x220] sm:$0xff]
        %v1024 = vld [vmem:[%s639 + $0x228] sm:$0xff]
        %v1025 = vld [vmem:[%s639 + $0x230] sm:$0xff]
        %v1026 = vld [vmem:[%s639 + $0x238] sm:$0xff]
        %v1027 = vld [vmem:[%s639 + $0x240] sm:$0xff]
        %v1028 = vld [vmem:[%s639 + $0x248] sm:$0xff]
        %v1029 = vld [vmem:[%s639 + $0x250] sm:$0xff]
        %v1030 = vld [vmem:[%s639 + $0x258] sm:$0xff]
        %v1031 = vld [vmem:[%s639 + $0x260] sm:$0xff]
        %v1032 = vld [vmem:[%s639 + $0x268] sm:$0xff]
        %v1033 = vld [vmem:[%s639 + $0x270] sm:$0xff]
        %v1034 = vld [vmem:[%s639 + $0x278] sm:$0xff]
        %v1035 = vld [vmem:[%s639 + $0x280] sm:$0xff]
        %v1036 = vld [vmem:[%s639 + $0x288] sm:$0xff]
        %v1037 = vld [vmem:[%s639 + $0x290] sm:$0xff]
        %v1038 = vld [vmem:[%s639 + $0x298] sm:$0xff]
        %v1039 = vld [vmem:[%s639 + $0x2a0] sm:$0xff]
        %v1040 = vld [vmem:[%s639 + $0x2a8] sm:$0xff]
        %v1041 = vld [vmem:[%s639 + $0x2b0] sm:$0xff]
        %v1042 = vld [vmem:[%s639 + $0x2b8] sm:$0xff]
        %v1043 = vld [vmem:[%s639 + $0x2c0] sm:$0xff]
        %v1044 = vld [vmem:[%s639 + $0x2c8] sm:$0xff]
        %v1045 = vld [vmem:[%s639 + $0x2d0] sm:$0xff]
        %v1046 = vld [vmem:[%s639 + $0x2d8] sm:$0xff]
        %v1047 = vld [vmem:[%s639 + $0x2e0] sm:$0xff]
        %v1048 = vld [vmem:[%s639 + $0x2e8] sm:$0xff]
        %v1049 = vld [vmem:[%s639 + $0x2f0] sm:$0xff]
        %v1050 = vld [vmem:[%s639 + $0x2f8] sm:$0xff]
        %v1051 = vld [vmem:[%s639 + $0x300] sm:$0xff]
        %v1052 = vld [vmem:[%s639 + $0x308] sm:$0xff]
        %v1053 = vld [vmem:[%s639 + $0x310] sm:$0xff]
        %v1054 = vld [vmem:[%s639 + $0x318] sm:$0xff]
        %v1055 = vld [vmem:[%s639 + $0x320] sm:$0xff]
        %v1056 = vld [vmem:[%s639 + $0x328] sm:$0xff]
        %v1057 = vld [vmem:[%s639 + $0x330] sm:$0xff]
        %v1058 = vld [vmem:[%s639 + $0x338] sm:$0xff]
        %v1059 = vld [vmem:[%s639 + $0x340] sm:$0xff]
        %v1060 = vld [vmem:[%s639 + $0x348] sm:$0xff]
        %v1061 = vld [vmem:[%s639 + $0x350] sm:$0xff]
        %v1062 = vld [vmem:[%s639 + $0x358] sm:$0xff]
        %v1063 = vld [vmem:[%s639 + $0x360] sm:$0xff]
        %v1064 = vld [vmem:[%s639 + $0x368] sm:$0xff]
        %v1065 = vld [vmem:[%s639 + $0x370] sm:$0xff]
        %v1066 = vld [vmem:[%s639 + $0x378] sm:$0xff]
        %v1067 = vld [vmem:[%s639 + $0x380] sm:$0xff]
        %v1068 = vld [vmem:[%s639 + $0x388] sm:$0xff]
        %v1069 = vld [vmem:[%s639 + $0x390] sm:$0xff]
        %v1070 = vld [vmem:[%s639 + $0x398] sm:$0xff]
        %v1071 = vld [vmem:[%s639 + $0x3a0] sm:$0xff]
        %v1072 = vld [vmem:[%s639 + $0x3a8] sm:$0xff]
        %v1073 = vld [vmem:[%s639 + $0x3b0] sm:$0xff]
        %v1074 = vld [vmem:[%s639 + $0x3b8] sm:$0xff]
        %v1075 = vld [vmem:[%s639 + $0x3c0] sm:$0xff]
        %v1076 = vld [vmem:[%s639 + $0x3c8] sm:$0xff]
        %v1077 = vld [vmem:[%s639 + $0x3d0] sm:$0xff]
        %v1078 = vld [vmem:[%s639 + $0x3d8] sm:$0xff]
        %v1079 = vld [vmem:[%s639 + $0x3e0] sm:$0xff]
        %v1080 = vld [vmem:[%s639 + $0x3e8] sm:$0xff]
        %v1081 = vld [vmem:[%s639 + $0x3f0] sm:$0xff]
        %v1082 = vld [vmem:[%s639 + $0x3f8] sm:$0xff]
        %v1083 = vlaneseq
        %v1084 = vshrl.u32 %v1083, 7
        %v1085 = vsub.s32 1, %v1084
        %v1086 = vrot.slane %v817, %v1085
        %v1087 = vlaneseq
        %v1088 = vshrl.u32 %v1087, 7
        %v1089 = vsub.s32 1, %v1088
        %v1090 = vrot.slane %v818, %v1089
        %v1091 = vlaneseq
        %v1092 = vshrl.u32 %v1091, 7
        %v1093 = vsub.s32 1, %v1092
        %v1094 = vrot.slane %v819, %v1093
        %v1095 = vlaneseq
        %v1096 = vshrl.u32 %v1095, 7
        %v1097 = vsub.s32 1, %v1096
        %v1098 = vrot.slane %v820, %v1097
        %v1227 = vunpack.c.l.b16 %v955
        %v1228 = vunpack.c.h.b16 %v955
        %v1229 = vunpack.c.l.b16 %v956
        %v1230 = vunpack.c.h.b16 %v956
        %v1231 = vunpack.c.l.b16 %v957
        %v1232 = vunpack.c.h.b16 %v957
        %v1233 = vunpack.c.l.b16 %v958
        %v1234 = vunpack.c.h.b16 %v958
        %v1235 = vunpack.c.l.b16 %v959
        %v1236 = vunpack.c.h.b16 %v959
        %v1237 = vunpack.c.l.b16 %v960
        %v1238 = vunpack.c.h.b16 %v960
        %v1239 = vunpack.c.l.b16 %v961
        %v1240 = vunpack.c.h.b16 %v961
        %v1241 = vunpack.c.l.b16 %v962
        %v1242 = vunpack.c.h.b16 %v962
        %v1243 = vunpack.c.l.b16 %v963
        %v1244 = vunpack.c.h.b16 %v963
        %v1245 = vunpack.c.l.b16 %v964
        %v1246 = vunpack.c.h.b16 %v964
        %v1247 = vunpack.c.l.b16 %v965
        %v1248 = vunpack.c.h.b16 %v965
        %v1249 = vunpack.c.l.b16 %v966
        %v1250 = vunpack.c.h.b16 %v966
        %v1251 = vunpack.c.l.b16 %v967
        %v1252 = vunpack.c.h.b16 %v967
        %v1253 = vunpack.c.l.b16 %v968
        %v1254 = vunpack.c.h.b16 %v968
        %v1255 = vunpack.c.l.b16 %v969
        %v1256 = vunpack.c.h.b16 %v969
        %v1257 = vunpack.c.l.b16 %v970
        %v1258 = vunpack.c.h.b16 %v970
        %v1259 = vunpack.c.l.b16 %v971
        %v1260 = vunpack.c.h.b16 %v971
        %v1261 = vunpack.c.l.b16 %v972
        %v1262 = vunpack.c.h.b16 %v972
        %v1263 = vunpack.c.l.b16 %v973
        %v1264 = vunpack.c.h.b16 %v973
        %v1265 = vunpack.c.l.b16 %v974
        %v1266 = vunpack.c.h.b16 %v974
        %v1267 = vunpack.c.l.b16 %v975
        %v1268 = vunpack.c.h.b16 %v975
        %v1269 = vunpack.c.l.b16 %v976
        %v1270 = vunpack.c.h.b16 %v976
        %v1271 = vunpack.c.l.b16 %v977
        %v1272 = vunpack.c.h.b16 %v977
        %v1273 = vunpack.c.l.b16 %v978
        %v1274 = vunpack.c.h.b16 %v978
        %v1275 = vunpack.c.l.b16 %v979
        %v1276 = vunpack.c.h.b16 %v979
        %v1277 = vunpack.c.l.b16 %v980
        %v1278 = vunpack.c.h.b16 %v980
        %v1279 = vunpack.c.l.b16 %v981
        %v1280 = vunpack.c.h.b16 %v981
        %v1281 = vunpack.c.l.b16 %v982
        %v1282 = vunpack.c.h.b16 %v982
        %v1283 = vunpack.c.l.b16 %v983
        %v1284 = vunpack.c.h.b16 %v983
        %v1285 = vunpack.c.l.b16 %v984
        %v1286 = vunpack.c.h.b16 %v984
        %v1287 = vunpack.c.l.b16 %v985
        %v1288 = vunpack.c.h.b16 %v985
        %v1289 = vunpack.c.l.b16 %v986
        %v1290 = vunpack.c.h.b16 %v986
        %v1291 = vunpack.c.l.b16 %v987
        %v1292 = vunpack.c.h.b16 %v987
        %v1293 = vunpack.c.l.b16 %v988
        %v1294 = vunpack.c.h.b16 %v988
        %v1295 = vunpack.c.l.b16 %v989
        %v1296 = vunpack.c.h.b16 %v989
        %v1297 = vunpack.c.l.b16 %v990
        %v1298 = vunpack.c.h.b16 %v990
        %v1299 = vunpack.c.l.b16 %v991
        %v1300 = vunpack.c.h.b16 %v991
        %v1301 = vunpack.c.l.b16 %v992
        %v1302 = vunpack.c.h.b16 %v992
        %v1303 = vunpack.c.l.b16 %v993
        %v1304 = vunpack.c.h.b16 %v993
        %v1305 = vunpack.c.l.b16 %v994
        %v1306 = vunpack.c.h.b16 %v994
        %v1307 = vunpack.c.l.b16 %v995
        %v1308 = vunpack.c.h.b16 %v995
        %v1309 = vunpack.c.l.b16 %v996
        %v1310 = vunpack.c.h.b16 %v996
        %v1311 = vunpack.c.l.b16 %v997
        %v1312 = vunpack.c.h.b16 %v997
        %v1313 = vunpack.c.l.b16 %v998
        %v1314 = vunpack.c.h.b16 %v998
        %v1315 = vunpack.c.l.b16 %v999
        %v1316 = vunpack.c.h.b16 %v999
        %v1317 = vunpack.c.l.b16 %v1000
        %v1318 = vunpack.c.h.b16 %v1000
        %v1319 = vunpack.c.l.b16 %v1001
        %v1320 = vunpack.c.h.b16 %v1001
        %v1321 = vunpack.c.l.b16 %v1002
        %v1322 = vunpack.c.h.b16 %v1002
        %v1323 = vunpack.c.l.b16 %v1003
        %v1324 = vunpack.c.h.b16 %v1003
        %v1325 = vunpack.c.l.b16 %v1004
        %v1326 = vunpack.c.h.b16 %v1004
        %v1327 = vunpack.c.l.b16 %v1005
        %v1328 = vunpack.c.h.b16 %v1005
        %v1329 = vunpack.c.l.b16 %v1006
        %v1330 = vunpack.c.h.b16 %v1006
        %v1331 = vunpack.c.l.b16 %v1007
        %v1332 = vunpack.c.h.b16 %v1007
        %v1333 = vunpack.c.l.b16 %v1008
        %v1334 = vunpack.c.h.b16 %v1008
        %v1335 = vunpack.c.l.b16 %v1009
        %v1336 = vunpack.c.h.b16 %v1009
        %v1337 = vunpack.c.l.b16 %v1010
        %v1338 = vunpack.c.h.b16 %v1010
        %v1339 = vunpack.c.l.b16 %v1011
        %v1340 = vunpack.c.h.b16 %v1011
        %v1341 = vunpack.c.l.b16 %v1012
        %v1342 = vunpack.c.h.b16 %v1012
        %v1343 = vunpack.c.l.b16 %v1013
        %v1344 = vunpack.c.h.b16 %v1013
        %v1345 = vunpack.c.l.b16 %v1014
        %v1346 = vunpack.c.h.b16 %v1014
        %v1347 = vunpack.c.l.b16 %v1015
        %v1348 = vunpack.c.h.b16 %v1015
        %v1349 = vunpack.c.l.b16 %v1016
        %v1350 = vunpack.c.h.b16 %v1016
        %v1351 = vunpack.c.l.b16 %v1017
        %v1352 = vunpack.c.h.b16 %v1017
        %v1353 = vunpack.c.l.b16 %v1018
        %v1354 = vunpack.c.h.b16 %v1018
        %v1355 = vunpack.c.l.b16 %v1019
        %v1356 = vunpack.c.h.b16 %v1019
        %v1357 = vunpack.c.l.b16 %v1020
        %v1358 = vunpack.c.h.b16 %v1020
        %v1359 = vunpack.c.l.b16 %v1021
        %v1360 = vunpack.c.h.b16 %v1021
        %v1361 = vunpack.c.l.b16 %v1022
        %v1362 = vunpack.c.h.b16 %v1022
        %v1363 = vunpack.c.l.b16 %v1023
        %v1364 = vunpack.c.h.b16 %v1023
        %v1365 = vunpack.c.l.b16 %v1024
        %v1366 = vunpack.c.h.b16 %v1024
        %v1367 = vunpack.c.l.b16 %v1025
        %v1368 = vunpack.c.h.b16 %v1025
        %v1369 = vunpack.c.l.b16 %v1026
        %v1370 = vunpack.c.h.b16 %v1026
        %v1371 = vunpack.c.l.b16 %v1027
        %v1372 = vunpack.c.h.b16 %v1027
        %v1373 = vunpack.c.l.b16 %v1028
        %v1374 = vunpack.c.h.b16 %v1028
        %v1375 = vunpack.c.l.b16 %v1029
        %v1376 = vunpack.c.h.b16 %v1029
        %v1377 = vunpack.c.l.b16 %v1030
        %v1378 = vunpack.c.h.b16 %v1030
        %v1379 = vunpack.c.l.b16 %v1031
        %v1380 = vunpack.c.h.b16 %v1031
        %v1381 = vunpack.c.l.b16 %v1032
        %v1382 = vunpack.c.h.b16 %v1032
        %v1383 = vunpack.c.l.b16 %v1033
        %v1384 = vunpack.c.h.b16 %v1033
        %v1385 = vunpack.c.l.b16 %v1034
        %v1386 = vunpack.c.h.b16 %v1034
        %v1387 = vunpack.c.l.b16 %v1035
        %v1388 = vunpack.c.h.b16 %v1035
        %v1389 = vunpack.c.l.b16 %v1036
        %v1390 = vunpack.c.h.b16 %v1036
        %v1391 = vunpack.c.l.b16 %v1037
        %v1392 = vunpack.c.h.b16 %v1037
        %v1393 = vunpack.c.l.b16 %v1038
        %v1394 = vunpack.c.h.b16 %v1038
        %v1395 = vunpack.c.l.b16 %v1039
        %v1396 = vunpack.c.h.b16 %v1039
        %v1397 = vunpack.c.l.b16 %v1040
        %v1398 = vunpack.c.h.b16 %v1040
        %v1399 = vunpack.c.l.b16 %v1041
        %v1400 = vunpack.c.h.b16 %v1041
        %v1401 = vunpack.c.l.b16 %v1042
        %v1402 = vunpack.c.h.b16 %v1042
        %v1403 = vunpack.c.l.b16 %v1043
        %v1404 = vunpack.c.h.b16 %v1043
        %v1405 = vunpack.c.l.b16 %v1044
        %v1406 = vunpack.c.h.b16 %v1044
        %v1407 = vunpack.c.l.b16 %v1045
        %v1408 = vunpack.c.h.b16 %v1045
        %v1409 = vunpack.c.l.b16 %v1046
        %v1410 = vunpack.c.h.b16 %v1046
        %v1411 = vunpack.c.l.b16 %v1047
        %v1412 = vunpack.c.h.b16 %v1047
        %v1413 = vunpack.c.l.b16 %v1048
        %v1414 = vunpack.c.h.b16 %v1048
        %v1415 = vunpack.c.l.b16 %v1049
        %v1416 = vunpack.c.h.b16 %v1049
        %v1417 = vunpack.c.l.b16 %v1050
        %v1418 = vunpack.c.h.b16 %v1050
        %v1419 = vunpack.c.l.b16 %v1051
        %v1420 = vunpack.c.h.b16 %v1051
        %v1421 = vunpack.c.l.b16 %v1052
        %v1422 = vunpack.c.h.b16 %v1052
        %v1423 = vunpack.c.l.b16 %v1053
        %v1424 = vunpack.c.h.b16 %v1053
        %v1425 = vunpack.c.l.b16 %v1054
        %v1426 = vunpack.c.h.b16 %v1054
        %v1427 = vunpack.c.l.b16 %v1055
        %v1428 = vunpack.c.h.b16 %v1055
        %v1429 = vunpack.c.l.b16 %v1056
        %v1430 = vunpack.c.h.b16 %v1056
        %v1431 = vunpack.c.l.b16 %v1057
        %v1432 = vunpack.c.h.b16 %v1057
        %v1433 = vunpack.c.l.b16 %v1058
        %v1434 = vunpack.c.h.b16 %v1058
        %v1435 = vunpack.c.l.b16 %v1059
        %v1436 = vunpack.c.h.b16 %v1059
        %v1437 = vunpack.c.l.b16 %v1060
        %v1438 = vunpack.c.h.b16 %v1060
        %v1439 = vunpack.c.l.b16 %v1061
        %v1440 = vunpack.c.h.b16 %v1061
        %v1441 = vunpack.c.l.b16 %v1062
        %v1442 = vunpack.c.h.b16 %v1062
        %v1443 = vunpack.c.l.b16 %v1063
        %v1444 = vunpack.c.h.b16 %v1063
        %v1445 = vunpack.c.l.b16 %v1064
        %v1446 = vunpack.c.h.b16 %v1064
        %v1447 = vunpack.c.l.b16 %v1065
        %v1448 = vunpack.c.h.b16 %v1065
        %v1449 = vunpack.c.l.b16 %v1066
        %v1450 = vunpack.c.h.b16 %v1066
        %v1451 = vunpack.c.l.b16 %v1067
        %v1452 = vunpack.c.h.b16 %v1067
        %v1453 = vunpack.c.l.b16 %v1068
        %v1454 = vunpack.c.h.b16 %v1068
        %v1455 = vunpack.c.l.b16 %v1069
        %v1456 = vunpack.c.h.b16 %v1069
        %v1457 = vunpack.c.l.b16 %v1070
        %v1458 = vunpack.c.h.b16 %v1070
        %v1459 = vunpack.c.l.b16 %v1071
        %v1460 = vunpack.c.h.b16 %v1071
        %v1461 = vunpack.c.l.b16 %v1072
        %v1462 = vunpack.c.h.b16 %v1072
        %v1463 = vunpack.c.l.b16 %v1073
        %v1464 = vunpack.c.h.b16 %v1073
        %v1465 = vunpack.c.l.b16 %v1074
        %v1466 = vunpack.c.h.b16 %v1074
        %v1467 = vunpack.c.l.b16 %v1075
        %v1468 = vunpack.c.h.b16 %v1075
        %v1469 = vunpack.c.l.b16 %v1076
        %v1470 = vunpack.c.h.b16 %v1076
        %v1471 = vunpack.c.l.b16 %v1077
        %v1472 = vunpack.c.h.b16 %v1077
        %v1473 = vunpack.c.l.b16 %v1078
        %v1474 = vunpack.c.h.b16 %v1078
        %v1475 = vunpack.c.l.b16 %v1079
        %v1476 = vunpack.c.h.b16 %v1079
        %v1477 = vunpack.c.l.b16 %v1080
        %v1478 = vunpack.c.h.b16 %v1080
        %v1479 = vunpack.c.l.b16 %v1081
        %v1480 = vunpack.c.h.b16 %v1081
        %v1481 = vunpack.c.l.b16 %v1082
        %v1482 = vunpack.c.h.b16 %v1082
        %v1483 = vpack.c.b16 %v1231, %v1227
        %v1484 = vpack.c.b16 %v1232, %v1228
        %v1485 = vpack.c.b16 %v1233, %v1229
        %v1486 = vpack.c.b16 %v1234, %v1230
        %v1487 = vpack.c.b16 %v1239, %v1235
        %v1488 = vpack.c.b16 %v1240, %v1236
        %v1489 = vpack.c.b16 %v1241, %v1237
        %v1490 = vpack.c.b16 %v1242, %v1238
        %v1491 = vpack.c.b16 %v1247, %v1243
        %v1492 = vpack.c.b16 %v1248, %v1244
        %v1493 = vpack.c.b16 %v1249, %v1245
        %v1494 = vpack.c.b16 %v1250, %v1246
        %v1495 = vpack.c.b16 %v1255, %v1251
        %v1496 = vpack.c.b16 %v1256, %v1252
        %v1497 = vpack.c.b16 %v1257, %v1253
        %v1498 = vpack.c.b16 %v1258, %v1254
        %v1499 = vpack.c.b16 %v1263, %v1259
        %v1500 = vpack.c.b16 %v1264, %v1260
        %v1501 = vpack.c.b16 %v1265, %v1261
        %v1502 = vpack.c.b16 %v1266, %v1262
        %v1503 = vpack.c.b16 %v1271, %v1267
        %v1504 = vpack.c.b16 %v1272, %v1268
        %v1505 = vpack.c.b16 %v1273, %v1269
        %v1506 = vpack.c.b16 %v1274, %v1270
        %v1507 = vpack.c.b16 %v1279, %v1275
        %v1508 = vpack.c.b16 %v1280, %v1276
        %v1509 = vpack.c.b16 %v1281, %v1277
        %v1510 = vpack.c.b16 %v1282, %v1278
        %v1511 = vpack.c.b16 %v1287, %v1283
        %v1512 = vpack.c.b16 %v1288, %v1284
        %v1513 = vpack.c.b16 %v1289, %v1285
        %v1514 = vpack.c.b16 %v1290, %v1286
        %v1515 = vpack.c.b16 %v1295, %v1291
        %v1516 = vpack.c.b16 %v1296, %v1292
        %v1517 = vpack.c.b16 %v1297, %v1293
        %v1518 = vpack.c.b16 %v1298, %v1294
        %v1519 = vpack.c.b16 %v1303, %v1299
        %v1520 = vpack.c.b16 %v1304, %v1300
        %v1521 = vpack.c.b16 %v1305, %v1301
        %v1522 = vpack.c.b16 %v1306, %v1302
        %v1523 = vpack.c.b16 %v1311, %v1307
        %v1524 = vpack.c.b16 %v1312, %v1308
        %v1525 = vpack.c.b16 %v1313, %v1309
        %v1526 = vpack.c.b16 %v1314, %v1310
        %v1527 = vpack.c.b16 %v1319, %v1315
        %v1528 = vpack.c.b16 %v1320, %v1316
        %v1529 = vpack.c.b16 %v1321, %v1317
        %v1530 = vpack.c.b16 %v1322, %v1318
        %v1531 = vpack.c.b16 %v1327, %v1323
        %v1532 = vpack.c.b16 %v1328, %v1324
        %v1533 = vpack.c.b16 %v1329, %v1325
        %v1534 = vpack.c.b16 %v1330, %v1326
        %v1535 = vpack.c.b16 %v1335, %v1331
        %v1536 = vpack.c.b16 %v1336, %v1332
        %v1537 = vpack.c.b16 %v1337, %v1333
        %v1538 = vpack.c.b16 %v1338, %v1334
        %v1539 = vpack.c.b16 %v1343, %v1339
        %v1540 = vpack.c.b16 %v1344, %v1340
        %v1541 = vpack.c.b16 %v1345, %v1341
        %v1542 = vpack.c.b16 %v1346, %v1342
        %v1543 = vpack.c.b16 %v1351, %v1347
        %v1544 = vpack.c.b16 %v1352, %v1348
        %v1545 = vpack.c.b16 %v1353, %v1349
        %v1546 = vpack.c.b16 %v1354, %v1350
        %v1547 = vpack.c.b16 %v1359, %v1355
        %v1548 = vpack.c.b16 %v1360, %v1356
        %v1549 = vpack.c.b16 %v1361, %v1357
        %v1550 = vpack.c.b16 %v1362, %v1358
        %v1551 = vpack.c.b16 %v1367, %v1363
        %v1552 = vpack.c.b16 %v1368, %v1364
        %v1553 = vpack.c.b16 %v1369, %v1365
        %v1554 = vpack.c.b16 %v1370, %v1366
        %v1555 = vpack.c.b16 %v1375, %v1371
        %v1556 = vpack.c.b16 %v1376, %v1372
        %v1557 = vpack.c.b16 %v1377, %v1373
        %v1558 = vpack.c.b16 %v1378, %v1374
        %v1559 = vpack.c.b16 %v1383, %v1379
        %v1560 = vpack.c.b16 %v1384, %v1380
        %v1561 = vpack.c.b16 %v1385, %v1381
        %v1562 = vpack.c.b16 %v1386, %v1382
        %v1563 = vpack.c.b16 %v1391, %v1387
        %v1564 = vpack.c.b16 %v1392, %v1388
        %v1565 = vpack.c.b16 %v1393, %v1389
        %v1566 = vpack.c.b16 %v1394, %v1390
        %v1567 = vpack.c.b16 %v1399, %v1395
        %v1568 = vpack.c.b16 %v1400, %v1396
        %v1569 = vpack.c.b16 %v1401, %v1397
        %v1570 = vpack.c.b16 %v1402, %v1398
        %v1571 = vpack.c.b16 %v1407, %v1403
        %v1572 = vpack.c.b16 %v1408, %v1404
        %v1573 = vpack.c.b16 %v1409, %v1405
        %v1574 = vpack.c.b16 %v1410, %v1406
        %v1575 = vpack.c.b16 %v1415, %v1411
        %v1576 = vpack.c.b16 %v1416, %v1412
        %v1577 = vpack.c.b16 %v1417, %v1413
        %v1578 = vpack.c.b16 %v1418, %v1414
        %v1579 = vpack.c.b16 %v1423, %v1419
        %v1580 = vpack.c.b16 %v1424, %v1420
        %v1581 = vpack.c.b16 %v1425, %v1421
        %v1582 = vpack.c.b16 %v1426, %v1422
        %v1583 = vpack.c.b16 %v1431, %v1427
        %v1584 = vpack.c.b16 %v1432, %v1428
        %v1585 = vpack.c.b16 %v1433, %v1429
        %v1586 = vpack.c.b16 %v1434, %v1430
        %v1587 = vpack.c.b16 %v1439, %v1435
        %v1588 = vpack.c.b16 %v1440, %v1436
        %v1589 = vpack.c.b16 %v1441, %v1437
        %v1590 = vpack.c.b16 %v1442, %v1438
        %v1591 = vpack.c.b16 %v1447, %v1443
        %v1592 = vpack.c.b16 %v1448, %v1444
        %v1593 = vpack.c.b16 %v1449, %v1445
        %v1594 = vpack.c.b16 %v1450, %v1446
        %v1595 = vpack.c.b16 %v1455, %v1451
        %v1596 = vpack.c.b16 %v1456, %v1452
        %v1597 = vpack.c.b16 %v1457, %v1453
        %v1598 = vpack.c.b16 %v1458, %v1454
        %v1599 = vpack.c.b16 %v1463, %v1459
        %v1600 = vpack.c.b16 %v1464, %v1460
        %v1601 = vpack.c.b16 %v1465, %v1461
        %v1602 = vpack.c.b16 %v1466, %v1462
        %v1603 = vpack.c.b16 %v1471, %v1467
        %v1604 = vpack.c.b16 %v1472, %v1468
        %v1605 = vpack.c.b16 %v1473, %v1469
        %v1606 = vpack.c.b16 %v1474, %v1470
        %v1607 = vpack.c.b16 %v1479, %v1475
        %v1608 = vpack.c.b16 %v1480, %v1476
        %v1609 = vpack.c.b16 %v1481, %v1477
        %v1610 = vpack.c.b16 %v1482, %v1478
        %1739 = vmatprep.subr.bf16.mxu0 %v1484
        %1740 = vmatpush1.bf16.msra.mxu0 %v1483
        %1741 = vmatprep.subr.bf16.mxu0 %v1488
        %1742 = vmatpush1.bf16.msra.mxu0 %v1487
        %1743 = vmatprep.subr.bf16.mxu0 %v1492
        %1744 = vmatpush1.bf16.msra.mxu0 %v1491
        %1745 = vmatprep.subr.bf16.mxu0 %v1496
        %1746 = vmatpush1.bf16.msra.mxu0 %v1495
        %1747 = vmatprep.subr.bf16.mxu0 %v1500
        %1748 = vmatpush1.bf16.msra.mxu0 %v1499
        %1749 = vmatprep.subr.bf16.mxu0 %v1504
        %1750 = vmatpush1.bf16.msra.mxu0 %v1503
        %1751 = vmatprep.subr.bf16.mxu0 %v1508
        %1752 = vmatpush1.bf16.msra.mxu0 %v1507
        %1753 = vmatprep.subr.bf16.mxu0 %v1512
        %1754 = vmatpush1.bf16.msra.mxu0 %v1511
        %1755 = vmatprep.subr.bf16.mxu0 %v1516
        %1756 = vmatpush1.bf16.msra.mxu0 %v1515
        %1757 = vmatprep.subr.bf16.mxu0 %v1520
        %1758 = vmatpush1.bf16.msra.mxu0 %v1519
        %1759 = vmatprep.subr.bf16.mxu0 %v1524
        %1760 = vmatpush1.bf16.msra.mxu0 %v1523
        %1761 = vmatprep.subr.bf16.mxu0 %v1528
        %1762 = vmatpush1.bf16.msra.mxu0 %v1527
        %1763 = vmatprep.subr.bf16.mxu0 %v1532
        %1764 = vmatpush1.bf16.msra.mxu0 %v1531
        %1765 = vmatprep.subr.bf16.mxu0 %v1536
        %1766 = vmatpush1.bf16.msra.mxu0 %v1535
        %1767 = vmatprep.subr.bf16.mxu0 %v1540
        %1768 = vmatpush1.bf16.msra.mxu0 %v1539
        %1769 = vmatprep.subr.bf16.mxu0 %v1544
        %1770 = vmatpush1.bf16.msra.mxu0 %v1543
        %1771 = vmatprep.mubr.bf16.mxu0 %v952
        %1772 = vmatmul.mubr.bf16.gmra.mrb[0].mxu0 %v951
        %v1773 = vpop.f32.mrb[0].mxu0
        %v1774 = vadd.f32 %v1086, %v1773
        %v1775 = vpop.f32.mrb[0].mxu0
        %v1776 = vadd.f32 %v1090, %v1775
        %v1777 = vpop.f32.mrb[0].mxu0
        %v1778 = vpop.f32.mrb[0].mxu0
        %1779 = vdwg.mxu0
        %1780 = vmatprep.subr.bf16.mxu0 %v1548
        %1781 = vmatpush1.bf16.msra.mxu0 %v1547
        %1782 = vmatprep.subr.bf16.mxu0 %v1552
        %1783 = vmatpush1.bf16.msra.mxu0 %v1551
        %1784 = vmatprep.subr.bf16.mxu0 %v1556
        %1785 = vmatpush1.bf16.msra.mxu0 %v1555
        %1786 = vmatprep.subr.bf16.mxu0 %v1560
        %1787 = vmatpush1.bf16.msra.mxu0 %v1559
        %1788 = vmatprep.subr.bf16.mxu0 %v1564
        %1789 = vmatpush1.bf16.msra.mxu0 %v1563
        %1790 = vmatprep.subr.bf16.mxu0 %v1568
        %1791 = vmatpush1.bf16.msra.mxu0 %v1567
        %1792 = vmatprep.subr.bf16.mxu0 %v1572
        %1793 = vmatpush1.bf16.msra.mxu0 %v1571
        %1794 = vmatprep.subr.bf16.mxu0 %v1576
        %1795 = vmatpush1.bf16.msra.mxu0 %v1575
        %1796 = vmatprep.subr.bf16.mxu0 %v1580
        %1797 = vmatpush1.bf16.msra.mxu0 %v1579
        %1798 = vmatprep.subr.bf16.mxu0 %v1584
        %1799 = vmatpush1.bf16.msra.mxu0 %v1583
        %1800 = vmatprep.subr.bf16.mxu0 %v1588
        %1801 = vmatpush1.bf16.msra.mxu0 %v1587
        %1802 = vmatprep.subr.bf16.mxu0 %v1592
        %1803 = vmatpush1.bf16.msra.mxu0 %v1591
        %1804 = vmatprep.subr.bf16.mxu0 %v1596
        %1805 = vmatpush1.bf16.msra.mxu0 %v1595
        %1806 = vmatprep.subr.bf16.mxu0 %v1600
        %1807 = vmatpush1.bf16.msra.mxu0 %v1599
        %1808 = vmatprep.subr.bf16.mxu0 %v1604
        %1809 = vmatpush1.bf16.msra.mxu0 %v1603
        %1810 = vmatprep.subr.bf16.mxu0 %v1608
        %1811 = vmatpush1.bf16.msra.mxu0 %v1607
        %1812 = vmatprep.mubr.bf16.mxu0 %v954
        %1813 = vmatmul.mubr.bf16.gmra.mrb[0].mxu0 %v953
        %v1814 = vpop.f32.mrb[0].mxu0
        %v1815 = vadd.f32 %v1774, %v1814
        %v1816 = vpop.f32.mrb[0].mxu0
        %v1817 = vadd.f32 %v1776, %v1816
        %v1818 = vpop.f32.mrb[0].mxu0
        %v1819 = vpop.f32.mrb[0].mxu0
        %1820 = vdwg.mxu0
        %1821 = vmatprep.subr.bf16.mxu0 %v1486
        %1822 = vmatpush1.bf16.msra.mxu0 %v1485
        %1823 = vmatprep.subr.bf16.mxu0 %v1490
        %1824 = vmatpush1.bf16.msra.mxu0 %v1489
        %1825 = vmatprep.subr.bf16.mxu0 %v1494
        %1826 = vmatpush1.bf16.msra.mxu0 %v1493
        %1827 = vmatprep.subr.bf16.mxu0 %v1498
        %1828 = vmatpush1.bf16.msra.mxu0 %v1497
        %1829 = vmatprep.subr.bf16.mxu0 %v1502
        %1830 = vmatpush1.bf16.msra.mxu0 %v1501
        %1831 = vmatprep.subr.bf16.mxu0 %v1506
        %1832 = vmatpush1.bf16.msra.mxu0 %v1505
        %1833 = vmatprep.subr.bf16.mxu0 %v1510
        %1834 = vmatpush1.bf16.msra.mxu0 %v1509
        %1835 = vmatprep.subr.bf16.mxu0 %v1514
        %1836 = vmatpush1.bf16.msra.mxu0 %v1513
        %1837 = vmatprep.subr.bf16.mxu0 %v1518
        %1838 = vmatpush1.bf16.msra.mxu0 %v1517
        %1839 = vmatprep.subr.bf16.mxu0 %v1522
        %1840 = vmatpush1.bf16.msra.mxu0 %v1521
        %1841 = vmatprep.subr.bf16.mxu0 %v1526
        %1842 = vmatpush1.bf16.msra.mxu0 %v1525
        %1843 = vmatprep.subr.bf16.mxu0 %v1530
        %1844 = vmatpush1.bf16.msra.mxu0 %v1529
        %1845 = vmatprep.subr.bf16.mxu0 %v1534
        %1846 = vmatpush1.bf16.msra.mxu0 %v1533
        %1847 = vmatprep.subr.bf16.mxu0 %v1538
        %1848 = vmatpush1.bf16.msra.mxu0 %v1537
        %1849 = vmatprep.subr.bf16.mxu0 %v1542
        %1850 = vmatpush1.bf16.msra.mxu0 %v1541
        %1851 = vmatprep.subr.bf16.mxu0 %v1546
        %1852 = vmatpush1.bf16.msra.mxu0 %v1545
        %1853 = vmatprep.mubr.bf16.mxu0 %v952
        %1854 = vmatmul.mubr.bf16.gmra.mrb[0].mxu0 %v951
        %v1855 = vpop.f32.mrb[0].mxu0
        %v1856 = vadd.f32 %v1094, %v1855
        %v1857 = vpop.f32.mrb[0].mxu0
        %v1858 = vadd.f32 %v1098, %v1857
        %v1859 = vpop.f32.mrb[0].mxu0
        %v1860 = vpop.f32.mrb[0].mxu0
        %1861 = vdwg.mxu0
        %1862 = vmatprep.subr.bf16.mxu0 %v1550
        %1863 = vmatpush1.bf16.msra.mxu0 %v1549
        %1864 = vmatprep.subr.bf16.mxu0 %v1554
        %1865 = vmatpush1.bf16.msra.mxu0 %v1553
        %1866 = vmatprep.subr.bf16.mxu0 %v1558
        %1867 = vmatpush1.bf16.msra.mxu0 %v1557
        %1868 = vmatprep.subr.bf16.mxu0 %v1562
        %1869 = vmatpush1.bf16.msra.mxu0 %v1561
        %1870 = vmatprep.subr.bf16.mxu0 %v1566
        %1871 = vmatpush1.bf16.msra.mxu0 %v1565
        %1872 = vmatprep.subr.bf16.mxu0 %v1570
        %1873 = vmatpush1.bf16.msra.mxu0 %v1569
        %1874 = vmatprep.subr.bf16.mxu0 %v1574
        %1875 = vmatpush1.bf16.msra.mxu0 %v1573
        %1876 = vmatprep.subr.bf16.mxu0 %v1578
        %1877 = vmatpush1.bf16.msra.mxu0 %v1577
        %1878 = vmatprep.subr.bf16.mxu0 %v1582
        %1879 = vmatpush1.bf16.msra.mxu0 %v1581
        %1880 = vmatprep.subr.bf16.mxu0 %v1586
        %1881 = vmatpush1.bf16.msra.mxu0 %v1585
        %1882 = vmatprep.subr.bf16.mxu0 %v1590
        %1883 = vmatpush1.bf16.msra.mxu0 %v1589
        %1884 = vmatprep.subr.bf16.mxu0 %v1594
        %1885 = vmatpush1.bf16.msra.mxu0 %v1593
        %1886 = vmatprep.subr.bf16.mxu0 %v1598
        %1887 = vmatpush1.bf16.msra.mxu0 %v1597
        %1888 = vmatprep.subr.bf16.mxu0 %v1602
        %1889 = vmatpush1.bf16.msra.mxu0 %v1601
        %1890 = vmatprep.subr.bf16.mxu0 %v1606
        %1891 = vmatpush1.bf16.msra.mxu0 %v1605
        %1892 = vmatprep.subr.bf16.mxu0 %v1610
        %1893 = vmatpush1.bf16.msra.mxu0 %v1609
        %1894 = vmatprep.mubr.bf16.mxu0 %v954
        %1895 = vmatmul.mubr.bf16.gmra.mrb[0].mxu0 %v953
        %v1896 = vpop.f32.mrb[0].mxu0
        %v1897 = vadd.f32 %v1856, %v1896
        %v1898 = vpop.f32.mrb[0].mxu0
        %v1899 = vadd.f32 %v1858, %v1898
        %v1900 = vpop.f32.mrb[0].mxu0
        %v1901 = vpop.f32.mrb[0].mxu0
        %1902 = vdwg.mxu0
        %v1903 = vmax.f32 %v1815, 0.0
        %v1904 = vmax.f32 %v1817, 0.0
        %v1905 = vmax.f32 %v1897, 0.0
        %v1906 = vmax.f32 %v1899, 0.0
        %v1907 = vpack.c.bf16 %v1903, %v1903
        %v1908 = vpack.c.bf16 %v1904, %v1904
        %v1909 = vpack.c.bf16 %v1905, %v1905
        %v1910 = vpack.c.bf16 %v1906, %v1906
        %v1911 = vld [vmem:[%s648] sm:$0xff]
        %v1912 = vld [vmem:[%s648 + $0x8] sm:$0xff]
        %v1913 = vld [vmem:[%s648 + $0x10] sm:$0xff]
        %v1914 = vld [vmem:[%s648 + $0x18] sm:$0xff]
        %v1915 = vld [vmem:[%s648 + $0x20] sm:$0xff]
        %v1916 = vld [vmem:[%s648 + $0x28] sm:$0xff]
        %v1917 = vld [vmem:[%s648 + $0x30] sm:$0xff]
        %v1918 = vld [vmem:[%s648 + $0x38] sm:$0xff]
        %v1919 = vld [vmem:[%s648 + $0x40] sm:$0xff]
        %v1920 = vld [vmem:[%s648 + $0x48] sm:$0xff]
        %v1921 = vld [vmem:[%s648 + $0x50] sm:$0xff]
        %v1922 = vld [vmem:[%s648 + $0x58] sm:$0xff]
        %v1923 = vld [vmem:[%s648 + $0x60] sm:$0xff]
        %v1924 = vld [vmem:[%s648 + $0x68] sm:$0xff]
        %v1925 = vld [vmem:[%s648 + $0x70] sm:$0xff]
        %v1926 = vld [vmem:[%s648 + $0x78] sm:$0xff]
        %v1927 = vld [vmem:[%s648 + $0x80] sm:$0xff]
        %v1928 = vld [vmem:[%s648 + $0x88] sm:$0xff]
        %v1929 = vld [vmem:[%s648 + $0x90] sm:$0xff]
        %v1930 = vld [vmem:[%s648 + $0x98] sm:$0xff]
        %v1931 = vld [vmem:[%s648 + $0xa0] sm:$0xff]
        %v1932 = vld [vmem:[%s648 + $0xa8] sm:$0xff]
        %v1933 = vld [vmem:[%s648 + $0xb0] sm:$0xff]
        %v1934 = vld [vmem:[%s648 + $0xb8] sm:$0xff]
        %v1935 = vld [vmem:[%s648 + $0xc0] sm:$0xff]
        %v1936 = vld [vmem:[%s648 + $0xc8] sm:$0xff]
        %v1937 = vld [vmem:[%s648 + $0xd0] sm:$0xff]
        %v1938 = vld [vmem:[%s648 + $0xd8] sm:$0xff]
        %v1939 = vld [vmem:[%s648 + $0xe0] sm:$0xff]
        %v1940 = vld [vmem:[%s648 + $0xe8] sm:$0xff]
        %v1941 = vld [vmem:[%s648 + $0xf0] sm:$0xff]
        %v1942 = vld [vmem:[%s648 + $0xf8] sm:$0xff]
        %v1943 = vld [vmem:[%s648 + $0x100] sm:$0xff]
        %v1944 = vld [vmem:[%s648 + $0x108] sm:$0xff]
        %v1945 = vld [vmem:[%s648 + $0x110] sm:$0xff]
        %v1946 = vld [vmem:[%s648 + $0x118] sm:$0xff]
        %v1947 = vld [vmem:[%s648 + $0x120] sm:$0xff]
        %v1948 = vld [vmem:[%s648 + $0x128] sm:$0xff]
        %v1949 = vld [vmem:[%s648 + $0x130] sm:$0xff]
        %v1950 = vld [vmem:[%s648 + $0x138] sm:$0xff]
        %v1951 = vld [vmem:[%s648 + $0x140] sm:$0xff]
        %v1952 = vld [vmem:[%s648 + $0x148] sm:$0xff]
        %v1953 = vld [vmem:[%s648 + $0x150] sm:$0xff]
        %v1954 = vld [vmem:[%s648 + $0x158] sm:$0xff]
        %v1955 = vld [vmem:[%s648 + $0x160] sm:$0xff]
        %v1956 = vld [vmem:[%s648 + $0x168] sm:$0xff]
        %v1957 = vld [vmem:[%s648 + $0x170] sm:$0xff]
        %v1958 = vld [vmem:[%s648 + $0x178] sm:$0xff]
        %v1959 = vld [vmem:[%s648 + $0x180] sm:$0xff]
        %v1960 = vld [vmem:[%s648 + $0x188] sm:$0xff]
        %v1961 = vld [vmem:[%s648 + $0x190] sm:$0xff]
        %v1962 = vld [vmem:[%s648 + $0x198] sm:$0xff]
        %v1963 = vld [vmem:[%s648 + $0x1a0] sm:$0xff]
        %v1964 = vld [vmem:[%s648 + $0x1a8] sm:$0xff]
        %v1965 = vld [vmem:[%s648 + $0x1b0] sm:$0xff]
        %v1966 = vld [vmem:[%s648 + $0x1b8] sm:$0xff]
        %v1967 = vld [vmem:[%s648 + $0x1c0] sm:$0xff]
        %v1968 = vld [vmem:[%s648 + $0x1c8] sm:$0xff]
        %v1969 = vld [vmem:[%s648 + $0x1d0] sm:$0xff]
        %v1970 = vld [vmem:[%s648 + $0x1d8] sm:$0xff]
        %v1971 = vld [vmem:[%s648 + $0x1e0] sm:$0xff]
        %v1972 = vld [vmem:[%s648 + $0x1e8] sm:$0xff]
        %v1973 = vld [vmem:[%s648 + $0x1f0] sm:$0xff]
        %v1974 = vld [vmem:[%s648 + $0x1f8] sm:$0xff]
        %v1975 = vld [vmem:[%s648 + $0x200] sm:$0xff]
        %v1976 = vld [vmem:[%s648 + $0x208] sm:$0xff]
        %v1977 = vld [vmem:[%s648 + $0x210] sm:$0xff]
        %v1978 = vld [vmem:[%s648 + $0x218] sm:$0xff]
        %v1979 = vld [vmem:[%s648 + $0x220] sm:$0xff]
        %v1980 = vld [vmem:[%s648 + $0x228] sm:$0xff]
        %v1981 = vld [vmem:[%s648 + $0x230] sm:$0xff]
        %v1982 = vld [vmem:[%s648 + $0x238] sm:$0xff]
        %v1983 = vld [vmem:[%s648 + $0x240] sm:$0xff]
        %v1984 = vld [vmem:[%s648 + $0x248] sm:$0xff]
        %v1985 = vld [vmem:[%s648 + $0x250] sm:$0xff]
        %v1986 = vld [vmem:[%s648 + $0x258] sm:$0xff]
        %v1987 = vld [vmem:[%s648 + $0x260] sm:$0xff]
        %v1988 = vld [vmem:[%s648 + $0x268] sm:$0xff]
        %v1989 = vld [vmem:[%s648 + $0x270] sm:$0xff]
        %v1990 = vld [vmem:[%s648 + $0x278] sm:$0xff]
        %v1991 = vld [vmem:[%s648 + $0x280] sm:$0xff]
        %v1992 = vld [vmem:[%s648 + $0x288] sm:$0xff]
        %v1993 = vld [vmem:[%s648 + $0x290] sm:$0xff]
        %v1994 = vld [vmem:[%s648 + $0x298] sm:$0xff]
        %v1995 = vld [vmem:[%s648 + $0x2a0] sm:$0xff]
        %v1996 = vld [vmem:[%s648 + $0x2a8] sm:$0xff]
        %v1997 = vld [vmem:[%s648 + $0x2b0] sm:$0xff]
        %v1998 = vld [vmem:[%s648 + $0x2b8] sm:$0xff]
        %v1999 = vld [vmem:[%s648 + $0x2c0] sm:$0xff]
        %v2000 = vld [vmem:[%s648 + $0x2c8] sm:$0xff]
        %v2001 = vld [vmem:[%s648 + $0x2d0] sm:$0xff]
        %v2002 = vld [vmem:[%s648 + $0x2d8] sm:$0xff]
        %v2003 = vld [vmem:[%s648 + $0x2e0] sm:$0xff]
        %v2004 = vld [vmem:[%s648 + $0x2e8] sm:$0xff]
        %v2005 = vld [vmem:[%s648 + $0x2f0] sm:$0xff]
        %v2006 = vld [vmem:[%s648 + $0x2f8] sm:$0xff]
        %v2007 = vld [vmem:[%s648 + $0x300] sm:$0xff]
        %v2008 = vld [vmem:[%s648 + $0x308] sm:$0xff]
        %v2009 = vld [vmem:[%s648 + $0x310] sm:$0xff]
        %v2010 = vld [vmem:[%s648 + $0x318] sm:$0xff]
        %v2011 = vld [vmem:[%s648 + $0x320] sm:$0xff]
        %v2012 = vld [vmem:[%s648 + $0x328] sm:$0xff]
        %v2013 = vld [vmem:[%s648 + $0x330] sm:$0xff]
        %v2014 = vld [vmem:[%s648 + $0x338] sm:$0xff]
        %v2015 = vld [vmem:[%s648 + $0x340] sm:$0xff]
        %v2016 = vld [vmem:[%s648 + $0x348] sm:$0xff]
        %v2017 = vld [vmem:[%s648 + $0x350] sm:$0xff]
        %v2018 = vld [vmem:[%s648 + $0x358] sm:$0xff]
        %v2019 = vld [vmem:[%s648 + $0x360] sm:$0xff]
        %v2020 = vld [vmem:[%s648 + $0x368] sm:$0xff]
        %v2021 = vld [vmem:[%s648 + $0x370] sm:$0xff]
        %v2022 = vld [vmem:[%s648 + $0x378] sm:$0xff]
        %v2023 = vld [vmem:[%s648 + $0x380] sm:$0xff]
        %v2024 = vld [vmem:[%s648 + $0x388] sm:$0xff]
        %v2025 = vld [vmem:[%s648 + $0x390] sm:$0xff]
        %v2026 = vld [vmem:[%s648 + $0x398] sm:$0xff]
        %v2027 = vld [vmem:[%s648 + $0x3a0] sm:$0xff]
        %v2028 = vld [vmem:[%s648 + $0x3a8] sm:$0xff]
        %v2029 = vld [vmem:[%s648 + $0x3b0] sm:$0xff]
        %v2030 = vld [vmem:[%s648 + $0x3b8] sm:$0xff]
        %v2031 = vld [vmem:[%s648 + $0x3c0] sm:$0xff]
        %v2032 = vld [vmem:[%s648 + $0x3c8] sm:$0xff]
        %v2033 = vld [vmem:[%s648 + $0x3d0] sm:$0xff]
        %v2034 = vld [vmem:[%s648 + $0x3d8] sm:$0xff]
        %v2035 = vld [vmem:[%s648 + $0x3e0] sm:$0xff]
        %v2036 = vld [vmem:[%s648 + $0x3e8] sm:$0xff]
        %v2037 = vld [vmem:[%s648 + $0x3f0] sm:$0xff]
        %v2038 = vld [vmem:[%s648 + $0x3f8] sm:$0xff]
        %v2039 = vlaneseq
        %v2040 = vshrl.u32 %v2039, 7
        %v2041 = vsub.s32 2, %v2040
        %v2042 = vrot.slane %v817, %v2041
        %v2043 = vlaneseq
        %v2044 = vshrl.u32 %v2043, 7
        %v2045 = vsub.s32 2, %v2044
        %v2046 = vrot.slane %v818, %v2045
        %v2047 = vlaneseq
        %v2048 = vshrl.u32 %v2047, 7
        %v2049 = vsub.s32 2, %v2048
        %v2050 = vrot.slane %v819, %v2049
        %v2051 = vlaneseq
        %v2052 = vshrl.u32 %v2051, 7
        %v2053 = vsub.s32 2, %v2052
        %v2054 = vrot.slane %v820, %v2053
        %v2183 = vunpack.c.l.b16 %v1911
        %v2184 = vunpack.c.h.b16 %v1911
        %v2185 = vunpack.c.l.b16 %v1912
        %v2186 = vunpack.c.h.b16 %v1912
        %v2187 = vunpack.c.l.b16 %v1913
        %v2188 = vunpack.c.h.b16 %v1913
        %v2189 = vunpack.c.l.b16 %v1914
        %v2190 = vunpack.c.h.b16 %v1914
        %v2191 = vunpack.c.l.b16 %v1915
        %v2192 = vunpack.c.h.b16 %v1915
        %v2193 = vunpack.c.l.b16 %v1916
        %v2194 = vunpack.c.h.b16 %v1916
        %v2195 = vunpack.c.l.b16 %v1917
        %v2196 = vunpack.c.h.b16 %v1917
        %v2197 = vunpack.c.l.b16 %v1918
        %v2198 = vunpack.c.h.b16 %v1918
        %v2199 = vunpack.c.l.b16 %v1919
        %v2200 = vunpack.c.h.b16 %v1919
        %v2201 = vunpack.c.l.b16 %v1920
        %v2202 = vunpack.c.h.b16 %v1920
        %v2203 = vunpack.c.l.b16 %v1921
        %v2204 = vunpack.c.h.b16 %v1921
        %v2205 = vunpack.c.l.b16 %v1922
        %v2206 = vunpack.c.h.b16 %v1922
        %v2207 = vunpack.c.l.b16 %v1923
        %v2208 = vunpack.c.h.b16 %v1923
        %v2209 = vunpack.c.l.b16 %v1924
        %v2210 = vunpack.c.h.b16 %v1924
        %v2211 = vunpack.c.l.b16 %v1925
        %v2212 = vunpack.c.h.b16 %v1925
        %v2213 = vunpack.c.l.b16 %v1926
        %v2214 = vunpack.c.h.b16 %v1926
        %v2215 = vunpack.c.l.b16 %v1927
        %v2216 = vunpack.c.h.b16 %v1927
        %v2217 = vunpack.c.l.b16 %v1928
        %v2218 = vunpack.c.h.b16 %v1928
        %v2219 = vunpack.c.l.b16 %v1929
        %v2220 = vunpack.c.h.b16 %v1929
        %v2221 = vunpack.c.l.b16 %v1930
        %v2222 = vunpack.c.h.b16 %v1930
        %v2223 = vunpack.c.l.b16 %v1931
        %v2224 = vunpack.c.h.b16 %v1931
        %v2225 = vunpack.c.l.b16 %v1932
        %v2226 = vunpack.c.h.b16 %v1932
        %v2227 = vunpack.c.l.b16 %v1933
        %v2228 = vunpack.c.h.b16 %v1933
        %v2229 = vunpack.c.l.b16 %v1934
        %v2230 = vunpack.c.h.b16 %v1934
        %v2231 = vunpack.c.l.b16 %v1935
        %v2232 = vunpack.c.h.b16 %v1935
        %v2233 = vunpack.c.l.b16 %v1936
        %v2234 = vunpack.c.h.b16 %v1936
        %v2235 = vunpack.c.l.b16 %v1937
        %v2236 = vunpack.c.h.b16 %v1937
        %v2237 = vunpack.c.l.b16 %v1938
        %v2238 = vunpack.c.h.b16 %v1938
        %v2239 = vunpack.c.l.b16 %v1939
        %v2240 = vunpack.c.h.b16 %v1939
        %v2241 = vunpack.c.l.b16 %v1940
        %v2242 = vunpack.c.h.b16 %v1940
        %v2243 = vunpack.c.l.b16 %v1941
        %v2244 = vunpack.c.h.b16 %v1941
        %v2245 = vunpack.c.l.b16 %v1942
        %v2246 = vunpack.c.h.b16 %v1942
        %v2247 = vunpack.c.l.b16 %v1943
        %v2248 = vunpack.c.h.b16 %v1943
        %v2249 = vunpack.c.l.b16 %v1944
        %v2250 = vunpack.c.h.b16 %v1944
        %v2251 = vunpack.c.l.b16 %v1945
        %v2252 = vunpack.c.h.b16 %v1945
        %v2253 = vunpack.c.l.b16 %v1946
        %v2254 = vunpack.c.h.b16 %v1946
        %v2255 = vunpack.c.l.b16 %v1947
        %v2256 = vunpack.c.h.b16 %v1947
        %v2257 = vunpack.c.l.b16 %v1948
        %v2258 = vunpack.c.h.b16 %v1948
        %v2259 = vunpack.c.l.b16 %v1949
        %v2260 = vunpack.c.h.b16 %v1949
        %v2261 = vunpack.c.l.b16 %v1950
        %v2262 = vunpack.c.h.b16 %v1950
        %v2263 = vunpack.c.l.b16 %v1951
        %v2264 = vunpack.c.h.b16 %v1951
        %v2265 = vunpack.c.l.b16 %v1952
        %v2266 = vunpack.c.h.b16 %v1952
        %v2267 = vunpack.c.l.b16 %v1953
        %v2268 = vunpack.c.h.b16 %v1953
        %v2269 = vunpack.c.l.b16 %v1954
        %v2270 = vunpack.c.h.b16 %v1954
        %v2271 = vunpack.c.l.b16 %v1955
        %v2272 = vunpack.c.h.b16 %v1955
        %v2273 = vunpack.c.l.b16 %v1956
        %v2274 = vunpack.c.h.b16 %v1956
        %v2275 = vunpack.c.l.b16 %v1957
        %v2276 = vunpack.c.h.b16 %v1957
        %v2277 = vunpack.c.l.b16 %v1958
        %v2278 = vunpack.c.h.b16 %v1958
        %v2279 = vunpack.c.l.b16 %v1959
        %v2280 = vunpack.c.h.b16 %v1959
        %v2281 = vunpack.c.l.b16 %v1960
        %v2282 = vunpack.c.h.b16 %v1960
        %v2283 = vunpack.c.l.b16 %v1961
        %v2284 = vunpack.c.h.b16 %v1961
        %v2285 = vunpack.c.l.b16 %v1962
        %v2286 = vunpack.c.h.b16 %v1962
        %v2287 = vunpack.c.l.b16 %v1963
        %v2288 = vunpack.c.h.b16 %v1963
        %v2289 = vunpack.c.l.b16 %v1964
        %v2290 = vunpack.c.h.b16 %v1964
        %v2291 = vunpack.c.l.b16 %v1965
        %v2292 = vunpack.c.h.b16 %v1965
        %v2293 = vunpack.c.l.b16 %v1966
        %v2294 = vunpack.c.h.b16 %v1966
        %v2295 = vunpack.c.l.b16 %v1967
        %v2296 = vunpack.c.h.b16 %v1967
        %v2297 = vunpack.c.l.b16 %v1968
        %v2298 = vunpack.c.h.b16 %v1968
        %v2299 = vunpack.c.l.b16 %v1969
        %v2300 = vunpack.c.h.b16 %v1969
        %v2301 = vunpack.c.l.b16 %v1970
        %v2302 = vunpack.c.h.b16 %v1970
        %v2303 = vunpack.c.l.b16 %v1971
        %v2304 = vunpack.c.h.b16 %v1971
        %v2305 = vunpack.c.l.b16 %v1972
        %v2306 = vunpack.c.h.b16 %v1972
        %v2307 = vunpack.c.l.b16 %v1973
        %v2308 = vunpack.c.h.b16 %v1973
        %v2309 = vunpack.c.l.b16 %v1974
        %v2310 = vunpack.c.h.b16 %v1974
        %v2311 = vunpack.c.l.b16 %v1975
        %v2312 = vunpack.c.h.b16 %v1975
        %v2313 = vunpack.c.l.b16 %v1976
        %v2314 = vunpack.c.h.b16 %v1976
        %v2315 = vunpack.c.l.b16 %v1977
        %v2316 = vunpack.c.h.b16 %v1977
        %v2317 = vunpack.c.l.b16 %v1978
        %v2318 = vunpack.c.h.b16 %v1978
        %v2319 = vunpack.c.l.b16 %v1979
        %v2320 = vunpack.c.h.b16 %v1979
        %v2321 = vunpack.c.l.b16 %v1980
        %v2322 = vunpack.c.h.b16 %v1980
        %v2323 = vunpack.c.l.b16 %v1981
        %v2324 = vunpack.c.h.b16 %v1981
        %v2325 = vunpack.c.l.b16 %v1982
        %v2326 = vunpack.c.h.b16 %v1982
        %v2327 = vunpack.c.l.b16 %v1983
        %v2328 = vunpack.c.h.b16 %v1983
        %v2329 = vunpack.c.l.b16 %v1984
        %v2330 = vunpack.c.h.b16 %v1984
        %v2331 = vunpack.c.l.b16 %v1985
        %v2332 = vunpack.c.h.b16 %v1985
        %v2333 = vunpack.c.l.b16 %v1986
        %v2334 = vunpack.c.h.b16 %v1986
        %v2335 = vunpack.c.l.b16 %v1987
        %v2336 = vunpack.c.h.b16 %v1987
        %v2337 = vunpack.c.l.b16 %v1988
        %v2338 = vunpack.c.h.b16 %v1988
        %v2339 = vunpack.c.l.b16 %v1989
        %v2340 = vunpack.c.h.b16 %v1989
        %v2341 = vunpack.c.l.b16 %v1990
        %v2342 = vunpack.c.h.b16 %v1990
        %v2343 = vunpack.c.l.b16 %v1991
        %v2344 = vunpack.c.h.b16 %v1991
        %v2345 = vunpack.c.l.b16 %v1992
        %v2346 = vunpack.c.h.b16 %v1992
        %v2347 = vunpack.c.l.b16 %v1993
        %v2348 = vunpack.c.h.b16 %v1993
        %v2349 = vunpack.c.l.b16 %v1994
        %v2350 = vunpack.c.h.b16 %v1994
        %v2351 = vunpack.c.l.b16 %v1995
        %v2352 = vunpack.c.h.b16 %v1995
        %v2353 = vunpack.c.l.b16 %v1996
        %v2354 = vunpack.c.h.b16 %v1996
        %v2355 = vunpack.c.l.b16 %v1997
        %v2356 = vunpack.c.h.b16 %v1997
        %v2357 = vunpack.c.l.b16 %v1998
        %v2358 = vunpack.c.h.b16 %v1998
        %v2359 = vunpack.c.l.b16 %v1999
        %v2360 = vunpack.c.h.b16 %v1999
        %v2361 = vunpack.c.l.b16 %v2000
        %v2362 = vunpack.c.h.b16 %v2000
        %v2363 = vunpack.c.l.b16 %v2001
        %v2364 = vunpack.c.h.b16 %v2001
        %v2365 = vunpack.c.l.b16 %v2002
        %v2366 = vunpack.c.h.b16 %v2002
        %v2367 = vunpack.c.l.b16 %v2003
        %v2368 = vunpack.c.h.b16 %v2003
        %v2369 = vunpack.c.l.b16 %v2004
        %v2370 = vunpack.c.h.b16 %v2004
        %v2371 = vunpack.c.l.b16 %v2005
        %v2372 = vunpack.c.h.b16 %v2005
        %v2373 = vunpack.c.l.b16 %v2006
        %v2374 = vunpack.c.h.b16 %v2006
        %v2375 = vunpack.c.l.b16 %v2007
        %v2376 = vunpack.c.h.b16 %v2007
        %v2377 = vunpack.c.l.b16 %v2008
        %v2378 = vunpack.c.h.b16 %v2008
        %v2379 = vunpack.c.l.b16 %v2009
        %v2380 = vunpack.c.h.b16 %v2009
        %v2381 = vunpack.c.l.b16 %v2010
        %v2382 = vunpack.c.h.b16 %v2010
        %v2383 = vunpack.c.l.b16 %v2011
        %v2384 = vunpack.c.h.b16 %v2011
        %v2385 = vunpack.c.l.b16 %v2012
        %v2386 = vunpack.c.h.b16 %v2012
        %v2387 = vunpack.c.l.b16 %v2013
        %v2388 = vunpack.c.h.b16 %v2013
        %v2389 = vunpack.c.l.b16 %v2014
        %v2390 = vunpack.c.h.b16 %v2014
        %v2391 = vunpack.c.l.b16 %v2015
        %v2392 = vunpack.c.h.b16 %v2015
        %v2393 = vunpack.c.l.b16 %v2016
        %v2394 = vunpack.c.h.b16 %v2016
        %v2395 = vunpack.c.l.b16 %v2017
        %v2396 = vunpack.c.h.b16 %v2017
        %v2397 = vunpack.c.l.b16 %v2018
        %v2398 = vunpack.c.h.b16 %v2018
        %v2399 = vunpack.c.l.b16 %v2019
        %v2400 = vunpack.c.h.b16 %v2019
        %v2401 = vunpack.c.l.b16 %v2020
        %v2402 = vunpack.c.h.b16 %v2020
        %v2403 = vunpack.c.l.b16 %v2021
        %v2404 = vunpack.c.h.b16 %v2021
        %v2405 = vunpack.c.l.b16 %v2022
        %v2406 = vunpack.c.h.b16 %v2022
        %v2407 = vunpack.c.l.b16 %v2023
        %v2408 = vunpack.c.h.b16 %v2023
        %v2409 = vunpack.c.l.b16 %v2024
        %v2410 = vunpack.c.h.b16 %v2024
        %v2411 = vunpack.c.l.b16 %v2025
        %v2412 = vunpack.c.h.b16 %v2025
        %v2413 = vunpack.c.l.b16 %v2026
        %v2414 = vunpack.c.h.b16 %v2026
        %v2415 = vunpack.c.l.b16 %v2027
        %v2416 = vunpack.c.h.b16 %v2027
        %v2417 = vunpack.c.l.b16 %v2028
        %v2418 = vunpack.c.h.b16 %v2028
        %v2419 = vunpack.c.l.b16 %v2029
        %v2420 = vunpack.c.h.b16 %v2029
        %v2421 = vunpack.c.l.b16 %v2030
        %v2422 = vunpack.c.h.b16 %v2030
        %v2423 = vunpack.c.l.b16 %v2031
        %v2424 = vunpack.c.h.b16 %v2031
        %v2425 = vunpack.c.l.b16 %v2032
        %v2426 = vunpack.c.h.b16 %v2032
        %v2427 = vunpack.c.l.b16 %v2033
        %v2428 = vunpack.c.h.b16 %v2033
        %v2429 = vunpack.c.l.b16 %v2034
        %v2430 = vunpack.c.h.b16 %v2034
        %v2431 = vunpack.c.l.b16 %v2035
        %v2432 = vunpack.c.h.b16 %v2035
        %v2433 = vunpack.c.l.b16 %v2036
        %v2434 = vunpack.c.h.b16 %v2036
        %v2435 = vunpack.c.l.b16 %v2037
        %v2436 = vunpack.c.h.b16 %v2037
        %v2437 = vunpack.c.l.b16 %v2038
        %v2438 = vunpack.c.h.b16 %v2038
        %v2439 = vpack.c.b16 %v2187, %v2183
        %v2440 = vpack.c.b16 %v2188, %v2184
        %v2441 = vpack.c.b16 %v2189, %v2185
        %v2442 = vpack.c.b16 %v2190, %v2186
        %v2443 = vpack.c.b16 %v2195, %v2191
        %v2444 = vpack.c.b16 %v2196, %v2192
        %v2445 = vpack.c.b16 %v2197, %v2193
        %v2446 = vpack.c.b16 %v2198, %v2194
        %v2447 = vpack.c.b16 %v2203, %v2199
        %v2448 = vpack.c.b16 %v2204, %v2200
        %v2449 = vpack.c.b16 %v2205, %v2201
        %v2450 = vpack.c.b16 %v2206, %v2202
        %v2451 = vpack.c.b16 %v2211, %v2207
        %v2452 = vpack.c.b16 %v2212, %v2208
        %v2453 = vpack.c.b16 %v2213, %v2209
        %v2454 = vpack.c.b16 %v2214, %v2210
        %v2455 = vpack.c.b16 %v2219, %v2215
        %v2456 = vpack.c.b16 %v2220, %v2216
        %v2457 = vpack.c.b16 %v2221, %v2217
        %v2458 = vpack.c.b16 %v2222, %v2218
        %v2459 = vpack.c.b16 %v2227, %v2223
        %v2460 = vpack.c.b16 %v2228, %v2224
        %v2461 = vpack.c.b16 %v2229, %v2225
        %v2462 = vpack.c.b16 %v2230, %v2226
        %v2463 = vpack.c.b16 %v2235, %v2231
        %v2464 = vpack.c.b16 %v2236, %v2232
        %v2465 = vpack.c.b16 %v2237, %v2233
        %v2466 = vpack.c.b16 %v2238, %v2234
        %v2467 = vpack.c.b16 %v2243, %v2239
        %v2468 = vpack.c.b16 %v2244, %v2240
        %v2469 = vpack.c.b16 %v2245, %v2241
        %v2470 = vpack.c.b16 %v2246, %v2242
        %v2471 = vpack.c.b16 %v2251, %v2247
        %v2472 = vpack.c.b16 %v2252, %v2248
        %v2473 = vpack.c.b16 %v2253, %v2249
        %v2474 = vpack.c.b16 %v2254, %v2250
        %v2475 = vpack.c.b16 %v2259, %v2255
        %v2476 = vpack.c.b16 %v2260, %v2256
        %v2477 = vpack.c.b16 %v2261, %v2257
        %v2478 = vpack.c.b16 %v2262, %v2258
        %v2479 = vpack.c.b16 %v2267, %v2263
        %v2480 = vpack.c.b16 %v2268, %v2264
        %v2481 = vpack.c.b16 %v2269, %v2265
        %v2482 = vpack.c.b16 %v2270, %v2266
        %v2483 = vpack.c.b16 %v2275, %v2271
        %v2484 = vpack.c.b16 %v2276, %v2272
        %v2485 = vpack.c.b16 %v2277, %v2273
        %v2486 = vpack.c.b16 %v2278, %v2274
        %v2487 = vpack.c.b16 %v2283, %v2279
        %v2488 = vpack.c.b16 %v2284, %v2280
        %v2489 = vpack.c.b16 %v2285, %v2281
        %v2490 = vpack.c.b16 %v2286, %v2282
        %v2491 = vpack.c.b16 %v2291, %v2287
        %v2492 = vpack.c.b16 %v2292, %v2288
        %v2493 = vpack.c.b16 %v2293, %v2289
        %v2494 = vpack.c.b16 %v2294, %v2290
        %v2495 = vpack.c.b16 %v2299, %v2295
        %v2496 = vpack.c.b16 %v2300, %v2296
        %v2497 = vpack.c.b16 %v2301, %v2297
        %v2498 = vpack.c.b16 %v2302, %v2298
        %v2499 = vpack.c.b16 %v2307, %v2303
        %v2500 = vpack.c.b16 %v2308, %v2304
        %v2501 = vpack.c.b16 %v2309, %v2305
        %v2502 = vpack.c.b16 %v2310, %v2306
        %v2503 = vpack.c.b16 %v2315, %v2311
        %v2504 = vpack.c.b16 %v2316, %v2312
        %v2505 = vpack.c.b16 %v2317, %v2313
        %v2506 = vpack.c.b16 %v2318, %v2314
        %v2507 = vpack.c.b16 %v2323, %v2319
        %v2508 = vpack.c.b16 %v2324, %v2320
        %v2509 = vpack.c.b16 %v2325, %v2321
        %v2510 = vpack.c.b16 %v2326, %v2322
        %v2511 = vpack.c.b16 %v2331, %v2327
        %v2512 = vpack.c.b16 %v2332, %v2328
        %v2513 = vpack.c.b16 %v2333, %v2329
        %v2514 = vpack.c.b16 %v2334, %v2330
        %v2515 = vpack.c.b16 %v2339, %v2335
        %v2516 = vpack.c.b16 %v2340, %v2336
        %v2517 = vpack.c.b16 %v2341, %v2337
        %v2518 = vpack.c.b16 %v2342, %v2338
        %v2519 = vpack.c.b16 %v2347, %v2343
        %v2520 = vpack.c.b16 %v2348, %v2344
        %v2521 = vpack.c.b16 %v2349, %v2345
        %v2522 = vpack.c.b16 %v2350, %v2346
        %v2523 = vpack.c.b16 %v2355, %v2351
        %v2524 = vpack.c.b16 %v2356, %v2352
        %v2525 = vpack.c.b16 %v2357, %v2353
        %v2526 = vpack.c.b16 %v2358, %v2354
        %v2527 = vpack.c.b16 %v2363, %v2359
        %v2528 = vpack.c.b16 %v2364, %v2360
        %v2529 = vpack.c.b16 %v2365, %v2361
        %v2530 = vpack.c.b16 %v2366, %v2362
        %v2531 = vpack.c.b16 %v2371, %v2367
        %v2532 = vpack.c.b16 %v2372, %v2368
        %v2533 = vpack.c.b16 %v2373, %v2369
        %v2534 = vpack.c.b16 %v2374, %v2370
        %v2535 = vpack.c.b16 %v2379, %v2375
        %v2536 = vpack.c.b16 %v2380, %v2376
        %v2537 = vpack.c.b16 %v2381, %v2377
        %v2538 = vpack.c.b16 %v2382, %v2378
        %v2539 = vpack.c.b16 %v2387, %v2383
        %v2540 = vpack.c.b16 %v2388, %v2384
        %v2541 = vpack.c.b16 %v2389, %v2385
        %v2542 = vpack.c.b16 %v2390, %v2386
        %v2543 = vpack.c.b16 %v2395, %v2391
        %v2544 = vpack.c.b16 %v2396, %v2392
        %v2545 = vpack.c.b16 %v2397, %v2393
        %v2546 = vpack.c.b16 %v2398, %v2394
        %v2547 = vpack.c.b16 %v2403, %v2399
        %v2548 = vpack.c.b16 %v2404, %v2400
        %v2549 = vpack.c.b16 %v2405, %v2401
        %v2550 = vpack.c.b16 %v2406, %v2402
        %v2551 = vpack.c.b16 %v2411, %v2407
        %v2552 = vpack.c.b16 %v2412, %v2408
        %v2553 = vpack.c.b16 %v2413, %v2409
        %v2554 = vpack.c.b16 %v2414, %v2410
        %v2555 = vpack.c.b16 %v2419, %v2415
        %v2556 = vpack.c.b16 %v2420, %v2416
        %v2557 = vpack.c.b16 %v2421, %v2417
        %v2558 = vpack.c.b16 %v2422, %v2418
        %v2559 = vpack.c.b16 %v2427, %v2423
        %v2560 = vpack.c.b16 %v2428, %v2424
        %v2561 = vpack.c.b16 %v2429, %v2425
        %v2562 = vpack.c.b16 %v2430, %v2426
        %v2563 = vpack.c.b16 %v2435, %v2431
        %v2564 = vpack.c.b16 %v2436, %v2432
        %v2565 = vpack.c.b16 %v2437, %v2433
        %v2566 = vpack.c.b16 %v2438, %v2434
        %2695 = vmatprep.subr.bf16.mxu0 %v2440
        %2696 = vmatpush1.bf16.msra.mxu0 %v2439
        %2697 = vmatprep.subr.bf16.mxu0 %v2444
        %2698 = vmatpush1.bf16.msra.mxu0 %v2443
        %2699 = vmatprep.subr.bf16.mxu0 %v2448
        %2700 = vmatpush1.bf16.msra.mxu0 %v2447
        %2701 = vmatprep.subr.bf16.mxu0 %v2452
        %2702 = vmatpush1.bf16.msra.mxu0 %v2451
        %2703 = vmatprep.subr.bf16.mxu0 %v2456
        %2704 = vmatpush1.bf16.msra.mxu0 %v2455
        %2705 = vmatprep.subr.bf16.mxu0 %v2460
        %2706 = vmatpush1.bf16.msra.mxu0 %v2459
        %2707 = vmatprep.subr.bf16.mxu0 %v2464
        %2708 = vmatpush1.bf16.msra.mxu0 %v2463
        %2709 = vmatprep.subr.bf16.mxu0 %v2468
        %2710 = vmatpush1.bf16.msra.mxu0 %v2467
        %2711 = vmatprep.subr.bf16.mxu0 %v2472
        %2712 = vmatpush1.bf16.msra.mxu0 %v2471
        %2713 = vmatprep.subr.bf16.mxu0 %v2476
        %2714 = vmatpush1.bf16.msra.mxu0 %v2475
        %2715 = vmatprep.subr.bf16.mxu0 %v2480
        %2716 = vmatpush1.bf16.msra.mxu0 %v2479
        %2717 = vmatprep.subr.bf16.mxu0 %v2484
        %2718 = vmatpush1.bf16.msra.mxu0 %v2483
        %2719 = vmatprep.subr.bf16.mxu0 %v2488
        %2720 = vmatpush1.bf16.msra.mxu0 %v2487
        %2721 = vmatprep.subr.bf16.mxu0 %v2492
        %2722 = vmatpush1.bf16.msra.mxu0 %v2491
        %2723 = vmatprep.subr.bf16.mxu0 %v2496
        %2724 = vmatpush1.bf16.msra.mxu0 %v2495
        %2725 = vmatprep.subr.bf16.mxu0 %v2500
        %2726 = vmatpush1.bf16.msra.mxu0 %v2499
        %2727 = vmatprep.mubr.bf16.mxu0 %v1908
        %2728 = vmatmul.mubr.bf16.gmra.mrb[0].mxu0 %v1907
        %v2729 = vpop.f32.mrb[0].mxu0
        %v2730 = vadd.f32 %v2042, %v2729
        %v2731 = vpop.f32.mrb[0].mxu0
        %v2732 = vadd.f32 %v2046, %v2731
        %v2733 = vpop.f32.mrb[0].mxu0
        %v2734 = vpop.f32.mrb[0].mxu0
        %2735 = vdwg.mxu0
        %2736 = vmatprep.subr.bf16.mxu0 %v2504
        %2737 = vmatpush1.bf16.msra.mxu0 %v2503
        %2738 = vmatprep.subr.bf16.mxu0 %v2508
        %2739 = vmatpush1.bf16.msra.mxu0 %v2507
        %2740 = vmatprep.subr.bf16.mxu0 %v2512
        %2741 = vmatpush1.bf16.msra.mxu0 %v2511
        %2742 = vmatprep.subr.bf16.mxu0 %v2516
        %2743 = vmatpush1.bf16.msra.mxu0 %v2515
        %2744 = vmatprep.subr.bf16.mxu0 %v2520
        %2745 = vmatpush1.bf16.msra.mxu0 %v2519
        %2746 = vmatprep.subr.bf16.mxu0 %v2524
        %2747 = vmatpush1.bf16.msra.mxu0 %v2523
        %2748 = vmatprep.subr.bf16.mxu0 %v2528
        %2749 = vmatpush1.bf16.msra.mxu0 %v2527
        %2750 = vmatprep.subr.bf16.mxu0 %v2532
        %2751 = vmatpush1.bf16.msra.mxu0 %v2531
        %2752 = vmatprep.subr.bf16.mxu0 %v2536
        %2753 = vmatpush1.bf16.msra.mxu0 %v2535
        %2754 = vmatprep.subr.bf16.mxu0 %v2540
        %2755 = vmatpush1.bf16.msra.mxu0 %v2539
        %2756 = vmatprep.subr.bf16.mxu0 %v2544
        %2757 = vmatpush1.bf16.msra.mxu0 %v2543
        %2758 = vmatprep.subr.bf16.mxu0 %v2548
        %2759 = vmatpush1.bf16.msra.mxu0 %v2547
        %2760 = vmatprep.subr.bf16.mxu0 %v2552
        %2761 = vmatpush1.bf16.msra.mxu0 %v2551
        %2762 = vmatprep.subr.bf16.mxu0 %v2556
        %2763 = vmatpush1.bf16.msra.mxu0 %v2555
        %2764 = vmatprep.subr.bf16.mxu0 %v2560
        %2765 = vmatpush1.bf16.msra.mxu0 %v2559
        %2766 = vmatprep.subr.bf16.mxu0 %v2564
        %2767 = vmatpush1.bf16.msra.mxu0 %v2563
        %2768 = vmatprep.mubr.bf16.mxu0 %v1910
        %2769 = vmatmul.mubr.bf16.gmra.mrb[0].mxu0 %v1909
        %v2770 = vpop.f32.mrb[0].mxu0
        %v2771 = vadd.f32 %v2730, %v2770
        %v2772 = vpop.f32.mrb[0].mxu0
        %v2773 = vadd.f32 %v2732, %v2772
        %v2774 = vpop.f32.mrb[0].mxu0
        %v2775 = vpop.f32.mrb[0].mxu0
        %2776 = vdwg.mxu0
        %2777 = vmatprep.subr.bf16.mxu0 %v2442
        %2778 = vmatpush1.bf16.msra.mxu0 %v2441
        %2779 = vmatprep.subr.bf16.mxu0 %v2446
        %2780 = vmatpush1.bf16.msra.mxu0 %v2445
        %2781 = vmatprep.subr.bf16.mxu0 %v2450
        %2782 = vmatpush1.bf16.msra.mxu0 %v2449
        %2783 = vmatprep.subr.bf16.mxu0 %v2454
        %2784 = vmatpush1.bf16.msra.mxu0 %v2453
        %2785 = vmatprep.subr.bf16.mxu0 %v2458
        %2786 = vmatpush1.bf16.msra.mxu0 %v2457
        %2787 = vmatprep.subr.bf16.mxu0 %v2462
        %2788 = vmatpush1.bf16.msra.mxu0 %v2461
        %2789 = vmatprep.subr.bf16.mxu0 %v2466
        %2790 = vmatpush1.bf16.msra.mxu0 %v2465
        %2791 = vmatprep.subr.bf16.mxu0 %v2470
        %2792 = vmatpush1.bf16.msra.mxu0 %v2469
        %2793 = vmatprep.subr.bf16.mxu0 %v2474
        %2794 = vmatpush1.bf16.msra.mxu0 %v2473
        %2795 = vmatprep.subr.bf16.mxu0 %v2478
        %2796 = vmatpush1.bf16.msra.mxu0 %v2477
        %2797 = vmatprep.subr.bf16.mxu0 %v2482
        %2798 = vmatpush1.bf16.msra.mxu0 %v2481
        %2799 = vmatprep.subr.bf16.mxu0 %v2486
        %2800 = vmatpush1.bf16.msra.mxu0 %v2485
        %2801 = vmatprep.subr.bf16.mxu0 %v2490
        %2802 = vmatpush1.bf16.msra.mxu0 %v2489
        %2803 = vmatprep.subr.bf16.mxu0 %v2494
        %2804 = vmatpush1.bf16.msra.mxu0 %v2493
        %2805 = vmatprep.subr.bf16.mxu0 %v2498
        %2806 = vmatpush1.bf16.msra.mxu0 %v2497
        %2807 = vmatprep.subr.bf16.mxu0 %v2502
        %2808 = vmatpush1.bf16.msra.mxu0 %v2501
        %2809 = vmatprep.mubr.bf16.mxu0 %v1908
        %2810 = vmatmul.mubr.bf16.gmra.mrb[0].mxu0 %v1907
        %v2811 = vpop.f32.mrb[0].mxu0
        %v2812 = vadd.f32 %v2050, %v2811
        %v2813 = vpop.f32.mrb[0].mxu0
        %v2814 = vadd.f32 %v2054, %v2813
        %v2815 = vpop.f32.mrb[0].mxu0
        %v2816 = vpop.f32.mrb[0].mxu0
        %2817 = vdwg.mxu0
        %2818 = vmatprep.subr.bf16.mxu0 %v2506
        %2819 = vmatpush1.bf16.msra.mxu0 %v2505
        %2820 = vmatprep.subr.bf16.mxu0 %v2510
        %2821 = vmatpush1.bf16.msra.mxu0 %v2509
        %2822 = vmatprep.subr.bf16.mxu0 %v2514
        %2823 = vmatpush1.bf16.msra.mxu0 %v2513
        %2824 = vmatprep.subr.bf16.mxu0 %v2518
        %2825 = vmatpush1.bf16.msra.mxu0 %v2517
        %2826 = vmatprep.subr.bf16.mxu0 %v2522
        %2827 = vmatpush1.bf16.msra.mxu0 %v2521
        %2828 = vmatprep.subr.bf16.mxu0 %v2526
        %2829 = vmatpush1.bf16.msra.mxu0 %v2525
        %2830 = vmatprep.subr.bf16.mxu0 %v2530
        %2831 = vmatpush1.bf16.msra.mxu0 %v2529
        %2832 = vmatprep.subr.bf16.mxu0 %v2534
        %2833 = vmatpush1.bf16.msra.mxu0 %v2533
        %2834 = vmatprep.subr.bf16.mxu0 %v2538
        %2835 = vmatpush1.bf16.msra.mxu0 %v2537
        %2836 = vmatprep.subr.bf16.mxu0 %v2542
        %2837 = vmatpush1.bf16.msra.mxu0 %v2541
        %2838 = vmatprep.subr.bf16.mxu0 %v2546
        %2839 = vmatpush1.bf16.msra.mxu0 %v2545
        %2840 = vmatprep.subr.bf16.mxu0 %v2550
        %2841 = vmatpush1.bf16.msra.mxu0 %v2549
        %2842 = vmatprep.subr.bf16.mxu0 %v2554
        %2843 = vmatpush1.bf16.msra.mxu0 %v2553
        %2844 = vmatprep.subr.bf16.mxu0 %v2558
        %2845 = vmatpush1.bf16.msra.mxu0 %v2557
        %2846 = vmatprep.subr.bf16.mxu0 %v2562
        %2847 = vmatpush1.bf16.msra.mxu0 %v2561
        %2848 = vmatprep.subr.bf16.mxu0 %v2566
        %2849 = vmatpush1.bf16.msra.mxu0 %v2565
        %2850 = vmatprep.mubr.bf16.mxu0 %v1910
        %2851 = vmatmul.mubr.bf16.gmra.mrb[0].mxu0 %v1909
        %v2852 = vpop.f32.mrb[0].mxu0
        %v2853 = vadd.f32 %v2812, %v2852
        %v2854 = vpop.f32.mrb[0].mxu0
        %v2855 = vadd.f32 %v2814, %v2854
        %v2856 = vpop.f32.mrb[0].mxu0
        %v2857 = vpop.f32.mrb[0].mxu0
        %2858 = vdwg.mxu0
        %v2859 = vmax.f32 %v2771, 0.0
        %v2860 = vmax.f32 %v2773, 0.0
        %v2861 = vmax.f32 %v2853, 0.0
        %v2862 = vmax.f32 %v2855, 0.0
        %v2863 = vpack.c.bf16 %v2859, %v2859
        %v2864 = vpack.c.bf16 %v2860, %v2860
        %v2865 = vpack.c.bf16 %v2861, %v2861
        %v2866 = vpack.c.bf16 %v2862, %v2862
        %v2867 = vld [vmem:[%s657] sm:$0xff]
        %v2868 = vld [vmem:[%s657 + $0x8] sm:$0xff]
        %v2869 = vld [vmem:[%s657 + $0x10] sm:$0xff]
        %v2870 = vld [vmem:[%s657 + $0x18] sm:$0xff]
        %v2871 = vld [vmem:[%s657 + $0x20] sm:$0xff]
        %v2872 = vld [vmem:[%s657 + $0x28] sm:$0xff]
        %v2873 = vld [vmem:[%s657 + $0x30] sm:$0xff]
        %v2874 = vld [vmem:[%s657 + $0x38] sm:$0xff]
        %v2875 = vld [vmem:[%s657 + $0x40] sm:$0xff]
        %v2876 = vld [vmem:[%s657 + $0x48] sm:$0xff]
        %v2877 = vld [vmem:[%s657 + $0x50] sm:$0xff]
        %v2878 = vld [vmem:[%s657 + $0x58] sm:$0xff]
        %v2879 = vld [vmem:[%s657 + $0x60] sm:$0xff]
        %v2880 = vld [vmem:[%s657 + $0x68] sm:$0xff]
        %v2881 = vld [vmem:[%s657 + $0x70] sm:$0xff]
        %v2882 = vld [vmem:[%s657 + $0x78] sm:$0xff]
        %v2883 = vld [vmem:[%s657 + $0x80] sm:$0xff]
        %v2884 = vld [vmem:[%s657 + $0x88] sm:$0xff]
        %v2885 = vld [vmem:[%s657 + $0x90] sm:$0xff]
        %v2886 = vld [vmem:[%s657 + $0x98] sm:$0xff]
        %v2887 = vld [vmem:[%s657 + $0xa0] sm:$0xff]
        %v2888 = vld [vmem:[%s657 + $0xa8] sm:$0xff]
        %v2889 = vld [vmem:[%s657 + $0xb0] sm:$0xff]
        %v2890 = vld [vmem:[%s657 + $0xb8] sm:$0xff]
        %v2891 = vld [vmem:[%s657 + $0xc0] sm:$0xff]
        %v2892 = vld [vmem:[%s657 + $0xc8] sm:$0xff]
        %v2893 = vld [vmem:[%s657 + $0xd0] sm:$0xff]
        %v2894 = vld [vmem:[%s657 + $0xd8] sm:$0xff]
        %v2895 = vld [vmem:[%s657 + $0xe0] sm:$0xff]
        %v2896 = vld [vmem:[%s657 + $0xe8] sm:$0xff]
        %v2897 = vld [vmem:[%s657 + $0xf0] sm:$0xff]
        %v2898 = vld [vmem:[%s657 + $0xf8] sm:$0xff]
        %v2899 = vld [vmem:[%s657 + $0x100] sm:$0xff]
        %v2900 = vld [vmem:[%s657 + $0x108] sm:$0xff]
        %v2901 = vld [vmem:[%s657 + $0x110] sm:$0xff]
        %v2902 = vld [vmem:[%s657 + $0x118] sm:$0xff]
        %v2903 = vld [vmem:[%s657 + $0x120] sm:$0xff]
        %v2904 = vld [vmem:[%s657 + $0x128] sm:$0xff]
        %v2905 = vld [vmem:[%s657 + $0x130] sm:$0xff]
        %v2906 = vld [vmem:[%s657 + $0x138] sm:$0xff]
        %v2907 = vld [vmem:[%s657 + $0x140] sm:$0xff]
        %v2908 = vld [vmem:[%s657 + $0x148] sm:$0xff]
        %v2909 = vld [vmem:[%s657 + $0x150] sm:$0xff]
        %v2910 = vld [vmem:[%s657 + $0x158] sm:$0xff]
        %v2911 = vld [vmem:[%s657 + $0x160] sm:$0xff]
        %v2912 = vld [vmem:[%s657 + $0x168] sm:$0xff]
        %v2913 = vld [vmem:[%s657 + $0x170] sm:$0xff]
        %v2914 = vld [vmem:[%s657 + $0x178] sm:$0xff]
        %v2915 = vld [vmem:[%s657 + $0x180] sm:$0xff]
        %v2916 = vld [vmem:[%s657 + $0x188] sm:$0xff]
        %v2917 = vld [vmem:[%s657 + $0x190] sm:$0xff]
        %v2918 = vld [vmem:[%s657 + $0x198] sm:$0xff]
        %v2919 = vld [vmem:[%s657 + $0x1a0] sm:$0xff]
        %v2920 = vld [vmem:[%s657 + $0x1a8] sm:$0xff]
        %v2921 = vld [vmem:[%s657 + $0x1b0] sm:$0xff]
        %v2922 = vld [vmem:[%s657 + $0x1b8] sm:$0xff]
        %v2923 = vld [vmem:[%s657 + $0x1c0] sm:$0xff]
        %v2924 = vld [vmem:[%s657 + $0x1c8] sm:$0xff]
        %v2925 = vld [vmem:[%s657 + $0x1d0] sm:$0xff]
        %v2926 = vld [vmem:[%s657 + $0x1d8] sm:$0xff]
        %v2927 = vld [vmem:[%s657 + $0x1e0] sm:$0xff]
        %v2928 = vld [vmem:[%s657 + $0x1e8] sm:$0xff]
        %v2929 = vld [vmem:[%s657 + $0x1f0] sm:$0xff]
        %v2930 = vld [vmem:[%s657 + $0x1f8] sm:$0xff]
        %v2931 = vld [vmem:[%s657 + $0x200] sm:$0xff]
        %v2932 = vld [vmem:[%s657 + $0x208] sm:$0xff]
        %v2933 = vld [vmem:[%s657 + $0x210] sm:$0xff]
        %v2934 = vld [vmem:[%s657 + $0x218] sm:$0xff]
        %v2935 = vld [vmem:[%s657 + $0x220] sm:$0xff]
        %v2936 = vld [vmem:[%s657 + $0x228] sm:$0xff]
        %v2937 = vld [vmem:[%s657 + $0x230] sm:$0xff]
        %v2938 = vld [vmem:[%s657 + $0x238] sm:$0xff]
        %v2939 = vld [vmem:[%s657 + $0x240] sm:$0xff]
        %v2940 = vld [vmem:[%s657 + $0x248] sm:$0xff]
        %v2941 = vld [vmem:[%s657 + $0x250] sm:$0xff]
        %v2942 = vld [vmem:[%s657 + $0x258] sm:$0xff]
        %v2943 = vld [vmem:[%s657 + $0x260] sm:$0xff]
        %v2944 = vld [vmem:[%s657 + $0x268] sm:$0xff]
        %v2945 = vld [vmem:[%s657 + $0x270] sm:$0xff]
        %v2946 = vld [vmem:[%s657 + $0x278] sm:$0xff]
        %v2947 = vld [vmem:[%s657 + $0x280] sm:$0xff]
        %v2948 = vld [vmem:[%s657 + $0x288] sm:$0xff]
        %v2949 = vld [vmem:[%s657 + $0x290] sm:$0xff]
        %v2950 = vld [vmem:[%s657 + $0x298] sm:$0xff]
        %v2951 = vld [vmem:[%s657 + $0x2a0] sm:$0xff]
        %v2952 = vld [vmem:[%s657 + $0x2a8] sm:$0xff]
        %v2953 = vld [vmem:[%s657 + $0x2b0] sm:$0xff]
        %v2954 = vld [vmem:[%s657 + $0x2b8] sm:$0xff]
        %v2955 = vld [vmem:[%s657 + $0x2c0] sm:$0xff]
        %v2956 = vld [vmem:[%s657 + $0x2c8] sm:$0xff]
        %v2957 = vld [vmem:[%s657 + $0x2d0] sm:$0xff]
        %v2958 = vld [vmem:[%s657 + $0x2d8] sm:$0xff]
        %v2959 = vld [vmem:[%s657 + $0x2e0] sm:$0xff]
        %v2960 = vld [vmem:[%s657 + $0x2e8] sm:$0xff]
        %v2961 = vld [vmem:[%s657 + $0x2f0] sm:$0xff]
        %v2962 = vld [vmem:[%s657 + $0x2f8] sm:$0xff]
        %v2963 = vld [vmem:[%s657 + $0x300] sm:$0xff]
        %v2964 = vld [vmem:[%s657 + $0x308] sm:$0xff]
        %v2965 = vld [vmem:[%s657 + $0x310] sm:$0xff]
        %v2966 = vld [vmem:[%s657 + $0x318] sm:$0xff]
        %v2967 = vld [vmem:[%s657 + $0x320] sm:$0xff]
        %v2968 = vld [vmem:[%s657 + $0x328] sm:$0xff]
        %v2969 = vld [vmem:[%s657 + $0x330] sm:$0xff]
        %v2970 = vld [vmem:[%s657 + $0x338] sm:$0xff]
        %v2971 = vld [vmem:[%s657 + $0x340] sm:$0xff]
        %v2972 = vld [vmem:[%s657 + $0x348] sm:$0xff]
        %v2973 = vld [vmem:[%s657 + $0x350] sm:$0xff]
        %v2974 = vld [vmem:[%s657 + $0x358] sm:$0xff]
        %v2975 = vld [vmem:[%s657 + $0x360] sm:$0xff]
        %v2976 = vld [vmem:[%s657 + $0x368] sm:$0xff]
        %v2977 = vld [vmem:[%s657 + $0x370] sm:$0xff]
        %v2978 = vld [vmem:[%s657 + $0x378] sm:$0xff]
        %v2979 = vld [vmem:[%s657 + $0x380] sm:$0xff]
        %v2980 = vld [vmem:[%s657 + $0x388] sm:$0xff]
        %v2981 = vld [vmem:[%s657 + $0x390] sm:$0xff]
        %v2982 = vld [vmem:[%s657 + $0x398] sm:$0xff]
        %v2983 = vld [vmem:[%s657 + $0x3a0] sm:$0xff]
        %v2984 = vld [vmem:[%s657 + $0x3a8] sm:$0xff]
        %v2985 = vld [vmem:[%s657 + $0x3b0] sm:$0xff]
        %v2986 = vld [vmem:[%s657 + $0x3b8] sm:$0xff]
        %v2987 = vld [vmem:[%s657 + $0x3c0] sm:$0xff]
        %v2988 = vld [vmem:[%s657 + $0x3c8] sm:$0xff]
        %v2989 = vld [vmem:[%s657 + $0x3d0] sm:$0xff]
        %v2990 = vld [vmem:[%s657 + $0x3d8] sm:$0xff]
        %v2991 = vld [vmem:[%s657 + $0x3e0] sm:$0xff]
        %v2992 = vld [vmem:[%s657 + $0x3e8] sm:$0xff]
        %v2993 = vld [vmem:[%s657 + $0x3f0] sm:$0xff]
        %v2994 = vld [vmem:[%s657 + $0x3f8] sm:$0xff]
        %v2995 = vlaneseq
        %v2996 = vshrl.u32 %v2995, 7
        %v2997 = vsub.s32 3, %v2996
        %v2998 = vrot.slane %v817, %v2997
        %v2999 = vlaneseq
        %v3000 = vshrl.u32 %v2999, 7
        %v3001 = vsub.s32 3, %v3000
        %v3002 = vrot.slane %v818, %v3001
        %v3003 = vlaneseq
        %v3004 = vshrl.u32 %v3003, 7
        %v3005 = vsub.s32 3, %v3004
        %v3006 = vrot.slane %v819, %v3005
        %v3007 = vlaneseq
        %v3008 = vshrl.u32 %v3007, 7
        %v3009 = vsub.s32 3, %v3008
        %v3010 = vrot.slane %v820, %v3009
        %v3139 = vunpack.c.l.b16 %v2867
        %v3140 = vunpack.c.h.b16 %v2867
        %v3141 = vunpack.c.l.b16 %v2868
        %v3142 = vunpack.c.h.b16 %v2868
        %v3143 = vunpack.c.l.b16 %v2869
        %v3144 = vunpack.c.h.b16 %v2869
        %v3145 = vunpack.c.l.b16 %v2870
        %v3146 = vunpack.c.h.b16 %v2870
        %v3147 = vunpack.c.l.b16 %v2871
        %v3148 = vunpack.c.h.b16 %v2871
        %v3149 = vunpack.c.l.b16 %v2872
        %v3150 = vunpack.c.h.b16 %v2872
        %v3151 = vunpack.c.l.b16 %v2873
        %v3152 = vunpack.c.h.b16 %v2873
        %v3153 = vunpack.c.l.b16 %v2874
        %v3154 = vunpack.c.h.b16 %v2874
        %v3155 = vunpack.c.l.b16 %v2875
        %v3156 = vunpack.c.h.b16 %v2875
        %v3157 = vunpack.c.l.b16 %v2876
        %v3158 = vunpack.c.h.b16 %v2876
        %v3159 = vunpack.c.l.b16 %v2877
        %v3160 = vunpack.c.h.b16 %v2877
        %v3161 = vunpack.c.l.b16 %v2878
        %v3162 = vunpack.c.h.b16 %v2878
        %v3163 = vunpack.c.l.b16 %v2879
        %v3164 = vunpack.c.h.b16 %v2879
        %v3165 = vunpack.c.l.b16 %v2880
        %v3166 = vunpack.c.h.b16 %v2880
        %v3167 = vunpack.c.l.b16 %v2881
        %v3168 = vunpack.c.h.b16 %v2881
        %v3169 = vunpack.c.l.b16 %v2882
        %v3170 = vunpack.c.h.b16 %v2882
        %v3171 = vunpack.c.l.b16 %v2883
        %v3172 = vunpack.c.h.b16 %v2883
        %v3173 = vunpack.c.l.b16 %v2884
        %v3174 = vunpack.c.h.b16 %v2884
        %v3175 = vunpack.c.l.b16 %v2885
        %v3176 = vunpack.c.h.b16 %v2885
        %v3177 = vunpack.c.l.b16 %v2886
        %v3178 = vunpack.c.h.b16 %v2886
        %v3179 = vunpack.c.l.b16 %v2887
        %v3180 = vunpack.c.h.b16 %v2887
        %v3181 = vunpack.c.l.b16 %v2888
        %v3182 = vunpack.c.h.b16 %v2888
        %v3183 = vunpack.c.l.b16 %v2889
        %v3184 = vunpack.c.h.b16 %v2889
        %v3185 = vunpack.c.l.b16 %v2890
        %v3186 = vunpack.c.h.b16 %v2890
        %v3187 = vunpack.c.l.b16 %v2891
        %v3188 = vunpack.c.h.b16 %v2891
        %v3189 = vunpack.c.l.b16 %v2892
        %v3190 = vunpack.c.h.b16 %v2892
        %v3191 = vunpack.c.l.b16 %v2893
        %v3192 = vunpack.c.h.b16 %v2893
        %v3193 = vunpack.c.l.b16 %v2894
        %v3194 = vunpack.c.h.b16 %v2894
        %v3195 = vunpack.c.l.b16 %v2895
        %v3196 = vunpack.c.h.b16 %v2895
        %v3197 = vunpack.c.l.b16 %v2896
        %v3198 = vunpack.c.h.b16 %v2896
        %v3199 = vunpack.c.l.b16 %v2897
        %v3200 = vunpack.c.h.b16 %v2897
        %v3201 = vunpack.c.l.b16 %v2898
        %v3202 = vunpack.c.h.b16 %v2898
        %v3203 = vunpack.c.l.b16 %v2899
        %v3204 = vunpack.c.h.b16 %v2899
        %v3205 = vunpack.c.l.b16 %v2900
        %v3206 = vunpack.c.h.b16 %v2900
        %v3207 = vunpack.c.l.b16 %v2901
        %v3208 = vunpack.c.h.b16 %v2901
        %v3209 = vunpack.c.l.b16 %v2902
        %v3210 = vunpack.c.h.b16 %v2902
        %v3211 = vunpack.c.l.b16 %v2903
        %v3212 = vunpack.c.h.b16 %v2903
        %v3213 = vunpack.c.l.b16 %v2904
        %v3214 = vunpack.c.h.b16 %v2904
        %v3215 = vunpack.c.l.b16 %v2905
        %v3216 = vunpack.c.h.b16 %v2905
        %v3217 = vunpack.c.l.b16 %v2906
        %v3218 = vunpack.c.h.b16 %v2906
        %v3219 = vunpack.c.l.b16 %v2907
        %v3220 = vunpack.c.h.b16 %v2907
        %v3221 = vunpack.c.l.b16 %v2908
        %v3222 = vunpack.c.h.b16 %v2908
        %v3223 = vunpack.c.l.b16 %v2909
        %v3224 = vunpack.c.h.b16 %v2909
        %v3225 = vunpack.c.l.b16 %v2910
        %v3226 = vunpack.c.h.b16 %v2910
        %v3227 = vunpack.c.l.b16 %v2911
        %v3228 = vunpack.c.h.b16 %v2911
        %v3229 = vunpack.c.l.b16 %v2912
        %v3230 = vunpack.c.h.b16 %v2912
        %v3231 = vunpack.c.l.b16 %v2913
        %v3232 = vunpack.c.h.b16 %v2913
        %v3233 = vunpack.c.l.b16 %v2914
        %v3234 = vunpack.c.h.b16 %v2914
        %v3235 = vunpack.c.l.b16 %v2915
        %v3236 = vunpack.c.h.b16 %v2915
        %v3237 = vunpack.c.l.b16 %v2916
        %v3238 = vunpack.c.h.b16 %v2916
        %v3239 = vunpack.c.l.b16 %v2917
        %v3240 = vunpack.c.h.b16 %v2917
        %v3241 = vunpack.c.l.b16 %v2918
        %v3242 = vunpack.c.h.b16 %v2918
        %v3243 = vunpack.c.l.b16 %v2919
        %v3244 = vunpack.c.h.b16 %v2919
        %v3245 = vunpack.c.l.b16 %v2920
        %v3246 = vunpack.c.h.b16 %v2920
        %v3247 = vunpack.c.l.b16 %v2921
        %v3248 = vunpack.c.h.b16 %v2921
        %v3249 = vunpack.c.l.b16 %v2922
        %v3250 = vunpack.c.h.b16 %v2922
        %v3251 = vunpack.c.l.b16 %v2923
        %v3252 = vunpack.c.h.b16 %v2923
        %v3253 = vunpack.c.l.b16 %v2924
        %v3254 = vunpack.c.h.b16 %v2924
        %v3255 = vunpack.c.l.b16 %v2925
        %v3256 = vunpack.c.h.b16 %v2925
        %v3257 = vunpack.c.l.b16 %v2926
        %v3258 = vunpack.c.h.b16 %v2926
        %v3259 = vunpack.c.l.b16 %v2927
        %v3260 = vunpack.c.h.b16 %v2927
        %v3261 = vunpack.c.l.b16 %v2928
        %v3262 = vunpack.c.h.b16 %v2928
        %v3263 = vunpack.c.l.b16 %v2929
        %v3264 = vunpack.c.h.b16 %v2929
        %v3265 = vunpack.c.l.b16 %v2930
        %v3266 = vunpack.c.h.b16 %v2930
        %v3267 = vunpack.c.l.b16 %v2931
        %v3268 = vunpack.c.h.b16 %v2931
        %v3269 = vunpack.c.l.b16 %v2932
        %v3270 = vunpack.c.h.b16 %v2932
        %v3271 = vunpack.c.l.b16 %v2933
        %v3272 = vunpack.c.h.b16 %v2933
        %v3273 = vunpack.c.l.b16 %v2934
        %v3274 = vunpack.c.h.b16 %v2934
        %v3275 = vunpack.c.l.b16 %v2935
        %v3276 = vunpack.c.h.b16 %v2935
        %v3277 = vunpack.c.l.b16 %v2936
        %v3278 = vunpack.c.h.b16 %v2936
        %v3279 = vunpack.c.l.b16 %v2937
        %v3280 = vunpack.c.h.b16 %v2937
        %v3281 = vunpack.c.l.b16 %v2938
        %v3282 = vunpack.c.h.b16 %v2938
        %v3283 = vunpack.c.l.b16 %v2939
        %v3284 = vunpack.c.h.b16 %v2939
        %v3285 = vunpack.c.l.b16 %v2940
        %v3286 = vunpack.c.h.b16 %v2940
        %v3287 = vunpack.c.l.b16 %v2941
        %v3288 = vunpack.c.h.b16 %v2941
        %v3289 = vunpack.c.l.b16 %v2942
        %v3290 = vunpack.c.h.b16 %v2942
        %v3291 = vunpack.c.l.b16 %v2943
        %v3292 = vunpack.c.h.b16 %v2943
        %v3293 = vunpack.c.l.b16 %v2944
        %v3294 = vunpack.c.h.b16 %v2944
        %v3295 = vunpack.c.l.b16 %v2945
        %v3296 = vunpack.c.h.b16 %v2945
        %v3297 = vunpack.c.l.b16 %v2946
        %v3298 = vunpack.c.h.b16 %v2946
        %v3299 = vunpack.c.l.b16 %v2947
        %v3300 = vunpack.c.h.b16 %v2947
        %v3301 = vunpack.c.l.b16 %v2948
        %v3302 = vunpack.c.h.b16 %v2948
        %v3303 = vunpack.c.l.b16 %v2949
        %v3304 = vunpack.c.h.b16 %v2949
        %v3305 = vunpack.c.l.b16 %v2950
        %v3306 = vunpack.c.h.b16 %v2950
        %v3307 = vunpack.c.l.b16 %v2951
        %v3308 = vunpack.c.h.b16 %v2951
        %v3309 = vunpack.c.l.b16 %v2952
        %v3310 = vunpack.c.h.b16 %v2952
        %v3311 = vunpack.c.l.b16 %v2953
        %v3312 = vunpack.c.h.b16 %v2953
        %v3313 = vunpack.c.l.b16 %v2954
        %v3314 = vunpack.c.h.b16 %v2954
        %v3315 = vunpack.c.l.b16 %v2955
        %v3316 = vunpack.c.h.b16 %v2955
        %v3317 = vunpack.c.l.b16 %v2956
        %v3318 = vunpack.c.h.b16 %v2956
        %v3319 = vunpack.c.l.b16 %v2957
        %v3320 = vunpack.c.h.b16 %v2957
        %v3321 = vunpack.c.l.b16 %v2958
        %v3322 = vunpack.c.h.b16 %v2958
        %v3323 = vunpack.c.l.b16 %v2959
        %v3324 = vunpack.c.h.b16 %v2959
        %v3325 = vunpack.c.l.b16 %v2960
        %v3326 = vunpack.c.h.b16 %v2960
        %v3327 = vunpack.c.l.b16 %v2961
        %v3328 = vunpack.c.h.b16 %v2961
        %v3329 = vunpack.c.l.b16 %v2962
        %v3330 = vunpack.c.h.b16 %v2962
        %v3331 = vunpack.c.l.b16 %v2963
        %v3332 = vunpack.c.h.b16 %v2963
        %v3333 = vunpack.c.l.b16 %v2964
        %v3334 = vunpack.c.h.b16 %v2964
        %v3335 = vunpack.c.l.b16 %v2965
        %v3336 = vunpack.c.h.b16 %v2965
        %v3337 = vunpack.c.l.b16 %v2966
        %v3338 = vunpack.c.h.b16 %v2966
        %v3339 = vunpack.c.l.b16 %v2967
        %v3340 = vunpack.c.h.b16 %v2967
        %v3341 = vunpack.c.l.b16 %v2968
        %v3342 = vunpack.c.h.b16 %v2968
        %v3343 = vunpack.c.l.b16 %v2969
        %v3344 = vunpack.c.h.b16 %v2969
        %v3345 = vunpack.c.l.b16 %v2970
        %v3346 = vunpack.c.h.b16 %v2970
        %v3347 = vunpack.c.l.b16 %v2971
        %v3348 = vunpack.c.h.b16 %v2971
        %v3349 = vunpack.c.l.b16 %v2972
        %v3350 = vunpack.c.h.b16 %v2972
        %v3351 = vunpack.c.l.b16 %v2973
        %v3352 = vunpack.c.h.b16 %v2973
        %v3353 = vunpack.c.l.b16 %v2974
        %v3354 = vunpack.c.h.b16 %v2974
        %v3355 = vunpack.c.l.b16 %v2975
        %v3356 = vunpack.c.h.b16 %v2975
        %v3357 = vunpack.c.l.b16 %v2976
        %v3358 = vunpack.c.h.b16 %v2976
        %v3359 = vunpack.c.l.b16 %v2977
        %v3360 = vunpack.c.h.b16 %v2977
        %v3361 = vunpack.c.l.b16 %v2978
        %v3362 = vunpack.c.h.b16 %v2978
        %v3363 = vunpack.c.l.b16 %v2979
        %v3364 = vunpack.c.h.b16 %v2979
        %v3365 = vunpack.c.l.b16 %v2980
        %v3366 = vunpack.c.h.b16 %v2980
        %v3367 = vunpack.c.l.b16 %v2981
        %v3368 = vunpack.c.h.b16 %v2981
        %v3369 = vunpack.c.l.b16 %v2982
        %v3370 = vunpack.c.h.b16 %v2982
        %v3371 = vunpack.c.l.b16 %v2983
        %v3372 = vunpack.c.h.b16 %v2983
        %v3373 = vunpack.c.l.b16 %v2984
        %v3374 = vunpack.c.h.b16 %v2984
        %v3375 = vunpack.c.l.b16 %v2985
        %v3376 = vunpack.c.h.b16 %v2985
        %v3377 = vunpack.c.l.b16 %v2986
        %v3378 = vunpack.c.h.b16 %v2986
        %v3379 = vunpack.c.l.b16 %v2987
        %v3380 = vunpack.c.h.b16 %v2987
        %v3381 = vunpack.c.l.b16 %v2988
        %v3382 = vunpack.c.h.b16 %v2988
        %v3383 = vunpack.c.l.b16 %v2989
        %v3384 = vunpack.c.h.b16 %v2989
        %v3385 = vunpack.c.l.b16 %v2990
        %v3386 = vunpack.c.h.b16 %v2990
        %v3387 = vunpack.c.l.b16 %v2991
        %v3388 = vunpack.c.h.b16 %v2991
        %v3389 = vunpack.c.l.b16 %v2992
        %v3390 = vunpack.c.h.b16 %v2992
        %v3391 = vunpack.c.l.b16 %v2993
        %v3392 = vunpack.c.h.b16 %v2993
        %v3393 = vunpack.c.l.b16 %v2994
        %v3394 = vunpack.c.h.b16 %v2994
        %v3395 = vpack.c.b16 %v3143, %v3139
        %v3396 = vpack.c.b16 %v3144, %v3140
        %v3397 = vpack.c.b16 %v3145, %v3141
        %v3398 = vpack.c.b16 %v3146, %v3142
        %v3399 = vpack.c.b16 %v3151, %v3147
        %v3400 = vpack.c.b16 %v3152, %v3148
        %v3401 = vpack.c.b16 %v3153, %v3149
        %v3402 = vpack.c.b16 %v3154, %v3150
        %v3403 = vpack.c.b16 %v3159, %v3155
        %v3404 = vpack.c.b16 %v3160, %v3156
        %v3405 = vpack.c.b16 %v3161, %v3157
        %v3406 = vpack.c.b16 %v3162, %v3158
        %v3407 = vpack.c.b16 %v3167, %v3163
        %v3408 = vpack.c.b16 %v3168, %v3164
        %v3409 = vpack.c.b16 %v3169, %v3165
        %v3410 = vpack.c.b16 %v3170, %v3166
        %v3411 = vpack.c.b16 %v3175, %v3171
        %v3412 = vpack.c.b16 %v3176, %v3172
        %v3413 = vpack.c.b16 %v3177, %v3173
        %v3414 = vpack.c.b16 %v3178, %v3174
        %v3415 = vpack.c.b16 %v3183, %v3179
        %v3416 = vpack.c.b16 %v3184, %v3180
        %v3417 = vpack.c.b16 %v3185, %v3181
        %v3418 = vpack.c.b16 %v3186, %v3182
        %v3419 = vpack.c.b16 %v3191, %v3187
        %v3420 = vpack.c.b16 %v3192, %v3188
        %v3421 = vpack.c.b16 %v3193, %v3189
        %v3422 = vpack.c.b16 %v3194, %v3190
        %v3423 = vpack.c.b16 %v3199, %v3195
        %v3424 = vpack.c.b16 %v3200, %v3196
        %v3425 = vpack.c.b16 %v3201, %v3197
        %v3426 = vpack.c.b16 %v3202, %v3198
        %v3427 = vpack.c.b16 %v3207, %v3203
        %v3428 = vpack.c.b16 %v3208, %v3204
        %v3429 = vpack.c.b16 %v3209, %v3205
        %v3430 = vpack.c.b16 %v3210, %v3206
        %v3431 = vpack.c.b16 %v3215, %v3211
        %v3432 = vpack.c.b16 %v3216, %v3212
        %v3433 = vpack.c.b16 %v3217, %v3213
        %v3434 = vpack.c.b16 %v3218, %v3214
        %v3435 = vpack.c.b16 %v3223, %v3219
        %v3436 = vpack.c.b16 %v3224, %v3220
        %v3437 = vpack.c.b16 %v3225, %v3221
        %v3438 = vpack.c.b16 %v3226, %v3222
        %v3439 = vpack.c.b16 %v3231, %v3227
        %v3440 = vpack.c.b16 %v3232, %v3228
        %v3441 = vpack.c.b16 %v3233, %v3229
        %v3442 = vpack.c.b16 %v3234, %v3230
        %v3443 = vpack.c.b16 %v3239, %v3235
        %v3444 = vpack.c.b16 %v3240, %v3236
        %v3445 = vpack.c.b16 %v3241, %v3237
        %v3446 = vpack.c.b16 %v3242, %v3238
        %v3447 = vpack.c.b16 %v3247, %v3243
        %v3448 = vpack.c.b16 %v3248, %v3244
        %v3449 = vpack.c.b16 %v3249, %v3245
        %v3450 = vpack.c.b16 %v3250, %v3246
        %v3451 = vpack.c.b16 %v3255, %v3251
        %v3452 = vpack.c.b16 %v3256, %v3252
        %v3453 = vpack.c.b16 %v3257, %v3253
        %v3454 = vpack.c.b16 %v3258, %v3254
        %v3455 = vpack.c.b16 %v3263, %v3259
        %v3456 = vpack.c.b16 %v3264, %v3260
        %v3457 = vpack.c.b16 %v3265, %v3261
        %v3458 = vpack.c.b16 %v3266, %v3262
        %v3459 = vpack.c.b16 %v3271, %v3267
        %v3460 = vpack.c.b16 %v3272, %v3268
        %v3461 = vpack.c.b16 %v3273, %v3269
        %v3462 = vpack.c.b16 %v3274, %v3270
        %v3463 = vpack.c.b16 %v3279, %v3275
        %v3464 = vpack.c.b16 %v3280, %v3276
        %v3465 = vpack.c.b16 %v3281, %v3277
        %v3466 = vpack.c.b16 %v3282, %v3278
        %v3467 = vpack.c.b16 %v3287, %v3283
        %v3468 = vpack.c.b16 %v3288, %v3284
        %v3469 = vpack.c.b16 %v3289, %v3285
        %v3470 = vpack.c.b16 %v3290, %v3286
        %v3471 = vpack.c.b16 %v3295, %v3291
        %v3472 = vpack.c.b16 %v3296, %v3292
        %v3473 = vpack.c.b16 %v3297, %v3293
        %v3474 = vpack.c.b16 %v3298, %v3294
        %v3475 = vpack.c.b16 %v3303, %v3299
        %v3476 = vpack.c.b16 %v3304, %v3300
        %v3477 = vpack.c.b16 %v3305, %v3301
        %v3478 = vpack.c.b16 %v3306, %v3302
        %v3479 = vpack.c.b16 %v3311, %v3307
        %v3480 = vpack.c.b16 %v3312, %v3308
        %v3481 = vpack.c.b16 %v3313, %v3309
        %v3482 = vpack.c.b16 %v3314, %v3310
        %v3483 = vpack.c.b16 %v3319, %v3315
        %v3484 = vpack.c.b16 %v3320, %v3316
        %v3485 = vpack.c.b16 %v3321, %v3317
        %v3486 = vpack.c.b16 %v3322, %v3318
        %v3487 = vpack.c.b16 %v3327, %v3323
        %v3488 = vpack.c.b16 %v3328, %v3324
        %v3489 = vpack.c.b16 %v3329, %v3325
        %v3490 = vpack.c.b16 %v3330, %v3326
        %v3491 = vpack.c.b16 %v3335, %v3331
        %v3492 = vpack.c.b16 %v3336, %v3332
        %v3493 = vpack.c.b16 %v3337, %v3333
        %v3494 = vpack.c.b16 %v3338, %v3334
        %v3495 = vpack.c.b16 %v3343, %v3339
        %v3496 = vpack.c.b16 %v3344, %v3340
        %v3497 = vpack.c.b16 %v3345, %v3341
        %v3498 = vpack.c.b16 %v3346, %v3342
        %v3499 = vpack.c.b16 %v3351, %v3347
        %v3500 = vpack.c.b16 %v3352, %v3348
        %v3501 = vpack.c.b16 %v3353, %v3349
        %v3502 = vpack.c.b16 %v3354, %v3350
        %v3503 = vpack.c.b16 %v3359, %v3355
        %v3504 = vpack.c.b16 %v3360, %v3356
        %v3505 = vpack.c.b16 %v3361, %v3357
        %v3506 = vpack.c.b16 %v3362, %v3358
        %v3507 = vpack.c.b16 %v3367, %v3363
        %v3508 = vpack.c.b16 %v3368, %v3364
        %v3509 = vpack.c.b16 %v3369, %v3365
        %v3510 = vpack.c.b16 %v3370, %v3366
        %v3511 = vpack.c.b16 %v3375, %v3371
        %v3512 = vpack.c.b16 %v3376, %v3372
        %v3513 = vpack.c.b16 %v3377, %v3373
        %v3514 = vpack.c.b16 %v3378, %v3374
        %v3515 = vpack.c.b16 %v3383, %v3379
        %v3516 = vpack.c.b16 %v3384, %v3380
        %v3517 = vpack.c.b16 %v3385, %v3381
        %v3518 = vpack.c.b16 %v3386, %v3382
        %v3519 = vpack.c.b16 %v3391, %v3387
        %v3520 = vpack.c.b16 %v3392, %v3388
        %v3521 = vpack.c.b16 %v3393, %v3389
        %v3522 = vpack.c.b16 %v3394, %v3390
        %3651 = vmatprep.subr.bf16.mxu0 %v3396
        %3652 = vmatpush1.bf16.msra.mxu0 %v3395
        %3653 = vmatprep.subr.bf16.mxu0 %v3400
        %3654 = vmatpush1.bf16.msra.mxu0 %v3399
        %3655 = vmatprep.subr.bf16.mxu0 %v3404
        %3656 = vmatpush1.bf16.msra.mxu0 %v3403
        %3657 = vmatprep.subr.bf16.mxu0 %v3408
        %3658 = vmatpush1.bf16.msra.mxu0 %v3407
        %3659 = vmatprep.subr.bf16.mxu0 %v3412
        %3660 = vmatpush1.bf16.msra.mxu0 %v3411
        %3661 = vmatprep.subr.bf16.mxu0 %v3416
        %3662 = vmatpush1.bf16.msra.mxu0 %v3415
        %3663 = vmatprep.subr.bf16.mxu0 %v3420
        %3664 = vmatpush1.bf16.msra.mxu0 %v3419
        %3665 = vmatprep.subr.bf16.mxu0 %v3424
        %3666 = vmatpush1.bf16.msra.mxu0 %v3423
        %3667 = vmatprep.subr.bf16.mxu0 %v3428
        %3668 = vmatpush1.bf16.msra.mxu0 %v3427
        %3669 = vmatprep.subr.bf16.mxu0 %v3432
        %3670 = vmatpush1.bf16.msra.mxu0 %v3431
        %3671 = vmatprep.subr.bf16.mxu0 %v3436
        %3672 = vmatpush1.bf16.msra.mxu0 %v3435
        %3673 = vmatprep.subr.bf16.mxu0 %v3440
        %3674 = vmatpush1.bf16.msra.mxu0 %v3439
        %3675 = vmatprep.subr.bf16.mxu0 %v3444
        %3676 = vmatpush1.bf16.msra.mxu0 %v3443
        %3677 = vmatprep.subr.bf16.mxu0 %v3448
        %3678 = vmatpush1.bf16.msra.mxu0 %v3447
        %3679 = vmatprep.subr.bf16.mxu0 %v3452
        %3680 = vmatpush1.bf16.msra.mxu0 %v3451
        %3681 = vmatprep.subr.bf16.mxu0 %v3456
        %3682 = vmatpush1.bf16.msra.mxu0 %v3455
        %3683 = vmatprep.mubr.bf16.mxu0 %v2864
        %3684 = vmatmul.mubr.bf16.gmra.mrb[0].mxu0 %v2863
        %v3685 = vpop.f32.mrb[0].mxu0
        %v3686 = vadd.f32 %v2998, %v3685
        %v3687 = vpop.f32.mrb[0].mxu0
        %v3688 = vadd.f32 %v3002, %v3687
        %v3689 = vpop.f32.mrb[0].mxu0
        %v3690 = vpop.f32.mrb[0].mxu0
        %3691 = vdwg.mxu0
        %3692 = vmatprep.subr.bf16.mxu0 %v3460
        %3693 = vmatpush1.bf16.msra.mxu0 %v3459
        %3694 = vmatprep.subr.bf16.mxu0 %v3464
        %3695 = vmatpush1.bf16.msra.mxu0 %v3463
        %3696 = vmatprep.subr.bf16.mxu0 %v3468
        %3697 = vmatpush1.bf16.msra.mxu0 %v3467
        %3698 = vmatprep.subr.bf16.mxu0 %v3472
        %3699 = vmatpush1.bf16.msra.mxu0 %v3471
        %3700 = vmatprep.subr.bf16.mxu0 %v3476
        %3701 = vmatpush1.bf16.msra.mxu0 %v3475
        %3702 = vmatprep.subr.bf16.mxu0 %v3480
        %3703 = vmatpush1.bf16.msra.mxu0 %v3479
        %3704 = vmatprep.subr.bf16.mxu0 %v3484
        %3705 = vmatpush1.bf16.msra.mxu0 %v3483
        %3706 = vmatprep.subr.bf16.mxu0 %v3488
        %3707 = vmatpush1.bf16.msra.mxu0 %v3487
        %3708 = vmatprep.subr.bf16.mxu0 %v3492
        %3709 = vmatpush1.bf16.msra.mxu0 %v3491
        %3710 = vmatprep.subr.bf16.mxu0 %v3496
        %3711 = vmatpush1.bf16.msra.mxu0 %v3495
        %3712 = vmatprep.subr.bf16.mxu0 %v3500
        %3713 = vmatpush1.bf16.msra.mxu0 %v3499
        %3714 = vmatprep.subr.bf16.mxu0 %v3504
        %3715 = vmatpush1.bf16.msra.mxu0 %v3503
        %3716 = vmatprep.subr.bf16.mxu0 %v3508
        %3717 = vmatpush1.bf16.msra.mxu0 %v3507
        %3718 = vmatprep.subr.bf16.mxu0 %v3512
        %3719 = vmatpush1.bf16.msra.mxu0 %v3511
        %3720 = vmatprep.subr.bf16.mxu0 %v3516
        %3721 = vmatpush1.bf16.msra.mxu0 %v3515
        %3722 = vmatprep.subr.bf16.mxu0 %v3520
        %3723 = vmatpush1.bf16.msra.mxu0 %v3519
        %3724 = vmatprep.mubr.bf16.mxu0 %v2866
        %3725 = vmatmul.mubr.bf16.gmra.mrb[0].mxu0 %v2865
        %v3726 = vpop.f32.mrb[0].mxu0
        %v3727 = vadd.f32 %v3686, %v3726
        %v3728 = vpop.f32.mrb[0].mxu0
        %v3729 = vadd.f32 %v3688, %v3728
        %v3730 = vpop.f32.mrb[0].mxu0
        %v3731 = vpop.f32.mrb[0].mxu0
        %3732 = vdwg.mxu0
        %3733 = vmatprep.subr.bf16.mxu0 %v3398
        %3734 = vmatpush1.bf16.msra.mxu0 %v3397
        %3735 = vmatprep.subr.bf16.mxu0 %v3402
        %3736 = vmatpush1.bf16.msra.mxu0 %v3401
        %3737 = vmatprep.subr.bf16.mxu0 %v3406
        %3738 = vmatpush1.bf16.msra.mxu0 %v3405
        %3739 = vmatprep.subr.bf16.mxu0 %v3410
        %3740 = vmatpush1.bf16.msra.mxu0 %v3409
        %3741 = vmatprep.subr.bf16.mxu0 %v3414
        %3742 = vmatpush1.bf16.msra.mxu0 %v3413
        %3743 = vmatprep.subr.bf16.mxu0 %v3418
        %3744 = vmatpush1.bf16.msra.mxu0 %v3417
        %3745 = vmatprep.subr.bf16.mxu0 %v3422
        %3746 = vmatpush1.bf16.msra.mxu0 %v3421
        %3747 = vmatprep.subr.bf16.mxu0 %v3426
        %3748 = vmatpush1.bf16.msra.mxu0 %v3425
        %3749 = vmatprep.subr.bf16.mxu0 %v3430
        %3750 = vmatpush1.bf16.msra.mxu0 %v3429
        %3751 = vmatprep.subr.bf16.mxu0 %v3434
        %3752 = vmatpush1.bf16.msra.mxu0 %v3433
        %3753 = vmatprep.subr.bf16.mxu0 %v3438
        %3754 = vmatpush1.bf16.msra.mxu0 %v3437
        %3755 = vmatprep.subr.bf16.mxu0 %v3442
        %3756 = vmatpush1.bf16.msra.mxu0 %v3441
        %3757 = vmatprep.subr.bf16.mxu0 %v3446
        %3758 = vmatpush1.bf16.msra.mxu0 %v3445
        %3759 = vmatprep.subr.bf16.mxu0 %v3450
        %3760 = vmatpush1.bf16.msra.mxu0 %v3449
        %3761 = vmatprep.subr.bf16.mxu0 %v3454
        %3762 = vmatpush1.bf16.msra.mxu0 %v3453
        %3763 = vmatprep.subr.bf16.mxu0 %v3458
        %3764 = vmatpush1.bf16.msra.mxu0 %v3457
        %3765 = vmatprep.mubr.bf16.mxu0 %v2864
        %3766 = vmatmul.mubr.bf16.gmra.mrb[0].mxu0 %v2863
        %v3767 = vpop.f32.mrb[0].mxu0
        %v3768 = vadd.f32 %v3006, %v3767
        %v3769 = vpop.f32.mrb[0].mxu0
        %v3770 = vadd.f32 %v3010, %v3769
        %v3771 = vpop.f32.mrb[0].mxu0
        %v3772 = vpop.f32.mrb[0].mxu0
        %3773 = vdwg.mxu0
        %3774 = vmatprep.subr.bf16.mxu0 %v3462
        %3775 = vmatpush1.bf16.msra.mxu0 %v3461
        %3776 = vmatprep.subr.bf16.mxu0 %v3466
        %3777 = vmatpush1.bf16.msra.mxu0 %v3465
        %3778 = vmatprep.subr.bf16.mxu0 %v3470
        %3779 = vmatpush1.bf16.msra.mxu0 %v3469
        %3780 = vmatprep.subr.bf16.mxu0 %v3474
        %3781 = vmatpush1.bf16.msra.mxu0 %v3473
        %3782 = vmatprep.subr.bf16.mxu0 %v3478
        %3783 = vmatpush1.bf16.msra.mxu0 %v3477
        %3784 = vmatprep.subr.bf16.mxu0 %v3482
        %3785 = vmatpush1.bf16.msra.mxu0 %v3481
        %3786 = vmatprep.subr.bf16.mxu0 %v3486
        %3787 = vmatpush1.bf16.msra.mxu0 %v3485
        %3788 = vmatprep.subr.bf16.mxu0 %v3490
        %3789 = vmatpush1.bf16.msra.mxu0 %v3489
        %3790 = vmatprep.subr.bf16.mxu0 %v3494
        %3791 = vmatpush1.bf16.msra.mxu0 %v3493
        %3792 = vmatprep.subr.bf16.mxu0 %v3498
        %3793 = vmatpush1.bf16.msra.mxu0 %v3497
        %3794 = vmatprep.subr.bf16.mxu0 %v3502
        %3795 = vmatpush1.bf16.msra.mxu0 %v3501
        %3796 = vmatprep.subr.bf16.mxu0 %v3506
        %3797 = vmatpush1.bf16.msra.mxu0 %v3505
        %3798 = vmatprep.subr.bf16.mxu0 %v3510
        %3799 = vmatpush1.bf16.msra.mxu0 %v3509
        %3800 = vmatprep.subr.bf16.mxu0 %v3514
        %3801 = vmatpush1.bf16.msra.mxu0 %v3513
        %3802 = vmatprep.subr.bf16.mxu0 %v3518
        %3803 = vmatpush1.bf16.msra.mxu0 %v3517
        %3804 = vmatprep.subr.bf16.mxu0 %v3522
        %3805 = vmatpush1.bf16.msra.mxu0 %v3521
        %3806 = vmatprep.mubr.bf16.mxu0 %v2866
        %3807 = vmatmul.mubr.bf16.gmra.mrb[0].mxu0 %v2865
        %v3808 = vpop.f32.mrb[0].mxu0
        %v3809 = vadd.f32 %v3768, %v3808
        %v3810 = vpop.f32.mrb[0].mxu0
        %v3811 = vadd.f32 %v3770, %v3810
        %v3812 = vpop.f32.mrb[0].mxu0
        %v3813 = vpop.f32.mrb[0].mxu0
        %3814 = vdwg.mxu0
        %v3815 = vmax.f32 %v3727, 0.0
        %v3816 = vmax.f32 %v3729, 0.0
        %v3817 = vmax.f32 %v3809, 0.0
        %v3818 = vmax.f32 %v3811, 0.0
        %v3819 = vpack.c.bf16 %v3815, %v3815
        %v3820 = vpack.c.bf16 %v3816, %v3816
        %v3821 = vpack.c.bf16 %v3817, %v3817
        %v3822 = vpack.c.bf16 %v3818, %v3818
        %v3823 = vld [vmem:[%s666] sm:$0xff]
        %v3824 = vld [vmem:[%s666 + $0x8] sm:$0xff]
        %v3825 = vld [vmem:[%s666 + $0x10] sm:$0xff]
        %v3826 = vld [vmem:[%s666 + $0x18] sm:$0xff]
        %v3827 = vld [vmem:[%s666 + $0x20] sm:$0xff]
        %v3828 = vld [vmem:[%s666 + $0x28] sm:$0xff]
        %v3829 = vld [vmem:[%s666 + $0x30] sm:$0xff]
        %v3830 = vld [vmem:[%s666 + $0x38] sm:$0xff]
        %v3831 = vld [vmem:[%s666 + $0x40] sm:$0xff]
        %v3832 = vld [vmem:[%s666 + $0x48] sm:$0xff]
        %v3833 = vld [vmem:[%s666 + $0x50] sm:$0xff]
        %v3834 = vld [vmem:[%s666 + $0x58] sm:$0xff]
        %v3835 = vld [vmem:[%s666 + $0x60] sm:$0xff]
        %v3836 = vld [vmem:[%s666 + $0x68] sm:$0xff]
        %v3837 = vld [vmem:[%s666 + $0x70] sm:$0xff]
        %v3838 = vld [vmem:[%s666 + $0x78] sm:$0xff]
        %v3839 = vld [vmem:[%s666 + $0x80] sm:$0xff]
        %v3840 = vld [vmem:[%s666 + $0x88] sm:$0xff]
        %v3841 = vld [vmem:[%s666 + $0x90] sm:$0xff]
        %v3842 = vld [vmem:[%s666 + $0x98] sm:$0xff]
        %v3843 = vld [vmem:[%s666 + $0xa0] sm:$0xff]
        %v3844 = vld [vmem:[%s666 + $0xa8] sm:$0xff]
        %v3845 = vld [vmem:[%s666 + $0xb0] sm:$0xff]
        %v3846 = vld [vmem:[%s666 + $0xb8] sm:$0xff]
        %v3847 = vld [vmem:[%s666 + $0xc0] sm:$0xff]
        %v3848 = vld [vmem:[%s666 + $0xc8] sm:$0xff]
        %v3849 = vld [vmem:[%s666 + $0xd0] sm:$0xff]
        %v3850 = vld [vmem:[%s666 + $0xd8] sm:$0xff]
        %v3851 = vld [vmem:[%s666 + $0xe0] sm:$0xff]
        %v3852 = vld [vmem:[%s666 + $0xe8] sm:$0xff]
        %v3853 = vld [vmem:[%s666 + $0xf0] sm:$0xff]
        %v3854 = vld [vmem:[%s666 + $0xf8] sm:$0xff]
        %v3855 = vld [vmem:[%s666 + $0x100] sm:$0xff]
        %v3856 = vld [vmem:[%s666 + $0x108] sm:$0xff]
        %v3857 = vld [vmem:[%s666 + $0x110] sm:$0xff]
        %v3858 = vld [vmem:[%s666 + $0x118] sm:$0xff]
        %v3859 = vld [vmem:[%s666 + $0x120] sm:$0xff]
        %v3860 = vld [vmem:[%s666 + $0x128] sm:$0xff]
        %v3861 = vld [vmem:[%s666 + $0x130] sm:$0xff]
        %v3862 = vld [vmem:[%s666 + $0x138] sm:$0xff]
        %v3863 = vld [vmem:[%s666 + $0x140] sm:$0xff]
        %v3864 = vld [vmem:[%s666 + $0x148] sm:$0xff]
        %v3865 = vld [vmem:[%s666 + $0x150] sm:$0xff]
        %v3866 = vld [vmem:[%s666 + $0x158] sm:$0xff]
        %v3867 = vld [vmem:[%s666 + $0x160] sm:$0xff]
        %v3868 = vld [vmem:[%s666 + $0x168] sm:$0xff]
        %v3869 = vld [vmem:[%s666 + $0x170] sm:$0xff]
        %v3870 = vld [vmem:[%s666 + $0x178] sm:$0xff]
        %v3871 = vld [vmem:[%s666 + $0x180] sm:$0xff]
        %v3872 = vld [vmem:[%s666 + $0x188] sm:$0xff]
        %v3873 = vld [vmem:[%s666 + $0x190] sm:$0xff]
        %v3874 = vld [vmem:[%s666 + $0x198] sm:$0xff]
        %v3875 = vld [vmem:[%s666 + $0x1a0] sm:$0xff]
        %v3876 = vld [vmem:[%s666 + $0x1a8] sm:$0xff]
        %v3877 = vld [vmem:[%s666 + $0x1b0] sm:$0xff]
        %v3878 = vld [vmem:[%s666 + $0x1b8] sm:$0xff]
        %v3879 = vld [vmem:[%s666 + $0x1c0] sm:$0xff]
        %v3880 = vld [vmem:[%s666 + $0x1c8] sm:$0xff]
        %v3881 = vld [vmem:[%s666 + $0x1d0] sm:$0xff]
        %v3882 = vld [vmem:[%s666 + $0x1d8] sm:$0xff]
        %v3883 = vld [vmem:[%s666 + $0x1e0] sm:$0xff]
        %v3884 = vld [vmem:[%s666 + $0x1e8] sm:$0xff]
        %v3885 = vld [vmem:[%s666 + $0x1f0] sm:$0xff]
        %v3886 = vld [vmem:[%s666 + $0x1f8] sm:$0xff]
        %v3887 = vld [vmem:[%s666 + $0x200] sm:$0xff]
        %v3888 = vld [vmem:[%s666 + $0x208] sm:$0xff]
        %v3889 = vld [vmem:[%s666 + $0x210] sm:$0xff]
        %v3890 = vld [vmem:[%s666 + $0x218] sm:$0xff]
        %v3891 = vld [vmem:[%s666 + $0x220] sm:$0xff]
        %v3892 = vld [vmem:[%s666 + $0x228] sm:$0xff]
        %v3893 = vld [vmem:[%s666 + $0x230] sm:$0xff]
        %v3894 = vld [vmem:[%s666 + $0x238] sm:$0xff]
        %v3895 = vld [vmem:[%s666 + $0x240] sm:$0xff]
        %v3896 = vld [vmem:[%s666 + $0x248] sm:$0xff]
        %v3897 = vld [vmem:[%s666 + $0x250] sm:$0xff]
        %v3898 = vld [vmem:[%s666 + $0x258] sm:$0xff]
        %v3899 = vld [vmem:[%s666 + $0x260] sm:$0xff]
        %v3900 = vld [vmem:[%s666 + $0x268] sm:$0xff]
        %v3901 = vld [vmem:[%s666 + $0x270] sm:$0xff]
        %v3902 = vld [vmem:[%s666 + $0x278] sm:$0xff]
        %v3903 = vld [vmem:[%s666 + $0x280] sm:$0xff]
        %v3904 = vld [vmem:[%s666 + $0x288] sm:$0xff]
        %v3905 = vld [vmem:[%s666 + $0x290] sm:$0xff]
        %v3906 = vld [vmem:[%s666 + $0x298] sm:$0xff]
        %v3907 = vld [vmem:[%s666 + $0x2a0] sm:$0xff]
        %v3908 = vld [vmem:[%s666 + $0x2a8] sm:$0xff]
        %v3909 = vld [vmem:[%s666 + $0x2b0] sm:$0xff]
        %v3910 = vld [vmem:[%s666 + $0x2b8] sm:$0xff]
        %v3911 = vld [vmem:[%s666 + $0x2c0] sm:$0xff]
        %v3912 = vld [vmem:[%s666 + $0x2c8] sm:$0xff]
        %v3913 = vld [vmem:[%s666 + $0x2d0] sm:$0xff]
        %v3914 = vld [vmem:[%s666 + $0x2d8] sm:$0xff]
        %v3915 = vld [vmem:[%s666 + $0x2e0] sm:$0xff]
        %v3916 = vld [vmem:[%s666 + $0x2e8] sm:$0xff]
        %v3917 = vld [vmem:[%s666 + $0x2f0] sm:$0xff]
        %v3918 = vld [vmem:[%s666 + $0x2f8] sm:$0xff]
        %v3919 = vld [vmem:[%s666 + $0x300] sm:$0xff]
        %v3920 = vld [vmem:[%s666 + $0x308] sm:$0xff]
        %v3921 = vld [vmem:[%s666 + $0x310] sm:$0xff]
        %v3922 = vld [vmem:[%s666 + $0x318] sm:$0xff]
        %v3923 = vld [vmem:[%s666 + $0x320] sm:$0xff]
        %v3924 = vld [vmem:[%s666 + $0x328] sm:$0xff]
        %v3925 = vld [vmem:[%s666 + $0x330] sm:$0xff]
        %v3926 = vld [vmem:[%s666 + $0x338] sm:$0xff]
        %v3927 = vld [vmem:[%s666 + $0x340] sm:$0xff]
        %v3928 = vld [vmem:[%s666 + $0x348] sm:$0xff]
        %v3929 = vld [vmem:[%s666 + $0x350] sm:$0xff]
        %v3930 = vld [vmem:[%s666 + $0x358] sm:$0xff]
        %v3931 = vld [vmem:[%s666 + $0x360] sm:$0xff]
        %v3932 = vld [vmem:[%s666 + $0x368] sm:$0xff]
        %v3933 = vld [vmem:[%s666 + $0x370] sm:$0xff]
        %v3934 = vld [vmem:[%s666 + $0x378] sm:$0xff]
        %v3935 = vld [vmem:[%s666 + $0x380] sm:$0xff]
        %v3936 = vld [vmem:[%s666 + $0x388] sm:$0xff]
        %v3937 = vld [vmem:[%s666 + $0x390] sm:$0xff]
        %v3938 = vld [vmem:[%s666 + $0x398] sm:$0xff]
        %v3939 = vld [vmem:[%s666 + $0x3a0] sm:$0xff]
        %v3940 = vld [vmem:[%s666 + $0x3a8] sm:$0xff]
        %v3941 = vld [vmem:[%s666 + $0x3b0] sm:$0xff]
        %v3942 = vld [vmem:[%s666 + $0x3b8] sm:$0xff]
        %v3943 = vld [vmem:[%s666 + $0x3c0] sm:$0xff]
        %v3944 = vld [vmem:[%s666 + $0x3c8] sm:$0xff]
        %v3945 = vld [vmem:[%s666 + $0x3d0] sm:$0xff]
        %v3946 = vld [vmem:[%s666 + $0x3d8] sm:$0xff]
        %v3947 = vld [vmem:[%s666 + $0x3e0] sm:$0xff]
        %v3948 = vld [vmem:[%s666 + $0x3e8] sm:$0xff]
        %v3949 = vld [vmem:[%s666 + $0x3f0] sm:$0xff]
        %v3950 = vld [vmem:[%s666 + $0x3f8] sm:$0xff]
        %v3951 = vlaneseq
        %v3952 = vshrl.u32 %v3951, 7
        %v3953 = vsub.s32 4, %v3952
        %v3954 = vrot.slane %v817, %v3953
        %v3955 = vlaneseq
        %v3956 = vshrl.u32 %v3955, 7
        %v3957 = vsub.s32 4, %v3956
        %v3958 = vrot.slane %v818, %v3957
        %v3959 = vlaneseq
        %v3960 = vshrl.u32 %v3959, 7
        %v3961 = vsub.s32 4, %v3960
        %v3962 = vrot.slane %v819, %v3961
        %v3963 = vlaneseq
        %v3964 = vshrl.u32 %v3963, 7
        %v3965 = vsub.s32 4, %v3964
        %v3966 = vrot.slane %v820, %v3965
        %v4095 = vunpack.c.l.b16 %v3823
        %v4096 = vunpack.c.h.b16 %v3823
        %v4097 = vunpack.c.l.b16 %v3824
        %v4098 = vunpack.c.h.b16 %v3824
        %v4099 = vunpack.c.l.b16 %v3825
        %v4100 = vunpack.c.h.b16 %v3825
        %v4101 = vunpack.c.l.b16 %v3826
        %v4102 = vunpack.c.h.b16 %v3826
        %v4103 = vunpack.c.l.b16 %v3827
        %v4104 = vunpack.c.h.b16 %v3827
        %v4105 = vunpack.c.l.b16 %v3828
        %v4106 = vunpack.c.h.b16 %v3828
        %v4107 = vunpack.c.l.b16 %v3829
        %v4108 = vunpack.c.h.b16 %v3829
        %v4109 = vunpack.c.l.b16 %v3830
        %v4110 = vunpack.c.h.b16 %v3830
        %v4111 = vunpack.c.l.b16 %v3831
        %v4112 = vunpack.c.h.b16 %v3831
        %v4113 = vunpack.c.l.b16 %v3832
        %v4114 = vunpack.c.h.b16 %v3832
        %v4115 = vunpack.c.l.b16 %v3833
        %v4116 = vunpack.c.h.b16 %v3833
        %v4117 = vunpack.c.l.b16 %v3834
        %v4118 = vunpack.c.h.b16 %v3834
        %v4119 = vunpack.c.l.b16 %v3835
        %v4120 = vunpack.c.h.b16 %v3835
        %v4121 = vunpack.c.l.b16 %v3836
        %v4122 = vunpack.c.h.b16 %v3836
        %v4123 = vunpack.c.l.b16 %v3837
        %v4124 = vunpack.c.h.b16 %v3837
        %v4125 = vunpack.c.l.b16 %v3838
        %v4126 = vunpack.c.h.b16 %v3838
        %v4127 = vunpack.c.l.b16 %v3839
        %v4128 = vunpack.c.h.b16 %v3839
        %v4129 = vunpack.c.l.b16 %v3840
        %v4130 = vunpack.c.h.b16 %v3840
        %v4131 = vunpack.c.l.b16 %v3841
        %v4132 = vunpack.c.h.b16 %v3841
        %v4133 = vunpack.c.l.b16 %v3842
        %v4134 = vunpack.c.h.b16 %v3842
        %v4135 = vunpack.c.l.b16 %v3843
        %v4136 = vunpack.c.h.b16 %v3843
        %v4137 = vunpack.c.l.b16 %v3844
        %v4138 = vunpack.c.h.b16 %v3844
        %v4139 = vunpack.c.l.b16 %v3845
        %v4140 = vunpack.c.h.b16 %v3845
        %v4141 = vunpack.c.l.b16 %v3846
        %v4142 = vunpack.c.h.b16 %v3846
        %v4143 = vunpack.c.l.b16 %v3847
        %v4144 = vunpack.c.h.b16 %v3847
        %v4145 = vunpack.c.l.b16 %v3848
        %v4146 = vunpack.c.h.b16 %v3848
        %v4147 = vunpack.c.l.b16 %v3849
        %v4148 = vunpack.c.h.b16 %v3849
        %v4149 = vunpack.c.l.b16 %v3850
        %v4150 = vunpack.c.h.b16 %v3850
        %v4151 = vunpack.c.l.b16 %v3851
        %v4152 = vunpack.c.h.b16 %v3851
        %v4153 = vunpack.c.l.b16 %v3852
        %v4154 = vunpack.c.h.b16 %v3852
        %v4155 = vunpack.c.l.b16 %v3853
        %v4156 = vunpack.c.h.b16 %v3853
        %v4157 = vunpack.c.l.b16 %v3854
        %v4158 = vunpack.c.h.b16 %v3854
        %v4159 = vunpack.c.l.b16 %v3855
        %v4160 = vunpack.c.h.b16 %v3855
        %v4161 = vunpack.c.l.b16 %v3856
        %v4162 = vunpack.c.h.b16 %v3856
        %v4163 = vunpack.c.l.b16 %v3857
        %v4164 = vunpack.c.h.b16 %v3857
        %v4165 = vunpack.c.l.b16 %v3858
        %v4166 = vunpack.c.h.b16 %v3858
        %v4167 = vunpack.c.l.b16 %v3859
        %v4168 = vunpack.c.h.b16 %v3859
        %v4169 = vunpack.c.l.b16 %v3860
        %v4170 = vunpack.c.h.b16 %v3860
        %v4171 = vunpack.c.l.b16 %v3861
        %v4172 = vunpack.c.h.b16 %v3861
        %v4173 = vunpack.c.l.b16 %v3862
        %v4174 = vunpack.c.h.b16 %v3862
        %v4175 = vunpack.c.l.b16 %v3863
        %v4176 = vunpack.c.h.b16 %v3863
        %v4177 = vunpack.c.l.b16 %v3864
        %v4178 = vunpack.c.h.b16 %v3864
        %v4179 = vunpack.c.l.b16 %v3865
        %v4180 = vunpack.c.h.b16 %v3865
        %v4181 = vunpack.c.l.b16 %v3866
        %v4182 = vunpack.c.h.b16 %v3866
        %v4183 = vunpack.c.l.b16 %v3867
        %v4184 = vunpack.c.h.b16 %v3867
        %v4185 = vunpack.c.l.b16 %v3868
        %v4186 = vunpack.c.h.b16 %v3868
        %v4187 = vunpack.c.l.b16 %v3869
        %v4188 = vunpack.c.h.b16 %v3869
        %v4189 = vunpack.c.l.b16 %v3870
        %v4190 = vunpack.c.h.b16 %v3870
        %v4191 = vunpack.c.l.b16 %v3871
        %v4192 = vunpack.c.h.b16 %v3871
        %v4193 = vunpack.c.l.b16 %v3872
        %v4194 = vunpack.c.h.b16 %v3872
        %v4195 = vunpack.c.l.b16 %v3873
        %v4196 = vunpack.c.h.b16 %v3873
        %v4197 = vunpack.c.l.b16 %v3874
        %v4198 = vunpack.c.h.b16 %v3874
        %v4199 = vunpack.c.l.b16 %v3875
        %v4200 = vunpack.c.h.b16 %v3875
        %v4201 = vunpack.c.l.b16 %v3876
        %v4202 = vunpack.c.h.b16 %v3876
        %v4203 = vunpack.c.l.b16 %v3877
        %v4204 = vunpack.c.h.b16 %v3877
        %v4205 = vunpack.c.l.b16 %v3878
        %v4206 = vunpack.c.h.b16 %v3878
        %v4207 = vunpack.c.l.b16 %v3879
        %v4208 = vunpack.c.h.b16 %v3879
        %v4209 = vunpack.c.l.b16 %v3880
        %v4210 = vunpack.c.h.b16 %v3880
        %v4211 = vunpack.c.l.b16 %v3881
        %v4212 = vunpack.c.h.b16 %v3881
        %v4213 = vunpack.c.l.b16 %v3882
        %v4214 = vunpack.c.h.b16 %v3882
        %v4215 = vunpack.c.l.b16 %v3883
        %v4216 = vunpack.c.h.b16 %v3883
        %v4217 = vunpack.c.l.b16 %v3884
        %v4218 = vunpack.c.h.b16 %v3884
        %v4219 = vunpack.c.l.b16 %v3885
        %v4220 = vunpack.c.h.b16 %v3885
        %v4221 = vunpack.c.l.b16 %v3886
        %v4222 = vunpack.c.h.b16 %v3886
        %v4223 = vunpack.c.l.b16 %v3887
        %v4224 = vunpack.c.h.b16 %v3887
        %v4225 = vunpack.c.l.b16 %v3888
        %v4226 = vunpack.c.h.b16 %v3888
        %v4227 = vunpack.c.l.b16 %v3889
        %v4228 = vunpack.c.h.b16 %v3889
        %v4229 = vunpack.c.l.b16 %v3890
        %v4230 = vunpack.c.h.b16 %v3890
        %v4231 = vunpack.c.l.b16 %v3891
        %v4232 = vunpack.c.h.b16 %v3891
        %v4233 = vunpack.c.l.b16 %v3892
        %v4234 = vunpack.c.h.b16 %v3892
        %v4235 = vunpack.c.l.b16 %v3893
        %v4236 = vunpack.c.h.b16 %v3893
        %v4237 = vunpack.c.l.b16 %v3894
        %v4238 = vunpack.c.h.b16 %v3894
        %v4239 = vunpack.c.l.b16 %v3895
        %v4240 = vunpack.c.h.b16 %v3895
        %v4241 = vunpack.c.l.b16 %v3896
        %v4242 = vunpack.c.h.b16 %v3896
        %v4243 = vunpack.c.l.b16 %v3897
        %v4244 = vunpack.c.h.b16 %v3897
        %v4245 = vunpack.c.l.b16 %v3898
        %v4246 = vunpack.c.h.b16 %v3898
        %v4247 = vunpack.c.l.b16 %v3899
        %v4248 = vunpack.c.h.b16 %v3899
        %v4249 = vunpack.c.l.b16 %v3900
        %v4250 = vunpack.c.h.b16 %v3900
        %v4251 = vunpack.c.l.b16 %v3901
        %v4252 = vunpack.c.h.b16 %v3901
        %v4253 = vunpack.c.l.b16 %v3902
        %v4254 = vunpack.c.h.b16 %v3902
        %v4255 = vunpack.c.l.b16 %v3903
        %v4256 = vunpack.c.h.b16 %v3903
        %v4257 = vunpack.c.l.b16 %v3904
        %v4258 = vunpack.c.h.b16 %v3904
        %v4259 = vunpack.c.l.b16 %v3905
        %v4260 = vunpack.c.h.b16 %v3905
        %v4261 = vunpack.c.l.b16 %v3906
        %v4262 = vunpack.c.h.b16 %v3906
        %v4263 = vunpack.c.l.b16 %v3907
        %v4264 = vunpack.c.h.b16 %v3907
        %v4265 = vunpack.c.l.b16 %v3908
        %v4266 = vunpack.c.h.b16 %v3908
        %v4267 = vunpack.c.l.b16 %v3909
        %v4268 = vunpack.c.h.b16 %v3909
        %v4269 = vunpack.c.l.b16 %v3910
        %v4270 = vunpack.c.h.b16 %v3910
        %v4271 = vunpack.c.l.b16 %v3911
        %v4272 = vunpack.c.h.b16 %v3911
        %v4273 = vunpack.c.l.b16 %v3912
        %v4274 = vunpack.c.h.b16 %v3912
        %v4275 = vunpack.c.l.b16 %v3913
        %v4276 = vunpack.c.h.b16 %v3913
        %v4277 = vunpack.c.l.b16 %v3914
        %v4278 = vunpack.c.h.b16 %v3914
        %v4279 = vunpack.c.l.b16 %v3915
        %v4280 = vunpack.c.h.b16 %v3915
        %v4281 = vunpack.c.l.b16 %v3916
        %v4282 = vunpack.c.h.b16 %v3916
        %v4283 = vunpack.c.l.b16 %v3917
        %v4284 = vunpack.c.h.b16 %v3917
        %v4285 = vunpack.c.l.b16 %v3918
        %v4286 = vunpack.c.h.b16 %v3918
        %v4287 = vunpack.c.l.b16 %v3919
        %v4288 = vunpack.c.h.b16 %v3919
        %v4289 = vunpack.c.l.b16 %v3920
        %v4290 = vunpack.c.h.b16 %v3920
        %v4291 = vunpack.c.l.b16 %v3921
        %v4292 = vunpack.c.h.b16 %v3921
        %v4293 = vunpack.c.l.b16 %v3922
        %v4294 = vunpack.c.h.b16 %v3922
        %v4295 = vunpack.c.l.b16 %v3923
        %v4296 = vunpack.c.h.b16 %v3923
        %v4297 = vunpack.c.l.b16 %v3924
        %v4298 = vunpack.c.h.b16 %v3924
        %v4299 = vunpack.c.l.b16 %v3925
        %v4300 = vunpack.c.h.b16 %v3925
        %v4301 = vunpack.c.l.b16 %v3926
        %v4302 = vunpack.c.h.b16 %v3926
        %v4303 = vunpack.c.l.b16 %v3927
        %v4304 = vunpack.c.h.b16 %v3927
        %v4305 = vunpack.c.l.b16 %v3928
        %v4306 = vunpack.c.h.b16 %v3928
        %v4307 = vunpack.c.l.b16 %v3929
        %v4308 = vunpack.c.h.b16 %v3929
        %v4309 = vunpack.c.l.b16 %v3930
        %v4310 = vunpack.c.h.b16 %v3930
        %v4311 = vunpack.c.l.b16 %v3931
        %v4312 = vunpack.c.h.b16 %v3931
        %v4313 = vunpack.c.l.b16 %v3932
        %v4314 = vunpack.c.h.b16 %v3932
        %v4315 = vunpack.c.l.b16 %v3933
        %v4316 = vunpack.c.h.b16 %v3933
        %v4317 = vunpack.c.l.b16 %v3934
        %v4318 = vunpack.c.h.b16 %v3934
        %v4319 = vunpack.c.l.b16 %v3935
        %v4320 = vunpack.c.h.b16 %v3935
        %v4321 = vunpack.c.l.b16 %v3936
        %v4322 = vunpack.c.h.b16 %v3936
        %v4323 = vunpack.c.l.b16 %v3937
        %v4324 = vunpack.c.h.b16 %v3937
        %v4325 = vunpack.c.l.b16 %v3938
        %v4326 = vunpack.c.h.b16 %v3938
        %v4327 = vunpack.c.l.b16 %v3939
        %v4328 = vunpack.c.h.b16 %v3939
        %v4329 = vunpack.c.l.b16 %v3940
        %v4330 = vunpack.c.h.b16 %v3940
        %v4331 = vunpack.c.l.b16 %v3941
        %v4332 = vunpack.c.h.b16 %v3941
        %v4333 = vunpack.c.l.b16 %v3942
        %v4334 = vunpack.c.h.b16 %v3942
        %v4335 = vunpack.c.l.b16 %v3943
        %v4336 = vunpack.c.h.b16 %v3943
        %v4337 = vunpack.c.l.b16 %v3944
        %v4338 = vunpack.c.h.b16 %v3944
        %v4339 = vunpack.c.l.b16 %v3945
        %v4340 = vunpack.c.h.b16 %v3945
        %v4341 = vunpack.c.l.b16 %v3946
        %v4342 = vunpack.c.h.b16 %v3946
        %v4343 = vunpack.c.l.b16 %v3947
        %v4344 = vunpack.c.h.b16 %v3947
        %v4345 = vunpack.c.l.b16 %v3948
        %v4346 = vunpack.c.h.b16 %v3948
        %v4347 = vunpack.c.l.b16 %v3949
        %v4348 = vunpack.c.h.b16 %v3949
        %v4349 = vunpack.c.l.b16 %v3950
        %v4350 = vunpack.c.h.b16 %v3950
        %v4351 = vpack.c.b16 %v4099, %v4095
        %v4352 = vpack.c.b16 %v4100, %v4096
        %v4353 = vpack.c.b16 %v4101, %v4097
        %v4354 = vpack.c.b16 %v4102, %v4098
        %v4355 = vpack.c.b16 %v4107, %v4103
        %v4356 = vpack.c.b16 %v4108, %v4104
        %v4357 = vpack.c.b16 %v4109, %v4105
        %v4358 = vpack.c.b16 %v4110, %v4106
        %v4359 = vpack.c.b16 %v4115, %v4111
        %v4360 = vpack.c.b16 %v4116, %v4112
        %v4361 = vpack.c.b16 %v4117, %v4113
        %v4362 = vpack.c.b16 %v4118, %v4114
        %v4363 = vpack.c.b16 %v4123, %v4119
        %v4364 = vpack.c.b16 %v4124, %v4120
        %v4365 = vpack.c.b16 %v4125, %v4121
        %v4366 = vpack.c.b16 %v4126, %v4122
        %v4367 = vpack.c.b16 %v4131, %v4127
        %v4368 = vpack.c.b16 %v4132, %v4128
        %v4369 = vpack.c.b16 %v4133, %v4129
        %v4370 = vpack.c.b16 %v4134, %v4130
        %v4371 = vpack.c.b16 %v4139, %v4135
        %v4372 = vpack.c.b16 %v4140, %v4136
        %v4373 = vpack.c.b16 %v4141, %v4137
        %v4374 = vpack.c.b16 %v4142, %v4138
        %v4375 = vpack.c.b16 %v4147, %v4143
        %v4376 = vpack.c.b16 %v4148, %v4144
        %v4377 = vpack.c.b16 %v4149, %v4145
        %v4378 = vpack.c.b16 %v4150, %v4146
        %v4379 = vpack.c.b16 %v4155, %v4151
        %v4380 = vpack.c.b16 %v4156, %v4152
        %v4381 = vpack.c.b16 %v4157, %v4153
        %v4382 = vpack.c.b16 %v4158, %v4154
        %v4383 = vpack.c.b16 %v4163, %v4159
        %v4384 = vpack.c.b16 %v4164, %v4160
        %v4385 = vpack.c.b16 %v4165, %v4161
        %v4386 = vpack.c.b16 %v4166, %v4162
        %v4387 = vpack.c.b16 %v4171, %v4167
        %v4388 = vpack.c.b16 %v4172, %v4168
        %v4389 = vpack.c.b16 %v4173, %v4169
        %v4390 = vpack.c.b16 %v4174, %v4170
        %v4391 = vpack.c.b16 %v4179, %v4175
        %v4392 = vpack.c.b16 %v4180, %v4176
        %v4393 = vpack.c.b16 %v4181, %v4177
        %v4394 = vpack.c.b16 %v4182, %v4178
        %v4395 = vpack.c.b16 %v4187, %v4183
        %v4396 = vpack.c.b16 %v4188, %v4184
        %v4397 = vpack.c.b16 %v4189, %v4185
        %v4398 = vpack.c.b16 %v4190, %v4186
        %v4399 = vpack.c.b16 %v4195, %v4191
        %v4400 = vpack.c.b16 %v4196, %v4192
        %v4401 = vpack.c.b16 %v4197, %v4193
        %v4402 = vpack.c.b16 %v4198, %v4194
        %v4403 = vpack.c.b16 %v4203, %v4199
        %v4404 = vpack.c.b16 %v4204, %v4200
        %v4405 = vpack.c.b16 %v4205, %v4201
        %v4406 = vpack.c.b16 %v4206, %v4202
        %v4407 = vpack.c.b16 %v4211, %v4207
        %v4408 = vpack.c.b16 %v4212, %v4208
        %v4409 = vpack.c.b16 %v4213, %v4209
        %v4410 = vpack.c.b16 %v4214, %v4210
        %v4411 = vpack.c.b16 %v4219, %v4215
        %v4412 = vpack.c.b16 %v4220, %v4216
        %v4413 = vpack.c.b16 %v4221, %v4217
        %v4414 = vpack.c.b16 %v4222, %v4218
        %v4415 = vpack.c.b16 %v4227, %v4223
        %v4416 = vpack.c.b16 %v4228, %v4224
        %v4417 = vpack.c.b16 %v4229, %v4225
        %v4418 = vpack.c.b16 %v4230, %v4226
        %v4419 = vpack.c.b16 %v4235, %v4231
        %v4420 = vpack.c.b16 %v4236, %v4232
        %v4421 = vpack.c.b16 %v4237, %v4233
        %v4422 = vpack.c.b16 %v4238, %v4234
        %v4423 = vpack.c.b16 %v4243, %v4239
        %v4424 = vpack.c.b16 %v4244, %v4240
        %v4425 = vpack.c.b16 %v4245, %v4241
        %v4426 = vpack.c.b16 %v4246, %v4242
        %v4427 = vpack.c.b16 %v4251, %v4247
        %v4428 = vpack.c.b16 %v4252, %v4248
        %v4429 = vpack.c.b16 %v4253, %v4249
        %v4430 = vpack.c.b16 %v4254, %v4250
        %v4431 = vpack.c.b16 %v4259, %v4255
        %v4432 = vpack.c.b16 %v4260, %v4256
        %v4433 = vpack.c.b16 %v4261, %v4257
        %v4434 = vpack.c.b16 %v4262, %v4258
        %v4435 = vpack.c.b16 %v4267, %v4263
        %v4436 = vpack.c.b16 %v4268, %v4264
        %v4437 = vpack.c.b16 %v4269, %v4265
        %v4438 = vpack.c.b16 %v4270, %v4266
        %v4439 = vpack.c.b16 %v4275, %v4271
        %v4440 = vpack.c.b16 %v4276, %v4272
        %v4441 = vpack.c.b16 %v4277, %v4273
        %v4442 = vpack.c.b16 %v4278, %v4274
        %v4443 = vpack.c.b16 %v4283, %v4279
        %v4444 = vpack.c.b16 %v4284, %v4280
        %v4445 = vpack.c.b16 %v4285, %v4281
        %v4446 = vpack.c.b16 %v4286, %v4282
        %v4447 = vpack.c.b16 %v4291, %v4287
        %v4448 = vpack.c.b16 %v4292, %v4288
        %v4449 = vpack.c.b16 %v4293, %v4289
        %v4450 = vpack.c.b16 %v4294, %v4290
        %v4451 = vpack.c.b16 %v4299, %v4295
        %v4452 = vpack.c.b16 %v4300, %v4296
        %v4453 = vpack.c.b16 %v4301, %v4297
        %v4454 = vpack.c.b16 %v4302, %v4298
        %v4455 = vpack.c.b16 %v4307, %v4303
        %v4456 = vpack.c.b16 %v4308, %v4304
        %v4457 = vpack.c.b16 %v4309, %v4305
        %v4458 = vpack.c.b16 %v4310, %v4306
        %v4459 = vpack.c.b16 %v4315, %v4311
        %v4460 = vpack.c.b16 %v4316, %v4312
        %v4461 = vpack.c.b16 %v4317, %v4313
        %v4462 = vpack.c.b16 %v4318, %v4314
        %v4463 = vpack.c.b16 %v4323, %v4319
        %v4464 = vpack.c.b16 %v4324, %v4320
        %v4465 = vpack.c.b16 %v4325, %v4321
        %v4466 = vpack.c.b16 %v4326, %v4322
        %v4467 = vpack.c.b16 %v4331, %v4327
        %v4468 = vpack.c.b16 %v4332, %v4328
        %v4469 = vpack.c.b16 %v4333, %v4329
        %v4470 = vpack.c.b16 %v4334, %v4330
        %v4471 = vpack.c.b16 %v4339, %v4335
        %v4472 = vpack.c.b16 %v4340, %v4336
        %v4473 = vpack.c.b16 %v4341, %v4337
        %v4474 = vpack.c.b16 %v4342, %v4338
        %v4475 = vpack.c.b16 %v4347, %v4343
        %v4476 = vpack.c.b16 %v4348, %v4344
        %v4477 = vpack.c.b16 %v4349, %v4345
        %v4478 = vpack.c.b16 %v4350, %v4346
        %4607 = vmatprep.subr.bf16.mxu0 %v4352
        %4608 = vmatpush1.bf16.msra.mxu0 %v4351
        %4609 = vmatprep.subr.bf16.mxu0 %v4356
        %4610 = vmatpush1.bf16.msra.mxu0 %v4355
        %4611 = vmatprep.subr.bf16.mxu0 %v4360
        %4612 = vmatpush1.bf16.msra.mxu0 %v4359
        %4613 = vmatprep.subr.bf16.mxu0 %v4364
        %4614 = vmatpush1.bf16.msra.mxu0 %v4363
        %4615 = vmatprep.subr.bf16.mxu0 %v4368
        %4616 = vmatpush1.bf16.msra.mxu0 %v4367
        %4617 = vmatprep.subr.bf16.mxu0 %v4372
        %4618 = vmatpush1.bf16.msra.mxu0 %v4371
        %4619 = vmatprep.subr.bf16.mxu0 %v4376
        %4620 = vmatpush1.bf16.msra.mxu0 %v4375
        %4621 = vmatprep.subr.bf16.mxu0 %v4380
        %4622 = vmatpush1.bf16.msra.mxu0 %v4379
        %4623 = vmatprep.subr.bf16.mxu0 %v4384
        %4624 = vmatpush1.bf16.msra.mxu0 %v4383
        %4625 = vmatprep.subr.bf16.mxu0 %v4388
        %4626 = vmatpush1.bf16.msra.mxu0 %v4387
        %4627 = vmatprep.subr.bf16.mxu0 %v4392
        %4628 = vmatpush1.bf16.msra.mxu0 %v4391
        %4629 = vmatprep.subr.bf16.mxu0 %v4396
        %4630 = vmatpush1.bf16.msra.mxu0 %v4395
        %4631 = vmatprep.subr.bf16.mxu0 %v4400
        %4632 = vmatpush1.bf16.msra.mxu0 %v4399
        %4633 = vmatprep.subr.bf16.mxu0 %v4404
        %4634 = vmatpush1.bf16.msra.mxu0 %v4403
        %4635 = vmatprep.subr.bf16.mxu0 %v4408
        %4636 = vmatpush1.bf16.msra.mxu0 %v4407
        %4637 = vmatprep.subr.bf16.mxu0 %v4412
        %4638 = vmatpush1.bf16.msra.mxu0 %v4411
        %4639 = vmatprep.mubr.bf16.mxu0 %v3820
        %4640 = vmatmul.mubr.bf16.gmra.mrb[0].mxu0 %v3819
        %v4641 = vpop.f32.mrb[0].mxu0
        %v4642 = vadd.f32 %v3954, %v4641
        %v4643 = vpop.f32.mrb[0].mxu0
        %v4644 = vadd.f32 %v3958, %v4643
        %v4645 = vpop.f32.mrb[0].mxu0
        %v4646 = vpop.f32.mrb[0].mxu0
        %4647 = vdwg.mxu0
        %4648 = vmatprep.subr.bf16.mxu0 %v4416
        %4649 = vmatpush1.bf16.msra.mxu0 %v4415
        %4650 = vmatprep.subr.bf16.mxu0 %v4420
        %4651 = vmatpush1.bf16.msra.mxu0 %v4419
        %4652 = vmatprep.subr.bf16.mxu0 %v4424
        %4653 = vmatpush1.bf16.msra.mxu0 %v4423
        %4654 = vmatprep.subr.bf16.mxu0 %v4428
        %4655 = vmatpush1.bf16.msra.mxu0 %v4427
        %4656 = vmatprep.subr.bf16.mxu0 %v4432
        %4657 = vmatpush1.bf16.msra.mxu0 %v4431
        %4658 = vmatprep.subr.bf16.mxu0 %v4436
        %4659 = vmatpush1.bf16.msra.mxu0 %v4435
        %4660 = vmatprep.subr.bf16.mxu0 %v4440
        %4661 = vmatpush1.bf16.msra.mxu0 %v4439
        %4662 = vmatprep.subr.bf16.mxu0 %v4444
        %4663 = vmatpush1.bf16.msra.mxu0 %v4443
        %4664 = vmatprep.subr.bf16.mxu0 %v4448
        %4665 = vmatpush1.bf16.msra.mxu0 %v4447
        %4666 = vmatprep.subr.bf16.mxu0 %v4452
        %4667 = vmatpush1.bf16.msra.mxu0 %v4451
        %4668 = vmatprep.subr.bf16.mxu0 %v4456
        %4669 = vmatpush1.bf16.msra.mxu0 %v4455
        %4670 = vmatprep.subr.bf16.mxu0 %v4460
        %4671 = vmatpush1.bf16.msra.mxu0 %v4459
        %4672 = vmatprep.subr.bf16.mxu0 %v4464
        %4673 = vmatpush1.bf16.msra.mxu0 %v4463
        %4674 = vmatprep.subr.bf16.mxu0 %v4468
        %4675 = vmatpush1.bf16.msra.mxu0 %v4467
        %4676 = vmatprep.subr.bf16.mxu0 %v4472
        %4677 = vmatpush1.bf16.msra.mxu0 %v4471
        %4678 = vmatprep.subr.bf16.mxu0 %v4476
        %4679 = vmatpush1.bf16.msra.mxu0 %v4475
        %4680 = vmatprep.mubr.bf16.mxu0 %v3822
        %4681 = vmatmul.mubr.bf16.gmra.mrb[0].mxu0 %v3821
        %v4682 = vpop.f32.mrb[0].mxu0
        %v4683 = vadd.f32 %v4642, %v4682
        %v4684 = vpop.f32.mrb[0].mxu0
        %v4685 = vadd.f32 %v4644, %v4684
        %v4686 = vpop.f32.mrb[0].mxu0
        %v4687 = vpop.f32.mrb[0].mxu0
        %4688 = vdwg.mxu0
        %4689 = vmatprep.subr.bf16.mxu0 %v4354
        %4690 = vmatpush1.bf16.msra.mxu0 %v4353
        %4691 = vmatprep.subr.bf16.mxu0 %v4358
        %4692 = vmatpush1.bf16.msra.mxu0 %v4357
        %4693 = vmatprep.subr.bf16.mxu0 %v4362
        %4694 = vmatpush1.bf16.msra.mxu0 %v4361
        %4695 = vmatprep.subr.bf16.mxu0 %v4366
        %4696 = vmatpush1.bf16.msra.mxu0 %v4365
        %4697 = vmatprep.subr.bf16.mxu0 %v4370
        %4698 = vmatpush1.bf16.msra.mxu0 %v4369
        %4699 = vmatprep.subr.bf16.mxu0 %v4374
        %4700 = vmatpush1.bf16.msra.mxu0 %v4373
        %4701 = vmatprep.subr.bf16.mxu0 %v4378
        %4702 = vmatpush1.bf16.msra.mxu0 %v4377
        %4703 = vmatprep.subr.bf16.mxu0 %v4382
        %4704 = vmatpush1.bf16.msra.mxu0 %v4381
        %4705 = vmatprep.subr.bf16.mxu0 %v4386
        %4706 = vmatpush1.bf16.msra.mxu0 %v4385
        %4707 = vmatprep.subr.bf16.mxu0 %v4390
        %4708 = vmatpush1.bf16.msra.mxu0 %v4389
        %4709 = vmatprep.subr.bf16.mxu0 %v4394
        %4710 = vmatpush1.bf16.msra.mxu0 %v4393
        %4711 = vmatprep.subr.bf16.mxu0 %v4398
        %4712 = vmatpush1.bf16.msra.mxu0 %v4397
        %4713 = vmatprep.subr.bf16.mxu0 %v4402
        %4714 = vmatpush1.bf16.msra.mxu0 %v4401
        %4715 = vmatprep.subr.bf16.mxu0 %v4406
        %4716 = vmatpush1.bf16.msra.mxu0 %v4405
        %4717 = vmatprep.subr.bf16.mxu0 %v4410
        %4718 = vmatpush1.bf16.msra.mxu0 %v4409
        %4719 = vmatprep.subr.bf16.mxu0 %v4414
        %4720 = vmatpush1.bf16.msra.mxu0 %v4413
        %4721 = vmatprep.mubr.bf16.mxu0 %v3820
        %4722 = vmatmul.mubr.bf16.gmra.mrb[0].mxu0 %v3819
        %v4723 = vpop.f32.mrb[0].mxu0
        %v4724 = vadd.f32 %v3962, %v4723
        %v4725 = vpop.f32.mrb[0].mxu0
        %v4726 = vadd.f32 %v3966, %v4725
        %v4727 = vpop.f32.mrb[0].mxu0
        %v4728 = vpop.f32.mrb[0].mxu0
        %4729 = vdwg.mxu0
        %4730 = vmatprep.subr.bf16.mxu0 %v4418
        %4731 = vmatpush1.bf16.msra.mxu0 %v4417
        %4732 = vmatprep.subr.bf16.mxu0 %v4422
        %4733 = vmatpush1.bf16.msra.mxu0 %v4421
        %4734 = vmatprep.subr.bf16.mxu0 %v4426
        %4735 = vmatpush1.bf16.msra.mxu0 %v4425
        %4736 = vmatprep.subr.bf16.mxu0 %v4430
        %4737 = vmatpush1.bf16.msra.mxu0 %v4429
        %4738 = vmatprep.subr.bf16.mxu0 %v4434
        %4739 = vmatpush1.bf16.msra.mxu0 %v4433
        %4740 = vmatprep.subr.bf16.mxu0 %v4438
        %4741 = vmatpush1.bf16.msra.mxu0 %v4437
        %4742 = vmatprep.subr.bf16.mxu0 %v4442
        %4743 = vmatpush1.bf16.msra.mxu0 %v4441
        %4744 = vmatprep.subr.bf16.mxu0 %v4446
        %4745 = vmatpush1.bf16.msra.mxu0 %v4445
        %4746 = vmatprep.subr.bf16.mxu0 %v4450
        %4747 = vmatpush1.bf16.msra.mxu0 %v4449
        %4748 = vmatprep.subr.bf16.mxu0 %v4454
        %4749 = vmatpush1.bf16.msra.mxu0 %v4453
        %4750 = vmatprep.subr.bf16.mxu0 %v4458
        %4751 = vmatpush1.bf16.msra.mxu0 %v4457
        %4752 = vmatprep.subr.bf16.mxu0 %v4462
        %4753 = vmatpush1.bf16.msra.mxu0 %v4461
        %4754 = vmatprep.subr.bf16.mxu0 %v4466
        %4755 = vmatpush1.bf16.msra.mxu0 %v4465
        %4756 = vmatprep.subr.bf16.mxu0 %v4470
        %4757 = vmatpush1.bf16.msra.mxu0 %v4469
        %4758 = vmatprep.subr.bf16.mxu0 %v4474
        %4759 = vmatpush1.bf16.msra.mxu0 %v4473
        %4760 = vmatprep.subr.bf16.mxu0 %v4478
        %4761 = vmatpush1.bf16.msra.mxu0 %v4477
        %4762 = vmatprep.mubr.bf16.mxu0 %v3822
        %4763 = vmatmul.mubr.bf16.gmra.mrb[0].mxu0 %v3821
        %v4764 = vpop.f32.mrb[0].mxu0
        %v4765 = vadd.f32 %v4724, %v4764
        %v4766 = vpop.f32.mrb[0].mxu0
        %v4767 = vadd.f32 %v4726, %v4766
        %v4768 = vpop.f32.mrb[0].mxu0
        %v4769 = vpop.f32.mrb[0].mxu0
        %4770 = vdwg.mxu0
        %v4771 = vmax.f32 %v4683, 0.0
        %v4772 = vmax.f32 %v4685, 0.0
        %v4773 = vmax.f32 %v4765, 0.0
        %v4774 = vmax.f32 %v4767, 0.0
        %v4775 = vpack.c.bf16 %v4771, %v4771
        %v4776 = vpack.c.bf16 %v4772, %v4772
        %v4777 = vpack.c.bf16 %v4773, %v4773
        %v4778 = vpack.c.bf16 %v4774, %v4774
        %v4779 = vld [vmem:[%s684] sm:$0xf]
        %v4780 = vld [vmem:[%s684 + $0x4] sm:$0xf]
        %v4781 = vld [vmem:[%s684 + $0x8] sm:$0xf]
        %v4782 = vld [vmem:[%s684 + $0xc] sm:$0xf]
        %v4783 = vld [vmem:[%s684 + $0x10] sm:$0xf]
        %v4784 = vld [vmem:[%s684 + $0x14] sm:$0xf]
        %v4785 = vld [vmem:[%s684 + $0x18] sm:$0xf]
        %v4786 = vld [vmem:[%s684 + $0x1c] sm:$0xf]
        %v4787 = vld [vmem:[%s684 + $0x20] sm:$0xf]
        %v4788 = vld [vmem:[%s684 + $0x24] sm:$0xf]
        %v4789 = vld [vmem:[%s684 + $0x28] sm:$0xf]
        %v4790 = vld [vmem:[%s684 + $0x2c] sm:$0xf]
        %v4791 = vld [vmem:[%s684 + $0x30] sm:$0xf]
        %v4792 = vld [vmem:[%s684 + $0x34] sm:$0xf]
        %v4793 = vld [vmem:[%s684 + $0x38] sm:$0xf]
        %v4794 = vld [vmem:[%s684 + $0x3c] sm:$0xf]
        %v4795 = vld [vmem:[%s684 + $0x40] sm:$0xf]
        %v4796 = vld [vmem:[%s684 + $0x44] sm:$0xf]
        %v4797 = vld [vmem:[%s684 + $0x48] sm:$0xf]
        %v4798 = vld [vmem:[%s684 + $0x4c] sm:$0xf]
        %v4799 = vld [vmem:[%s684 + $0x50] sm:$0xf]
        %v4800 = vld [vmem:[%s684 + $0x54] sm:$0xf]
        %v4801 = vld [vmem:[%s684 + $0x58] sm:$0xf]
        %v4802 = vld [vmem:[%s684 + $0x5c] sm:$0xf]
        %v4803 = vld [vmem:[%s684 + $0x60] sm:$0xf]
        %v4804 = vld [vmem:[%s684 + $0x64] sm:$0xf]
        %v4805 = vld [vmem:[%s684 + $0x68] sm:$0xf]
        %v4806 = vld [vmem:[%s684 + $0x6c] sm:$0xf]
        %v4807 = vld [vmem:[%s684 + $0x70] sm:$0xf]
        %v4808 = vld [vmem:[%s684 + $0x74] sm:$0xf]
        %v4809 = vld [vmem:[%s684 + $0x78] sm:$0xf]
        %v4810 = vld [vmem:[%s684 + $0x7c] sm:$0xf]
        %v4811 = vld [vmem:[%s684 + $0x80] sm:$0xf]
        %v4812 = vld [vmem:[%s684 + $0x84] sm:$0xf]
        %v4813 = vld [vmem:[%s684 + $0x88] sm:$0xf]
        %v4814 = vld [vmem:[%s684 + $0x8c] sm:$0xf]
        %v4815 = vld [vmem:[%s684 + $0x90] sm:$0xf]
        %v4816 = vld [vmem:[%s684 + $0x94] sm:$0xf]
        %v4817 = vld [vmem:[%s684 + $0x98] sm:$0xf]
        %v4818 = vld [vmem:[%s684 + $0x9c] sm:$0xf]
        %v4819 = vld [vmem:[%s684 + $0xa0] sm:$0xf]
        %v4820 = vld [vmem:[%s684 + $0xa4] sm:$0xf]
        %v4821 = vld [vmem:[%s684 + $0xa8] sm:$0xf]
        %v4822 = vld [vmem:[%s684 + $0xac] sm:$0xf]
        %v4823 = vld [vmem:[%s684 + $0xb0] sm:$0xf]
        %v4824 = vld [vmem:[%s684 + $0xb4] sm:$0xf]
        %v4825 = vld [vmem:[%s684 + $0xb8] sm:$0xf]
        %v4826 = vld [vmem:[%s684 + $0xbc] sm:$0xf]
        %v4827 = vld [vmem:[%s684 + $0xc0] sm:$0xf]
        %v4828 = vld [vmem:[%s684 + $0xc4] sm:$0xf]
        %v4829 = vld [vmem:[%s684 + $0xc8] sm:$0xf]
        %v4830 = vld [vmem:[%s684 + $0xcc] sm:$0xf]
        %v4831 = vld [vmem:[%s684 + $0xd0] sm:$0xf]
        %v4832 = vld [vmem:[%s684 + $0xd4] sm:$0xf]
        %v4833 = vld [vmem:[%s684 + $0xd8] sm:$0xf]
        %v4834 = vld [vmem:[%s684 + $0xdc] sm:$0xf]
        %v4835 = vld [vmem:[%s684 + $0xe0] sm:$0xf]
        %v4836 = vld [vmem:[%s684 + $0xe4] sm:$0xf]
        %v4837 = vld [vmem:[%s684 + $0xe8] sm:$0xf]
        %v4838 = vld [vmem:[%s684 + $0xec] sm:$0xf]
        %v4839 = vld [vmem:[%s684 + $0xf0] sm:$0xf]
        %v4840 = vld [vmem:[%s684 + $0xf4] sm:$0xf]
        %v4841 = vld [vmem:[%s684 + $0xf8] sm:$0xf]
        %v4842 = vld [vmem:[%s684 + $0xfc] sm:$0xf]
        %v4907 = vunpack.c.l.b16 %v4779
        %v4908 = vunpack.c.l.b16 %v4780
        %v4909 = vunpack.c.l.b16 %v4781
        %v4910 = vunpack.c.l.b16 %v4782
        %v4911 = vunpack.c.l.b16 %v4783
        %v4912 = vunpack.c.l.b16 %v4784
        %v4913 = vunpack.c.l.b16 %v4785
        %v4914 = vunpack.c.l.b16 %v4786
        %v4915 = vunpack.c.l.b16 %v4787
        %v4916 = vunpack.c.l.b16 %v4788
        %v4917 = vunpack.c.l.b16 %v4789
        %v4918 = vunpack.c.l.b16 %v4790
        %v4919 = vunpack.c.l.b16 %v4791
        %v4920 = vunpack.c.l.b16 %v4792
        %v4921 = vunpack.c.l.b16 %v4793
        %v4922 = vunpack.c.l.b16 %v4794
        %v4923 = vunpack.c.l.b16 %v4795
        %v4924 = vunpack.c.l.b16 %v4796
        %v4925 = vunpack.c.l.b16 %v4797
        %v4926 = vunpack.c.l.b16 %v4798
        %v4927 = vunpack.c.l.b16 %v4799
        %v4928 = vunpack.c.l.b16 %v4800
        %v4929 = vunpack.c.l.b16 %v4801
        %v4930 = vunpack.c.l.b16 %v4802
        %v4931 = vunpack.c.l.b16 %v4803
        %v4932 = vunpack.c.l.b16 %v4804
        %v4933 = vunpack.c.l.b16 %v4805
        %v4934 = vunpack.c.l.b16 %v4806
        %v4935 = vunpack.c.l.b16 %v4807
        %v4936 = vunpack.c.l.b16 %v4808
        %v4937 = vunpack.c.l.b16 %v4809
        %v4938 = vunpack.c.l.b16 %v4810
        %v4939 = vunpack.c.l.b16 %v4811
        %v4940 = vunpack.c.l.b16 %v4812
        %v4941 = vunpack.c.l.b16 %v4813
        %v4942 = vunpack.c.l.b16 %v4814
        %v4943 = vunpack.c.l.b16 %v4815
        %v4944 = vunpack.c.l.b16 %v4816
        %v4945 = vunpack.c.l.b16 %v4817
        %v4946 = vunpack.c.l.b16 %v4818
        %v4947 = vunpack.c.l.b16 %v4819
        %v4948 = vunpack.c.l.b16 %v4820
        %v4949 = vunpack.c.l.b16 %v4821
        %v4950 = vunpack.c.l.b16 %v4822
        %v4951 = vunpack.c.l.b16 %v4823
        %v4952 = vunpack.c.l.b16 %v4824
        %v4953 = vunpack.c.l.b16 %v4825
        %v4954 = vunpack.c.l.b16 %v4826
        %v4955 = vunpack.c.l.b16 %v4827
        %v4956 = vunpack.c.l.b16 %v4828
        %v4957 = vunpack.c.l.b16 %v4829
        %v4958 = vunpack.c.l.b16 %v4830
        %v4959 = vunpack.c.l.b16 %v4831
        %v4960 = vunpack.c.l.b16 %v4832
        %v4961 = vunpack.c.l.b16 %v4833
        %v4962 = vunpack.c.l.b16 %v4834
        %v4963 = vunpack.c.l.b16 %v4835
        %v4964 = vunpack.c.l.b16 %v4836
        %v4965 = vunpack.c.l.b16 %v4837
        %v4966 = vunpack.c.l.b16 %v4838
        %v4967 = vunpack.c.l.b16 %v4839
        %v4968 = vunpack.c.l.b16 %v4840
        %v4969 = vunpack.c.l.b16 %v4841
        %v4970 = vunpack.c.l.b16 %v4842
        %v4971 = vpack.c.b16 %v4908, %v4907
        %v4972 = vpack.c.b16 %v4910, %v4909
        %v4973 = vpack.c.b16 %v4912, %v4911
        %v4974 = vpack.c.b16 %v4914, %v4913
        %v4975 = vpack.c.b16 %v4916, %v4915
        %v4976 = vpack.c.b16 %v4918, %v4917
        %v4977 = vpack.c.b16 %v4920, %v4919
        %v4978 = vpack.c.b16 %v4922, %v4921
        %v4979 = vpack.c.b16 %v4924, %v4923
        %v4980 = vpack.c.b16 %v4926, %v4925
        %v4981 = vpack.c.b16 %v4928, %v4927
        %v4982 = vpack.c.b16 %v4930, %v4929
        %v4983 = vpack.c.b16 %v4932, %v4931
        %v4984 = vpack.c.b16 %v4934, %v4933
        %v4985 = vpack.c.b16 %v4936, %v4935
        %v4986 = vpack.c.b16 %v4938, %v4937
        %v4987 = vpack.c.b16 %v4940, %v4939
        %v4988 = vpack.c.b16 %v4942, %v4941
        %v4989 = vpack.c.b16 %v4944, %v4943
        %v4990 = vpack.c.b16 %v4946, %v4945
        %v4991 = vpack.c.b16 %v4948, %v4947
        %v4992 = vpack.c.b16 %v4950, %v4949
        %v4993 = vpack.c.b16 %v4952, %v4951
        %v4994 = vpack.c.b16 %v4954, %v4953
        %v4995 = vpack.c.b16 %v4956, %v4955
        %v4996 = vpack.c.b16 %v4958, %v4957
        %v4997 = vpack.c.b16 %v4960, %v4959
        %v4998 = vpack.c.b16 %v4962, %v4961
        %v4999 = vpack.c.b16 %v4964, %v4963
        %v5000 = vpack.c.b16 %v4966, %v4965
        %v5001 = vpack.c.b16 %v4968, %v4967
        %v5002 = vpack.c.b16 %v4970, %v4969
        %5035 = vmatprep.subr.bf16.mxu0 0
        %5036 = vmatpush1.bf16.msra.mxu0 %v4971
        %5037 = vmatprep.subr.bf16.mxu0 0
        %5038 = vmatpush1.bf16.msra.mxu0 %v4972
        %5039 = vmatprep.subr.bf16.mxu0 0
        %5040 = vmatpush1.bf16.msra.mxu0 %v4973
        %5041 = vmatprep.subr.bf16.mxu0 0
        %5042 = vmatpush1.bf16.msra.mxu0 %v4974
        %5043 = vmatprep.subr.bf16.mxu0 0
        %5044 = vmatpush1.bf16.msra.mxu0 %v4975
        %5045 = vmatprep.subr.bf16.mxu0 0
        %5046 = vmatpush1.bf16.msra.mxu0 %v4976
        %5047 = vmatprep.subr.bf16.mxu0 0
        %5048 = vmatpush1.bf16.msra.mxu0 %v4977
        %5049 = vmatprep.subr.bf16.mxu0 0
        %5050 = vmatpush1.bf16.msra.mxu0 %v4978
        %5051 = vmatprep.subr.bf16.mxu0 0
        %5052 = vmatpush1.bf16.msra.mxu0 %v4979
        %5053 = vmatprep.subr.bf16.mxu0 0
        %5054 = vmatpush1.bf16.msra.mxu0 %v4980
        %5055 = vmatprep.subr.bf16.mxu0 0
        %5056 = vmatpush1.bf16.msra.mxu0 %v4981
        %5057 = vmatprep.subr.bf16.mxu0 0
        %5058 = vmatpush1.bf16.msra.mxu0 %v4982
        %5059 = vmatprep.subr.bf16.mxu0 0
        %5060 = vmatpush1.bf16.msra.mxu0 %v4983
        %5061 = vmatprep.subr.bf16.mxu0 0
        %5062 = vmatpush1.bf16.msra.mxu0 %v4984
        %5063 = vmatprep.subr.bf16.mxu0 0
        %5064 = vmatpush1.bf16.msra.mxu0 %v4985
        %5065 = vmatprep.subr.bf16.mxu0 0
        %5066 = vmatpush1.bf16.msra.mxu0 %v4986
        %5067 = vmatprep.mubr.bf16.mxu0 %v4776
        %5068 = vmatmul.mubr.bf16.gmra.mrb[0].mxu0 %v4775
        %v5069 = vpop.f32.mrb[0].mxu0
        %v5070 = vadd.f32 0.0, %v5069
        %v5071 = vpop.f32.mrb[0].mxu0
        %v5072 = vpop.f32.mrb[0].mxu0
        %v5073 = vpop.f32.mrb[0].mxu0
        %5074 = vdwg.mxu0
        %5075 = vmatprep.subr.bf16.mxu0 0
        %5076 = vmatpush1.bf16.msra.mxu0 %v4987
        %5077 = vmatprep.subr.bf16.mxu0 0
        %5078 = vmatpush1.bf16.msra.mxu0 %v4988
        %5079 = vmatprep.subr.bf16.mxu0 0
        %5080 = vmatpush1.bf16.msra.mxu0 %v4989
        %5081 = vmatprep.subr.bf16.mxu0 0
        %5082 = vmatpush1.bf16.msra.mxu0 %v4990
        %5083 = vmatprep.subr.bf16.mxu0 0
        %5084 = vmatpush1.bf16.msra.mxu0 %v4991
        %5085 = vmatprep.subr.bf16.mxu0 0
        %5086 = vmatpush1.bf16.msra.mxu0 %v4992
        %5087 = vmatprep.subr.bf16.mxu0 0
        %5088 = vmatpush1.bf16.msra.mxu0 %v4993
        %5089 = vmatprep.subr.bf16.mxu0 0
        %5090 = vmatpush1.bf16.msra.mxu0 %v4994
        %5091 = vmatprep.subr.bf16.mxu0 0
        %5092 = vmatpush1.bf16.msra.mxu0 %v4995
        %5093 = vmatprep.subr.bf16.mxu0 0
        %5094 = vmatpush1.bf16.msra.mxu0 %v4996
        %5095 = vmatprep.subr.bf16.mxu0 0
        %5096 = vmatpush1.bf16.msra.mxu0 %v4997
        %5097 = vmatprep.subr.bf16.mxu0 0
        %5098 = vmatpush1.bf16.msra.mxu0 %v4998
        %5099 = vmatprep.subr.bf16.mxu0 0
        %5100 = vmatpush1.bf16.msra.mxu0 %v4999
        %5101 = vmatprep.subr.bf16.mxu0 0
        %5102 = vmatpush1.bf16.msra.mxu0 %v5000
        %5103 = vmatprep.subr.bf16.mxu0 0
        %5104 = vmatpush1.bf16.msra.mxu0 %v5001
        %5105 = vmatprep.subr.bf16.mxu0 0
        %5106 = vmatpush1.bf16.msra.mxu0 %v5002
        %5107 = vmatprep.mubr.bf16.mxu0 %v4778
        %5108 = vmatmul.mubr.bf16.gmra.mrb[0].mxu0 %v4777
        %v5109 = vpop.f32.mrb[0].mxu0
        %v5110 = vadd.f32 %v5070, %v5109
        %v5111 = vpop.f32.mrb[0].mxu0
        %v5112 = vpop.f32.mrb[0].mxu0
        %v5113 = vpop.f32.mrb[0].mxu0
        %5114 = vdwg.mxu0
        %v5115 = vpack.c.bf16 %v5110, %v5110
        %v5116 = vld [vmem:[%s790] sm:$0xf]
        %v5117 = vld [vmem:[%s790 + $0x4] sm:$0xf]
        %v5118 = vld [vmem:[%s790 + $0x8] sm:$0xf]
        %v5119 = vld [vmem:[%s790 + $0xc] sm:$0xf]
        %v5120 = vld [vmem:[%s790 + $0x10] sm:$0xf]
        %v5121 = vld [vmem:[%s790 + $0x14] sm:$0xf]
        %v5122 = vld [vmem:[%s790 + $0x18] sm:$0xf]
        %v5123 = vld [vmem:[%s790 + $0x1c] sm:$0xf]
        %v5124 = vld [vmem:[%s790 + $0x20] sm:$0xf]
        %v5125 = vld [vmem:[%s790 + $0x24] sm:$0xf]
        %v5126 = vld [vmem:[%s790 + $0x28] sm:$0xf]
        %v5127 = vld [vmem:[%s790 + $0x2c] sm:$0xf]
        %v5128 = vld [vmem:[%s790 + $0x30] sm:$0xf]
        %v5129 = vld [vmem:[%s790 + $0x34] sm:$0xf]
        %v5130 = vld [vmem:[%s790 + $0x38] sm:$0xf]
        %v5131 = vld [vmem:[%s790 + $0x3c] sm:$0xf]
        %v5132 = vld [vmem:[%s692] sm:$0x1]
        %v5134 = vlaneseq
        %v5135 = vshrl.u32 %v5134, 7
        %v5136 = vsub.s32 0, %v5135
        %v5137 = vrot.slane %v5132, %v5136
        %v5155 = vunpack.c.l.b16 %v5116
        %v5156 = vunpack.c.l.b16 %v5117
        %v5157 = vunpack.c.l.b16 %v5118
        %v5158 = vunpack.c.l.b16 %v5119
        %v5159 = vunpack.c.l.b16 %v5120
        %v5160 = vunpack.c.l.b16 %v5121
        %v5161 = vunpack.c.l.b16 %v5122
        %v5162 = vunpack.c.l.b16 %v5123
        %v5163 = vunpack.c.l.b16 %v5124
        %v5164 = vunpack.c.l.b16 %v5125
        %v5165 = vunpack.c.l.b16 %v5126
        %v5166 = vunpack.c.l.b16 %v5127
        %v5167 = vunpack.c.l.b16 %v5128
        %v5168 = vunpack.c.l.b16 %v5129
        %v5169 = vunpack.c.l.b16 %v5130
        %v5170 = vunpack.c.l.b16 %v5131
        %v5171 = vpack.c.b16 %v5156, %v5155
        %v5172 = vpack.c.b16 %v5158, %v5157
        %v5173 = vpack.c.b16 %v5160, %v5159
        %v5174 = vpack.c.b16 %v5162, %v5161
        %v5175 = vpack.c.b16 %v5164, %v5163
        %v5176 = vpack.c.b16 %v5166, %v5165
        %v5177 = vpack.c.b16 %v5168, %v5167
        %v5178 = vpack.c.b16 %v5170, %v5169
        %5187 = vmatprep.subr.bf16.mxu0 0
        %5188 = vmatpush1.bf16.msra.mxu0 %v5171
        %5189 = vmatprep.subr.bf16.mxu0 0
        %5190 = vmatpush1.bf16.msra.mxu0 %v5172
        %5191 = vmatprep.subr.bf16.mxu0 0
        %5192 = vmatpush1.bf16.msra.mxu0 %v5173
        %5193 = vmatprep.subr.bf16.mxu0 0
        %5194 = vmatpush1.bf16.msra.mxu0 %v5174
        %5195 = vmatprep.subr.bf16.mxu0 0
        %5196 = vmatpush1.bf16.msra.mxu0 %v5175
        %5197 = vmatprep.subr.bf16.mxu0 0
        %5198 = vmatpush1.bf16.msra.mxu0 %v5176
        %5199 = vmatprep.subr.bf16.mxu0 0
        %5200 = vmatpush1.bf16.msra.mxu0 %v5177
        %5201 = vmatprep.subr.bf16.mxu0 0
        %5202 = vmatpush1.bf16.msra.mxu0 %v5178
        %5203 = vmatprep.subr.bf16.mxu0 0
        %5204 = vmatpush1.bf16.msra.mxu0 0
        %5205 = vmatprep.subr.bf16.mxu0 0
        %5206 = vmatpush1.bf16.msra.mxu0 0
        %5207 = vmatprep.subr.bf16.mxu0 0
        %5208 = vmatpush1.bf16.msra.mxu0 0
        %5209 = vmatprep.subr.bf16.mxu0 0
        %5210 = vmatpush1.bf16.msra.mxu0 0
        %5211 = vmatprep.subr.bf16.mxu0 0
        %5212 = vmatpush1.bf16.msra.mxu0 0
        %5213 = vmatprep.subr.bf16.mxu0 0
        %5214 = vmatpush1.bf16.msra.mxu0 0
        %5215 = vmatprep.subr.bf16.mxu0 0
        %5216 = vmatpush1.bf16.msra.mxu0 0
        %5217 = vmatprep.subr.bf16.mxu0 0
        %5218 = vmatpush1.bf16.msra.mxu0 0
        %5219 = vmatprep.mubr.bf16.mxu0 0
        %5220 = vmatmul.mubr.bf16.gmra.mrb[0].mxu0 %v5115
        %v5221 = vpop.f32.mrb[0].mxu0
        %v5222 = vadd.f32 %v5137, %v5221
        %v5223 = vpop.f32.mrb[0].mxu0
        %v5224 = vpop.f32.mrb[0].mxu0
        %v5225 = vpop.f32.mrb[0].mxu0
        %5226 = vdwg.mxu0
        %v5227 = vld [vmem:[%s797] sm:$0xf]
        %v5228 = vld [vmem:[%s797 + $0x4] sm:$0xf]
        %v5229 = vld [vmem:[%s797 + $0x8] sm:$0xf]
        %v5230 = vld [vmem:[%s797 + $0xc] sm:$0xf]
        %v5231 = vld [vmem:[%s797 + $0x10] sm:$0xf]
        %v5232 = vld [vmem:[%s797 + $0x14] sm:$0xf]
        %v5233 = vld [vmem:[%s797 + $0x18] sm:$0xf]
        %v5234 = vld [vmem:[%s797 + $0x1c] sm:$0xf]
        %v5235 = vld [vmem:[%s797 + $0x20] sm:$0xf]
        %v5236 = vld [vmem:[%s797 + $0x24] sm:$0xf]
        %v5237 = vld [vmem:[%s797 + $0x28] sm:$0xf]
        %v5238 = vld [vmem:[%s797 + $0x2c] sm:$0xf]
        %v5239 = vld [vmem:[%s797 + $0x30] sm:$0xf]
        %v5240 = vld [vmem:[%s797 + $0x34] sm:$0xf]
        %v5241 = vld [vmem:[%s797 + $0x38] sm:$0xf]
        %v5242 = vld [vmem:[%s797 + $0x3c] sm:$0xf]
        %v5243 = vld [vmem:[%s803] sm:$0x1]
        %v5245 = vlaneseq
        %v5246 = vshrl.u32 %v5245, 7
        %v5247 = vsub.s32 0, %v5246
        %v5248 = vrot.slane %v5243, %v5247
        %v5266 = vunpack.c.l.b16 %v5227
        %v5267 = vunpack.c.l.b16 %v5228
        %v5268 = vunpack.c.l.b16 %v5229
        %v5269 = vunpack.c.l.b16 %v5230
        %v5270 = vunpack.c.l.b16 %v5231
        %v5271 = vunpack.c.l.b16 %v5232
        %v5272 = vunpack.c.l.b16 %v5233
        %v5273 = vunpack.c.l.b16 %v5234
        %v5274 = vunpack.c.l.b16 %v5235
        %v5275 = vunpack.c.l.b16 %v5236
        %v5276 = vunpack.c.l.b16 %v5237
        %v5277 = vunpack.c.l.b16 %v5238
        %v5278 = vunpack.c.l.b16 %v5239
        %v5279 = vunpack.c.l.b16 %v5240
        %v5280 = vunpack.c.l.b16 %v5241
        %v5281 = vunpack.c.l.b16 %v5242
        %v5282 = vpack.c.b16 %v5267, %v5266
        %v5283 = vpack.c.b16 %v5269, %v5268
        %v5284 = vpack.c.b16 %v5271, %v5270
        %v5285 = vpack.c.b16 %v5273, %v5272
        %v5286 = vpack.c.b16 %v5275, %v5274
        %v5287 = vpack.c.b16 %v5277, %v5276
        %v5288 = vpack.c.b16 %v5279, %v5278
        %v5289 = vpack.c.b16 %v5281, %v5280
        %5298 = vmatprep.subr.bf16.mxu0 0
        %5299 = vmatpush1.bf16.msra.mxu0 %v5282
        %5300 = vmatprep.subr.bf16.mxu0 0
        %5301 = vmatpush1.bf16.msra.mxu0 %v5283
        %5302 = vmatprep.subr.bf16.mxu0 0
        %5303 = vmatpush1.bf16.msra.mxu0 %v5284
        %5304 = vmatprep.subr.bf16.mxu0 0
        %5305 = vmatpush1.bf16.msra.mxu0 %v5285
        %5306 = vmatprep.subr.bf16.mxu0 0
        %5307 = vmatpush1.bf16.msra.mxu0 %v5286
        %5308 = vmatprep.subr.bf16.mxu0 0
        %5309 = vmatpush1.bf16.msra.mxu0 %v5287
        %5310 = vmatprep.subr.bf16.mxu0 0
        %5311 = vmatpush1.bf16.msra.mxu0 %v5288
        %5312 = vmatprep.subr.bf16.mxu0 0
        %5313 = vmatpush1.bf16.msra.mxu0 %v5289
        %5314 = vmatprep.subr.bf16.mxu0 0
        %5315 = vmatpush1.bf16.msra.mxu0 0
        %5316 = vmatprep.subr.bf16.mxu0 0
        %5317 = vmatpush1.bf16.msra.mxu0 0
        %5318 = vmatprep.subr.bf16.mxu0 0
        %5319 = vmatpush1.bf16.msra.mxu0 0
        %5320 = vmatprep.subr.bf16.mxu0 0
        %5321 = vmatpush1.bf16.msra.mxu0 0
        %5322 = vmatprep.subr.bf16.mxu0 0
        %5323 = vmatpush1.bf16.msra.mxu0 0
        %5324 = vmatprep.subr.bf16.mxu0 0
        %5325 = vmatpush1.bf16.msra.mxu0 0
        %5326 = vmatprep.subr.bf16.mxu0 0
        %5327 = vmatpush1.bf16.msra.mxu0 0
        %5328 = vmatprep.subr.bf16.mxu0 0
        %5329 = vmatpush1.bf16.msra.mxu0 0
        %5330 = vmatprep.mubr.bf16.mxu0 0
        %5331 = vmatmul.mubr.bf16.gmra.mrb[0].mxu0 %v5115
        %v5332 = vpop.f32.mrb[0].mxu0
        %v5333 = vadd.f32 %v5248, %v5332
        %v5334 = vpop.f32.mrb[0].mxu0
        %v5335 = vpop.f32.mrb[0].mxu0
        %v5336 = vpop.f32.mrb[0].mxu0
        %5337 = vdwg.mxu0
        %v5338 = vsub.f32 %v815, %v5222
        %5339 = vst.msk [vmem:[#allocation2] sm:$0xff] %vm861, %v5338
        %v5340 = vld [vmem:[#allocation20] sm:$0xff]
        %v5341 = vadd.f32 %v5340, %v5333
        %vm5342 = vcmask 64512
        %5343 = vst.msk [vmem:[#allocation20] sm:$0xff] %vm5342, %v5341
        // Predicated region
        $region109: #{robtf_forward_impl.1} parent=67 // pred_check
          %p5344 = pneg %p384
        $region110: #{robtf_forward_impl.1} parent=67 // pred_check_branch
          %5346 = sbr.rel (%p5344) target = $region112
        $region111: #{robtf_forward_impl.1} parent=67 // pred_region
          %s5348 = ssub.s32 128, 128
          %5349 = vsyncadd [#allocation7], %s5348
          %s5351 = sshll.u32 [#allocation20], 4
          %s5352 = int_to_ptr.vmem [resolvable:$true] %s5351
          %5354 = dma.vmem_to_hbm [thread:$0]  %s5352, 128, %s13, [#allocation7]
        $region112: #{robtf_forward_impl.1} parent=67 // pred_fallthru
          _
        // Predicated region
        $region113: #{robtf_forward_impl.1} parent=67 // pred_check
          %p5355 = pneg %p384
        $region114: #{robtf_forward_impl.1} parent=67 // pred_check_branch
          %5357 = sbr.rel (%p5355) target = $region116
        $region115: #{robtf_forward_impl.1} parent=67 // pred_region
          %5358 = dma.done [#allocation7], 128
        $region116: #{robtf_forward_impl.1} parent=67 // pred_fallthru
          _
      $region68: #{robtf_forward_impl.1} parent=5 // pred_fallthru
        _
      %p5359 = scmp.le.s32.totalorder 2, %s37
      // Predicated region
      $region117: #{robtf_forward_impl.1} parent=5 // pred_check
        %p5360 = pneg %p5359
      $region118: #{robtf_forward_impl.1} parent=5 // pred_check_branch
        %5362 = sbr.rel (%p5360) target = $region120
      $region119: #{robtf_forward_impl.1} parent=5 // pred_region
        %s5363 = ssub.s32 %s37, 2
      $region120: #{robtf_forward_impl.1} parent=5 // pred_fallthru
        _
    $region6: #{robtf_forward_impl.1} parent=1 // loop_footer
      %s41 = sadd.s32 1, %s37
    $region7: #{robtf_forward_impl.1} parent=1 // loop_footer_branch
      %36 = sbr.rel target = $region3
    $region8: #{robtf_forward_impl.1} parent=1 // loop_exit
      _
    %5364 = vsyncpa [#allocation6], 1
    %s5365 = scalar_lea.sflag [#allocation6], 1
    %5366 = vsyncpa %s5365, 1
    %5367 = vsyncpa [#allocation9], 1
    %s5368 = scalar_lea.sflag [#allocation9], 1
    %5369 = vsyncpa %s5368, 1
    %5370 = vsyncpa [#allocation12], 1
    %s5371 = scalar_lea.sflag [#allocation12], 1
    %5372 = vsyncpa %s5371, 1
    %5373 = vsyncpa [#allocation15], 1
    %s5374 = scalar_lea.sflag [#allocation15], 1
    %5375 = vsyncpa %s5374, 1
    %5376 = vsyncpa [#allocation18], 1
    %s5377 = scalar_lea.sflag [#allocation18], 1
    %5378 = vsyncpa %s5377, 1
    %5379 = vsyncpa [#allocation7], 1
    %s5380 = scalar_lea.sflag [#allocation7], 1
    %5381 = vsyncpa %s5380, 1

</llo_original>
